<compile_context>
chip_gen: v7x
topology: tpu7x:2x2x1
jax: 0.10.0
libtpu: 0.0.40
codegen_flags: <defaults>
</compile_context>

<pallas_src>
import functools

import jax
import jax.numpy as jnp
from jax import lax
from jax.experimental import pallas as pl
from jax.experimental.pallas import tpu as pltpu


HP = 128                       # lane-padded hidden width
EP = 128                       # lane-padded edge-attr width
RP = 128                       # lane-padded radial (RBF) width
K_MSG = 2 * HP + EP + RP       # fused message contraction dim (512)


def _silu(x):
    return x * (1.0 / (1.0 + jnp.exp(-x)))      # exp -> EUP slot


def _pad_to(x, shape):
    out = jnp.zeros(shape, x.dtype)
    return out.at[tuple(slice(0, s) for s in x.shape)].set(x)


# ----------------------------------------------------------------------------
# fused Pallas kernel: layer stack + out_linear + scatter_means + out_ffn
# ----------------------------------------------------------------------------
def _fused_encoder_kernel(
    h0_ref, boh_ref, soh_ref, doh_ref, er_ref,
    invcnt_ref, invdeg_ref, batchoh_ref, invbatch_ref,
    wmsg_ref, bm_ref, wu_ref, bu_ref,
    wout_ref, bout_ref, w1_ref, b1_ref, w2_ref, b2_ref,
    hblock_ref, pred_ref,
    msgin_scr,
):
    f32 = jnp.float32
    bf16 = jnp.bfloat16
    nb, na = boh_ref.shape
    hp = h0_ref.shape[1]
    n_layers = wmsg_ref.shape[0]

    boh = boh_ref[...]          # [nb, na] bf16 (exact one-hot)
    soh = soh_ref[...]          # [E, nb]  bf16
    doh = doh_ref[...]          # [E, nb]  bf16

    # layer-invariant broadcasts, hoisted out of the layer loop
    inv_cnt = jnp.broadcast_to(invcnt_ref[...], (nb, hp))
    inv_deg = jnp.broadcast_to(invdeg_ref[...], (nb, hp))

    # layer-invariant edge features fill the tail of the fused message slab once
    msgin_scr[:, 2 * hp:2 * hp + er_ref.shape[1]] = er_ref[...]

    def one_layer(l, H):
        # TODO(synk): GET layer source not provided; simplified block-level
        # message passing (pool atoms->blocks, fused edge message, mean
        # scatter to destination block, residual atom update).
        H_bf = H.astype(bf16)
        # scatter_mean(H, block_id): one-hot matmul * precomputed reciprocal
        Hb = jnp.dot(boh, H_bf, preferred_element_type=f32) * inv_cnt       # [nb, hp]
        Hb_bf = Hb.astype(bf16)
        # per-edge endpoint gather (bf16 one-hot select)
        h_src = jnp.dot(soh, Hb_bf, preferred_element_type=f32)             # [E, hp]
        h_dst = jnp.dot(doh, Hb_bf, preferred_element_type=f32)             # [E, hp]
        msgin_scr[:, 0:hp] = h_src.astype(bf16)
        msgin_scr[:, hp:2 * hp] = h_dst.astype(bf16)
        # fused message projection: one MXU push instead of four tiny ones
        msg = (jnp.dot(msgin_scr[...], wmsg_ref[l], preferred_element_type=f32)
               + bm_ref[l])
        msg = _silu(msg)                                                     # [E, hp]
        # scatter-mean to destination blocks: doh^T @ msg (no materialized .T)
        agg_b = lax.dot_general(doh, msg.astype(bf16),
                                (((0,), (0,)), ((), ())),
                                preferred_element_type=f32) * inv_deg        # [nb, hp]
        # broadcast block aggregate back to member atoms: boh^T @ agg_b
        agg_atom = lax.dot_general(boh, agg_b.astype(bf16),
                                   (((0,), (0,)), ((), ())),
                                   preferred_element_type=f32)               # [na, hp]
        upd = (jnp.dot((H + agg_atom).astype(bf16), wu_ref[l],
                       preferred_element_type=f32) + bu_ref[l])
        return H + _silu(upd)

    H = lax.fori_loop(0, n_layers, one_layer, h0_ref[...], unroll=True)

    # out_linear
    H = jnp.dot(H.astype(bf16), wout_ref[...], preferred_element_type=f32) + bout_ref[...]
    # H = H + (pred_X.mean(-1).mean(-1) * 0).unsqueeze(-1)  -> exact zero, skipped

    # H_block = scatter_mean(H, block_id)
    H_block = jnp.dot(boh, H.astype(bf16), preferred_element_type=f32) * inv_cnt
    hblock_ref[...] = H_block

    # out_ffn: SiLU -> Linear(h,h) -> SiLU -> Linear(h,1)   (lane-padded to 128)
    t = _silu(H_block)
    t = jnp.dot(t.astype(bf16), w1_ref[...], preferred_element_type=f32) + b1_ref[...]
    t = _silu(t)
    t = jnp.dot(t.astype(bf16), w2_ref[...], preferred_element_type=f32) + b2_ref[...]

    # pred_results = scatter_mean(out_ffn(H_block).squeeze(-1), batch_id)
    pred = jnp.dot(batchoh_ref[...], t.astype(bf16), preferred_element_type=f32)
    pred_ref[...] = pred * jnp.broadcast_to(invbatch_ref[...], pred.shape)


# ----------------------------------------------------------------------------
# parameter init (deterministic, synthetic) + stacking / padding
# ----------------------------------------------------------------------------
def init_params(key, hidden, edge_size, radial_size, n_layers,
                num_block_type, num_atom_type, num_atom_pos):
    ks = iter(jax.random.split(key, 64))
    norm = lambda shape: 0.1 * jax.random.normal(next(ks), shape, jnp.float32)
    p = {
        "block_emb": norm((num_block_type, hidden)),
        "atom_emb": norm((num_atom_type, hidden)),
        "pos_emb": norm((num_atom_pos, hidden)),
        "edge_emb": norm((2, edge_size)),
        "out_w": norm((hidden, hidden)),
        "out_b": norm((1, hidden)),
        "ffn_w1": norm((hidden, hidden)),
        "ffn_b1": norm((1, hidden)),
        "ffn_w2": norm((hidden, 1)),
        "ffn_b2": norm((1, 1)),
        "layers": [],
    }
    for _ in range(n_layers):
        p["layers"].append({
            "wms": norm((hidden, hidden)),
            "wmd": norm((hidden, hidden)),
            "wme": norm((edge_size, hidden)),
            "wmr": norm((radial_size, hidden)),
            "bm": norm((1, hidden)),
            "wu": norm((hidden, hidden)),
            "bu": norm((1, hidden)),
        })
    return p


def _stack_layer_weights(layers, hidden, edge_size, radial_size):
    L = len(layers)
    wmsg = jnp.zeros((L, K_MSG, HP), jnp.float32)
    bm = jnp.zeros((L, 1, HP), jnp.float32)
    wu = jnp.zeros((L, HP, HP), jnp.float32)
    bu = jnp.zeros((L, 1, HP), jnp.float32)
    for l, lp in enumerate(layers):
        wmsg = wmsg.at[l, 0:hidden, 0:hidden].set(lp["wms"])
        wmsg = wmsg.at[l, HP:HP + hidden, 0:hidden].set(lp["wmd"])
        wmsg = wmsg.at[l, 2 * HP:2 * HP + edge_size, 0:hidden].set(lp["wme"])
        wmsg = wmsg.at[l, 2 * HP + EP:2 * HP + EP + radial_size, 0:hidden].set(lp["wmr"])
        bm = bm.at[l, 0, 0:hidden].set(lp["bm"][0])
        wu = wu.at[l, 0:hidden, 0:hidden].set(lp["wu"])
        bu = bu.at[l, 0, 0:hidden].set(lp["bu"][0])
    return wmsg.astype(jnp.bfloat16), bm, wu.astype(jnp.bfloat16), bu


# ----------------------------------------------------------------------------
# forward pass (mirrors GETEncoder.message_passing + forward)
# ----------------------------------------------------------------------------
def get_encoder_forward(params, Z, B, A, atom_positions, block_lengths,
                        lengths, segment_ids, label, *,
                        hidden, edge_size, radial_size, k_neighbors):
    f32, bf16 = jnp.float32, jnp.bfloat16
    na = A.shape[0]
    nb = B.shape[0]
    n_batch = lengths.shape[0]
    n_layers = len(params["layers"])

    # --- batch_id / block_id (cumsum trick, same as the torch.no_grad block) --
    batch_id = jnp.cumsum(
        jnp.zeros((nb,), jnp.int32).at[jnp.cumsum(lengths)[:-1]].set(1))
    block_id = jnp.cumsum(
        jnp.zeros((na,), jnp.int32).at[jnp.cumsum(block_lengths)[:-1]].set(1))

    # --- BlockEmbedding --------------------------------------------------------
    # TODO(synk): BlockEmbedding source not provided; using
    # atom_emb[A] + pos_emb[atom_positions] + block_emb[B][block_id].
    H0 = (params["atom_emb"][A]
          + params["pos_emb"][atom_positions]
          + params["block_emb"][B][block_id]).astype(f32)          # [na, hidden]
    H0p = _pad_to(H0, (na, HP))

    # --- segment one-hots + precomputed reciprocals ----------------------------
    block_oh = (block_id[None, :] == jnp.arange(nb)[:, None]).astype(f32)   # [nb, na]
    inv_cnt = 1.0 / jnp.maximum(block_oh.sum(axis=1, keepdims=True), 1.0)   # [nb, 1]
    batch_oh = (batch_id[None, :] == jnp.arange(n_batch)[:, None]).astype(f32)
    inv_batch = 1.0 / jnp.maximum(batch_oh.sum(axis=1, keepdims=True), 1.0)

    # --- KNN edge construction (XLA glue: data-dependent top-k) ----------------
    # TODO(synk): KNNBatchEdgeConstructor source not provided; KNN over block
    # centers, intra = same batch & segment, inter = same batch & other
    # segment, self-loops kept (delete_self_loop=False).
    Zc = Z.mean(axis=1)                                            # [na, 3]
    centers = (block_oh @ Zc) * inv_cnt                            # [nb, 3]
    d2 = jnp.sum((centers[:, None, :] - centers[None, :, :]) ** 2, axis=-1)
    same_batch = batch_id[:, None] == batch_id[None, :]
    same_seg = segment_ids[:, None] == segment_ids[None, :]
    BIG = 1e9

    def knn(mask):
        _, idx = lax.top_k(-(d2 + (~mask).astype(f32) * BIG), k_neighbors)
        dst = jnp.repeat(jnp.arange(nb, dtype=jnp.int32), k_neighbors)
        src = idx.reshape(-1).astype(jnp.int32)
        valid = jnp.take_along_axis(mask, idx, axis=1).reshape(-1)
        return dst, src, valid

    intra_dst, intra_src, intra_valid = knn(same_batch & same_seg)
    inter_dst, inter_src, inter_valid = knn(same_batch & (~same_seg))
    dst_all = jnp.concatenate([intra_dst, inter_dst])              # [E]
    src_all = jnp.concatenate([intra_src, inter_src])
    valid = jnp.concatenate([intra_valid, inter_valid]).astype(f32)[:, None]
    E = dst_all.shape[0]
    edge_type = jnp.concatenate(
        [jnp.zeros_like(intra_dst), jnp.ones_like(inter_dst)])
    edge_attr = params["edge_emb"][edge_type].astype(f32)          # [E, edge_size]

    # radial (RBF) edge features
    d_edge = jnp.sqrt(d2[dst_all, src_all] + 1e-8)
    mus = jnp.linspace(0.0, 5.0, radial_size)
    rbf = jnp.exp(-((d_edge[:, None] - mus[None, :]) ** 2) / 0.5).astype(f32)

    # edge one-hots; out-of-mask (invalid) edges are zeroed so they contribute nothing
    src_oh = (src_all[:, None] == jnp.arange(nb)[None, :]).astype(f32) * valid
    dst_oh = (dst_all[:, None] == jnp.arange(nb)[None, :]).astype(f32) * valid
    inv_deg = 1.0 / jnp.maximum(dst_oh.sum(axis=0)[:, None], 1.0)           # [nb, 1]

    # pre-concatenated, lane-padded edge features [edge_attr | rbf]
    er = jnp.zeros((E, EP + RP), f32)
    er = er.at[:, 0:edge_size].set(edge_attr)
    er = er.at[:, EP:EP + radial_size].set(rbf)

    # --- stacked / padded weights (bf16 matmul operands, f32 biases) -----------
    wmsg, bm, wu, bu = _stack_layer_weights(
        params["layers"], hidden, edge_size, radial_size)
    wout = _pad_to(params["out_w"], (HP, HP)).astype(bf16)
    bout = _pad_to(params["out_b"], (1, HP))
    w1 = _pad_to(params["ffn_w1"], (HP, HP)).astype(bf16)
    b1 = _pad_to(params["ffn_b1"], (1, HP))
    w2 = _pad_to(params["ffn_w2"], (HP, 128)).astype(bf16)
    b2 = _pad_to(params["ffn_b2"], (1, 128))

    operands = (
        H0p, block_oh.astype(bf16), src_oh.astype(bf16), dst_oh.astype(bf16),
        er.astype(bf16), inv_cnt, inv_deg, batch_oh.astype(bf16), inv_batch,
        wmsg, bm, wu, bu, wout, bout, w1, b1, w2, b2,
    )

    # advisory cost estimate for XLA scheduling
    flops = 2 * (n_layers * (nb * na * HP + 2 * E * nb * HP + E * K_MSG * HP
                             + E * nb * HP + nb * na * HP + na * HP * HP)
                 + na * HP * HP + nb * na * HP + 2 * nb * HP * HP
                 + n_batch * nb * HP)
    transcendentals = n_layers * (E + na) * HP + 2 * nb * HP
    bytes_accessed = int(sum(int(x.size) * x.dtype.itemsize for x in operands)
                         + (nb * HP + n_batch * 128) * 4)

    vmem_spec = pl.BlockSpec(memory_space=pltpu.MemorySpace.VMEM)
    hblock_pad, pred_pad = pl.pallas_call(
        _fused_encoder_kernel,
        out_shape=(jax.ShapeDtypeStruct((nb, HP), f32),
                   jax.ShapeDtypeStruct((n_batch, 128), f32)),
        in_specs=[vmem_spec] * len(operands),
        out_specs=(vmem_spec, vmem_spec),
        scratch_shapes=[pltpu.VMEM((E, K_MSG), bf16)],
        compiler_params=pltpu.CompilerParams(vmem_limit_bytes=32 * 1024 * 1024),
        cost_estimate=pl.CostEstimate(flops=int(flops),
                                      transcendentals=int(transcendentals),
                                      bytes_accessed=bytes_accessed),
    )(*operands)
    # TODO(synk): for large graphs, tile the edge/atom axes with a grid and
    # dimension_semantics=("parallel", ...) to shard across the two v7x
    # TensorCores and keep the resident set under the 64 MiB v7x VMEM.

    H_block = hblock_pad[:, :hidden]                               # [nb, hidden]
    pred_results = pred_pad[:, 0]                                  # [n_batch]
    loss = jnp.mean((pred_results - label) ** 2)                   # F.mse_loss
    return loss, pred_results, H_block


# ----------------------------------------------------------------------------
# main
# ----------------------------------------------------------------------------
if __name__ == "__main__":
    hidden_size = 32
    n_channel = 4
    radial_size = 16
    edge_size = 16
    k_neighbors = 2          # small synthetic graph -> 2 candidates per mask
    n_layers = 3
    num_block_type = 8
    num_atom_type = 8
    num_atom_pos = 8

    n_batch = 2
    blocks_per_sample = 4
    atoms_per_block = 2
    n_blocks = n_batch * blocks_per_sample          # 8
    n_atoms = n_blocks * atoms_per_block            # 16

    key = jax.random.PRNGKey(0)
    k_p, k_z, k_b, k_a, k_pos, k_lbl = jax.random.split(key, 6)

    params = init_params(k_p, hidden_size, edge_size, radial_size, n_layers,
                         num_block_type, num_atom_type, num_atom_pos)

    Z = jax.random.normal(k_z, (n_atoms, n_channel, 3), jnp.float32)
    B = jax.random.randint(k_b, (n_blocks,), 0, num_block_type, jnp.int32)
    A = jax.random.randint(k_a, (n_atoms,), 0, num_atom_type, jnp.int32)
    atom_positions = jax.random.randint(
        k_pos, (n_atoms,), 0, num_atom_pos, jnp.int32)
    block_lengths = jnp.full((n_blocks,), atoms_per_block, jnp.int32)
    lengths = jnp.full((n_batch,), blocks_per_sample, jnp.int32)
    segment_ids = jnp.tile(jnp.array([0, 0, 1, 1], jnp.int32), n_batch)
    label = jax.random.normal(k_lbl, (n_batch,), jnp.float32)

    fwd = jax.jit(functools.partial(
        get_encoder_forward, hidden=hidden_size, edge_size=edge_size,
        radial_size=radial_size, k_neighbors=k_neighbors))

    loss, pred, H_block = fwd(params, Z, B, A, atom_positions, block_lengths,
                              lengths, segment_ids, label)
    jax.block_until_ready((loss, pred, H_block))
    assert loss.shape == () and pred.shape == (n_batch,)
    assert H_block.shape == (n_blocks, hidden_size)
    print("KERNEL_OK")
</pallas_src>

<mosaic_0001>
module attributes {stable_mosaic.version = 11 : i64} {
  func.func @_fused_encoder_kernel(%arg0: memref<16x128xf32, #tpu.memory_space<vmem>>, %arg1: memref<8x16xbf16, #tpu.memory_space<vmem>>, %arg2: memref<32x8xbf16, #tpu.memory_space<vmem>>, %arg3: memref<32x8xbf16, #tpu.memory_space<vmem>>, %arg4: memref<32x256xbf16, #tpu.memory_space<vmem>>, %arg5: memref<8x1xf32, #tpu.memory_space<vmem>>, %arg6: memref<8x1xf32, #tpu.memory_space<vmem>>, %arg7: memref<2x8xbf16, #tpu.memory_space<vmem>>, %arg8: memref<2x1xf32, #tpu.memory_space<vmem>>, %arg9: memref<3x512x128xbf16, #tpu.memory_space<vmem>>, %arg10: memref<3x1x128xf32, #tpu.memory_space<vmem>>, %arg11: memref<3x128x128xbf16, #tpu.memory_space<vmem>>, %arg12: memref<3x1x128xf32, #tpu.memory_space<vmem>>, %arg13: memref<128x128xbf16, #tpu.memory_space<vmem>>, %arg14: memref<1x128xf32, #tpu.memory_space<vmem>>, %arg15: memref<128x128xbf16, #tpu.memory_space<vmem>>, %arg16: memref<1x128xf32, #tpu.memory_space<vmem>>, %arg17: memref<128x128xbf16, #tpu.memory_space<vmem>>, %arg18: memref<1x128xf32, #tpu.memory_space<vmem>>, %arg19: memref<8x128xf32, #tpu.memory_space<vmem>>, %arg20: memref<2x128xf32, #tpu.memory_space<vmem>>, %arg21: memref<32x512xbf16, #tpu.memory_space<vmem>>) attributes {dimension_semantics = [], scalar_prefetch = 0 : i64, scratch_operands = 1 : i64, tpu.core_type = #tpu.core_type<tc>} {
    %c0 = arith.constant 0 : index
    %c0_0 = arith.constant 0 : index
    %0 = vector.load %arg1[%c0, %c0_0] : memref<8x16xbf16, #tpu.memory_space<vmem>>, vector<8x16xbf16>
    %c0_1 = arith.constant 0 : index
    %c0_2 = arith.constant 0 : index
    %1 = vector.load %arg2[%c0_1, %c0_2] : memref<32x8xbf16, #tpu.memory_space<vmem>>, vector<32x8xbf16>
    %c0_3 = arith.constant 0 : index
    %c0_4 = arith.constant 0 : index
    %2 = vector.load %arg3[%c0_3, %c0_4] : memref<32x8xbf16, #tpu.memory_space<vmem>>, vector<32x8xbf16>
    %c0_5 = arith.constant 0 : index
    %c0_6 = arith.constant 0 : index
    %3 = vector.load %arg5[%c0_5, %c0_6] : memref<8x1xf32, #tpu.memory_space<vmem>>, vector<8x1xf32>
    %4 = vector.shape_cast %3 : vector<8x1xf32> to vector<8x1xf32>
    %5 = vector.broadcast %4 : vector<8x1xf32> to vector<8x128xf32>
    %c0_7 = arith.constant 0 : index
    %c0_8 = arith.constant 0 : index
    %6 = vector.load %arg6[%c0_7, %c0_8] : memref<8x1xf32, #tpu.memory_space<vmem>>, vector<8x1xf32>
    %7 = vector.shape_cast %6 : vector<8x1xf32> to vector<8x1xf32>
    %8 = vector.broadcast %7 : vector<8x1xf32> to vector<8x128xf32>
    %c0_9 = arith.constant 0 : index
    %c0_10 = arith.constant 0 : index
    %9 = vector.load %arg4[%c0_9, %c0_10] : memref<32x256xbf16, #tpu.memory_space<vmem>>, vector<32x256xbf16>
    %c0_11 = arith.constant 0 : index
    %c256 = arith.constant 256 : index
    %10 = vector.load %arg21[%c0_11, %c256] : memref<32x512xbf16, #tpu.memory_space<vmem>>, vector<32x256xbf16>
    tpu.vector_store %arg21[%c0_11, %c256], %9 {strides = array<i32>} : memref<32x512xbf16, #tpu.memory_space<vmem>>, vector<32x256xbf16>,
    %c0_12 = arith.constant 0 : index
    %c0_13 = arith.constant 0 : index
    %11 = vector.load %arg0[%c0_12, %c0_13] : memref<16x128xf32, #tpu.memory_space<vmem>>, vector<16x128xf32>
    %c0_i32 = arith.constant 0 : i32
    %12 = arith.truncf %11 : vector<16x128xf32> to vector<16x128xbf16>
    %cst = arith.constant dense<0.000000e+00> : vector<8x128xf32>
    %13 = tpu.matmul %0, %12, %cst {dimension_numbers = #tpu.dot_dimension_numbers<[1], [0], [0], [1], [0, 0, 1, 1], [], []>} : vector<8x16xbf16>, vector<16x128xbf16>, vector<8x128xf32> -> vector<8x128xf32>
    %14 = arith.mulf %13, %5 : vector<8x128xf32>
    %15 = arith.truncf %14 : vector<8x128xf32> to vector<8x128xbf16>
    %cst_14 = arith.constant dense<0.000000e+00> : vector<32x128xf32>
    %16 = tpu.matmul %1, %15, %cst_14 {dimension_numbers = #tpu.dot_dimension_numbers<[1], [0], [0], [1], [0, 0, 1, 1], [], []>} : vector<32x8xbf16>, vector<8x128xbf16>, vector<32x128xf32> -> vector<32x128xf32>
    %cst_15 = arith.constant dense<0.000000e+00> : vector<32x128xf32>
    %17 = tpu.matmul %2, %15, %cst_15 {dimension_numbers = #tpu.dot_dimension_numbers<[1], [0], [0], [1], [0, 0, 1, 1], [], []>} : vector<32x8xbf16>, vector<8x128xbf16>, vector<32x128xf32> -> vector<32x128xf32>
    %18 = arith.truncf %16 : vector<32x128xf32> to vector<32x128xbf16>
    %c0_16 = arith.constant 0 : index
    %c0_17 = arith.constant 0 : index
    %19 = vector.load %arg21[%c0_16, %c0_17] : memref<32x512xbf16, #tpu.memory_space<vmem>>, vector<32x128xbf16>
    tpu.vector_store %arg21[%c0_16, %c0_17], %18 {strides = array<i32>} : memref<32x512xbf16, #tpu.memory_space<vmem>>, vector<32x128xbf16>,
    %20 = arith.truncf %17 : vector<32x128xf32> to vector<32x128xbf16>
    %c0_18 = arith.constant 0 : index
    %c128 = arith.constant 128 : index
    %21 = vector.load %arg21[%c0_18, %c128] : memref<32x512xbf16, #tpu.memory_space<vmem>>, vector<32x128xbf16>
    tpu.vector_store %arg21[%c0_18, %c128], %20 {strides = array<i32>} : memref<32x512xbf16, #tpu.memory_space<vmem>>, vector<32x128xbf16>,
    %c0_19 = arith.constant 0 : index
    %c0_20 = arith.constant 0 : index
    %22 = vector.load %arg21[%c0_19, %c0_20] : memref<32x512xbf16, #tpu.memory_space<vmem>>, vector<32x512xbf16>
    %23 = arith.index_cast %c0_i32 : i32 to index
    %c0_21 = arith.constant 0 : index
    %c0_22 = arith.constant 0 : index
    %24 = vector.load %arg9[%23, %c0_21, %c0_22] : memref<3x512x128xbf16, #tpu.memory_space<vmem>>, vector<1x512x128xbf16>
    %25 = vector.shape_cast %24 : vector<1x512x128xbf16> to vector<512x128xbf16>
    %cst_23 = arith.constant dense<0.000000e+00> : vector<32x128xf32>
    %26 = tpu.matmul %22, %25, %cst_23 {dimension_numbers = #tpu.dot_dimension_numbers<[1], [0], [0], [1], [0, 0, 1, 1], [], []>} : vector<32x512xbf16>, vector<512x128xbf16>, vector<32x128xf32> -> vector<32x128xf32>
    %27 = arith.index_cast %c0_i32 : i32 to index
    %c0_24 = arith.constant 0 : index
    %c0_25 = arith.constant 0 : index
    %28 = vector.load %arg10[%27, %c0_24, %c0_25] : memref<3x1x128xf32, #tpu.memory_space<vmem>>, vector<1x1x128xf32>
    %29 = vector.shape_cast %28 : vector<1x1x128xf32> to vector<1x128xf32>
    %30 = vector.broadcast %29 : vector<1x128xf32> to vector<32x128xf32>
    %31 = arith.addf %26, %30 : vector<32x128xf32>
    %cst_26 = arith.constant 0.000000e+00 : f32
    %32 = vector.broadcast %cst_26 : f32 to vector<32x128xf32>
    %33 = arith.subf %32, %31 : vector<32x128xf32>
    %34 = math.exp %33 : vector<32x128xf32>
    %cst_27 = arith.constant 1.000000e+00 : f32
    %35 = vector.broadcast %cst_27 : f32 to vector<32x128xf32>
    %36 = arith.addf %35, %34 : vector<32x128xf32>
    %cst_28 = arith.constant 1.000000e+00 : f32
    %37 = vector.broadcast %cst_28 : f32 to vector<32x128xf32>
    %38 = arith.divf %37, %36 : vector<32x128xf32>
    %39 = arith.mulf %31, %38 : vector<32x128xf32>
    %40 = arith.truncf %39 : vector<32x128xf32> to vector<32x128xbf16>
    %cst_29 = arith.constant dense<0.000000e+00> : vector<8x128xf32>
    %41 = tpu.matmul %2, %40, %cst_29 {dimension_numbers = #tpu.dot_dimension_numbers<[0], [0], [1], [1], [0, 1, 1, 1], [], []>} : vector<32x8xbf16>, vector<32x128xbf16>, vector<8x128xf32> -> vector<8x128xf32>
    %42 = arith.mulf %41, %8 : vector<8x128xf32>
    %43 = arith.truncf %42 : vector<8x128xf32> to vector<8x128xbf16>
    %cst_30 = arith.constant dense<0.000000e+00> : vector<16x128xf32>
    %44 = tpu.matmul %0, %43, %cst_30 {dimension_numbers = #tpu.dot_dimension_numbers<[0], [0], [1], [1], [0, 1, 1, 1], [], []>} : vector<8x16xbf16>, vector<8x128xbf16>, vector<16x128xf32> -> vector<16x128xf32>
    %45 = arith.addf %11, %44 : vector<16x128xf32>
    %46 = arith.truncf %45 : vector<16x128xf32> to vector<16x128xbf16>
    %47 = arith.index_cast %c0_i32 : i32 to index
    %c0_31 = arith.constant 0 : index
    %c0_32 = arith.constant 0 : index
    %48 = vector.load %arg11[%47, %c0_31, %c0_32] : memref<3x128x128xbf16, #tpu.memory_space<vmem>>, vector<1x128x128xbf16>
    %49 = vector.shape_cast %48 : vector<1x128x128xbf16> to vector<128x128xbf16>
    %cst_33 = arith.constant dense<0.000000e+00> : vector<16x128xf32>
    %50 = tpu.matmul %46, %49, %cst_33 {dimension_numbers = #tpu.dot_dimension_numbers<[1], [0], [0], [1], [0, 0, 1, 1], [], []>} : vector<16x128xbf16>, vector<128x128xbf16>, vector<16x128xf32> -> vector<16x128xf32>
    %51 = arith.index_cast %c0_i32 : i32 to index
    %c0_34 = arith.constant 0 : index
    %c0_35 = arith.constant 0 : index
    %52 = vector.load %arg12[%51, %c0_34, %c0_35] : memref<3x1x128xf32, #tpu.memory_space<vmem>>, vector<1x1x128xf32>
    %53 = vector.shape_cast %52 : vector<1x1x128xf32> to vector<1x128xf32>
    %54 = vector.broadcast %53 : vector<1x128xf32> to vector<16x128xf32>
    %55 = arith.addf %50, %54 : vector<16x128xf32>
    %cst_36 = arith.constant 0.000000e+00 : f32
    %56 = vector.broadcast %cst_36 : f32 to vector<16x128xf32>
    %57 = arith.subf %56, %55 : vector<16x128xf32>
    %58 = math.exp %57 : vector<16x128xf32>
    %cst_37 = arith.constant 1.000000e+00 : f32
    %59 = vector.broadcast %cst_37 : f32 to vector<16x128xf32>
    %60 = arith.addf %59, %58 : vector<16x128xf32>
    %cst_38 = arith.constant 1.000000e+00 : f32
    %61 = vector.broadcast %cst_38 : f32 to vector<16x128xf32>
    %62 = arith.divf %61, %60 : vector<16x128xf32>
    %63 = arith.mulf %55, %62 : vector<16x128xf32>
    %64 = arith.addf %11, %63 : vector<16x128xf32>
    %c1_i32 = arith.constant 1 : i32
    %65 = arith.truncf %64 : vector<16x128xf32> to vector<16x128xbf16>
    %cst_39 = arith.constant dense<0.000000e+00> : vector<8x128xf32>
    %66 = tpu.matmul %0, %65, %cst_39 {dimension_numbers = #tpu.dot_dimension_numbers<[1], [0], [0], [1], [0, 0, 1, 1], [], []>} : vector<8x16xbf16>, vector<16x128xbf16>, vector<8x128xf32> -> vector<8x128xf32>
    %67 = arith.mulf %66, %5 : vector<8x128xf32>
    %68 = arith.truncf %67 : vector<8x128xf32> to vector<8x128xbf16>
    %cst_40 = arith.constant dense<0.000000e+00> : vector<32x128xf32>
    %69 = tpu.matmul %1, %68, %cst_40 {dimension_numbers = #tpu.dot_dimension_numbers<[1], [0], [0], [1], [0, 0, 1, 1], [], []>} : vector<32x8xbf16>, vector<8x128xbf16>, vector<32x128xf32> -> vector<32x128xf32>
    %cst_41 = arith.constant dense<0.000000e+00> : vector<32x128xf32>
    %70 = tpu.matmul %2, %68, %cst_41 {dimension_numbers = #tpu.dot_dimension_numbers<[1], [0], [0], [1], [0, 0, 1, 1], [], []>} : vector<32x8xbf16>, vector<8x128xbf16>, vector<32x128xf32> -> vector<32x128xf32>
    %71 = arith.truncf %69 : vector<32x128xf32> to vector<32x128xbf16>
    %c0_42 = arith.constant 0 : index
    %c0_43 = arith.constant 0 : index
    %72 = vector.load %arg21[%c0_42, %c0_43] : memref<32x512xbf16, #tpu.memory_space<vmem>>, vector<32x128xbf16>
    tpu.vector_store %arg21[%c0_42, %c0_43], %71 {strides = array<i32>} : memref<32x512xbf16, #tpu.memory_space<vmem>>, vector<32x128xbf16>,
    %73 = arith.truncf %70 : vector<32x128xf32> to vector<32x128xbf16>
    %c0_44 = arith.constant 0 : index
    %c128_45 = arith.constant 128 : index
    %74 = vector.load %arg21[%c0_44, %c128_45] : memref<32x512xbf16, #tpu.memory_space<vmem>>, vector<32x128xbf16>
    tpu.vector_store %arg21[%c0_44, %c128_45], %73 {strides = array<i32>} : memref<32x512xbf16, #tpu.memory_space<vmem>>, vector<32x128xbf16>,
    %c0_46 = arith.constant 0 : index
    %c0_47 = arith.constant 0 : index
    %75 = vector.load %arg21[%c0_46, %c0_47] : memref<32x512xbf16, #tpu.memory_space<vmem>>, vector<32x512xbf16>
    %76 = arith.index_cast %c1_i32 : i32 to index
    %c0_48 = arith.constant 0 : index
    %c0_49 = arith.constant 0 : index
    %77 = vector.load %arg9[%76, %c0_48, %c0_49] : memref<3x512x128xbf16, #tpu.memory_space<vmem>>, vector<1x512x128xbf16>
    %78 = vector.shape_cast %77 : vector<1x512x128xbf16> to vector<512x128xbf16>
    %cst_50 = arith.constant dense<0.000000e+00> : vector<32x128xf32>
    %79 = tpu.matmul %75, %78, %cst_50 {dimension_numbers = #tpu.dot_dimension_numbers<[1], [0], [0], [1], [0, 0, 1, 1], [], []>} : vector<32x512xbf16>, vector<512x128xbf16>, vector<32x128xf32> -> vector<32x128xf32>
    %80 = arith.index_cast %c1_i32 : i32 to index
    %c0_51 = arith.constant 0 : index
    %c0_52 = arith.constant 0 : index
    %81 = vector.load %arg10[%80, %c0_51, %c0_52] : memref<3x1x128xf32, #tpu.memory_space<vmem>>, vector<1x1x128xf32>
    %82 = vector.shape_cast %81 : vector<1x1x128xf32> to vector<1x128xf32>
    %83 = vector.broadcast %82 : vector<1x128xf32> to vector<32x128xf32>
    %84 = arith.addf %79, %83 : vector<32x128xf32>
    %cst_53 = arith.constant 0.000000e+00 : f32
    %85 = vector.broadcast %cst_53 : f32 to vector<32x128xf32>
    %86 = arith.subf %85, %84 : vector<32x128xf32>
    %87 = math.exp %86 : vector<32x128xf32>
    %cst_54 = arith.constant 1.000000e+00 : f32
    %88 = vector.broadcast %cst_54 : f32 to vector<32x128xf32>
    %89 = arith.addf %88, %87 : vector<32x128xf32>
    %cst_55 = arith.constant 1.000000e+00 : f32
    %90 = vector.broadcast %cst_55 : f32 to vector<32x128xf32>
    %91 = arith.divf %90, %89 : vector<32x128xf32>
    %92 = arith.mulf %84, %91 : vector<32x128xf32>
    %93 = arith.truncf %92 : vector<32x128xf32> to vector<32x128xbf16>
    %cst_56 = arith.constant dense<0.000000e+00> : vector<8x128xf32>
    %94 = tpu.matmul %2, %93, %cst_56 {dimension_numbers = #tpu.dot_dimension_numbers<[0], [0], [1], [1], [0, 1, 1, 1], [], []>} : vector<32x8xbf16>, vector<32x128xbf16>, vector<8x128xf32> -> vector<8x128xf32>
    %95 = arith.mulf %94, %8 : vector<8x128xf32>
    %96 = arith.truncf %95 : vector<8x128xf32> to vector<8x128xbf16>
    %cst_57 = arith.constant dense<0.000000e+00> : vector<16x128xf32>
    %97 = tpu.matmul %0, %96, %cst_57 {dimension_numbers = #tpu.dot_dimension_numbers<[0], [0], [1], [1], [0, 1, 1, 1], [], []>} : vector<8x16xbf16>, vector<8x128xbf16>, vector<16x128xf32> -> vector<16x128xf32>
    %98 = arith.addf %64, %97 : vector<16x128xf32>
    %99 = arith.truncf %98 : vector<16x128xf32> to vector<16x128xbf16>
    %100 = arith.index_cast %c1_i32 : i32 to index
    %c0_58 = arith.constant 0 : index
    %c0_59 = arith.constant 0 : index
    %101 = vector.load %arg11[%100, %c0_58, %c0_59] : memref<3x128x128xbf16, #tpu.memory_space<vmem>>, vector<1x128x128xbf16>
    %102 = vector.shape_cast %101 : vector<1x128x128xbf16> to vector<128x128xbf16>
    %cst_60 = arith.constant dense<0.000000e+00> : vector<16x128xf32>
    %103 = tpu.matmul %99, %102, %cst_60 {dimension_numbers = #tpu.dot_dimension_numbers<[1], [0], [0], [1], [0, 0, 1, 1], [], []>} : vector<16x128xbf16>, vector<128x128xbf16>, vector<16x128xf32> -> vector<16x128xf32>
    %104 = arith.index_cast %c1_i32 : i32 to index
    %c0_61 = arith.constant 0 : index
    %c0_62 = arith.constant 0 : index
    %105 = vector.load %arg12[%104, %c0_61, %c0_62] : memref<3x1x128xf32, #tpu.memory_space<vmem>>, vector<1x1x128xf32>
    %106 = vector.shape_cast %105 : vector<1x1x128xf32> to vector<1x128xf32>
    %107 = vector.broadcast %106 : vector<1x128xf32> to vector<16x128xf32>
    %108 = arith.addf %103, %107 : vector<16x128xf32>
    %cst_63 = arith.constant 0.000000e+00 : f32
    %109 = vector.broadcast %cst_63 : f32 to vector<16x128xf32>
    %110 = arith.subf %109, %108 : vector<16x128xf32>
    %111 = math.exp %110 : vector<16x128xf32>
    %cst_64 = arith.constant 1.000000e+00 : f32
    %112 = vector.broadcast %cst_64 : f32 to vector<16x128xf32>
    %113 = arith.addf %112, %111 : vector<16x128xf32>
    %cst_65 = arith.constant 1.000000e+00 : f32
    %114 = vector.broadcast %cst_65 : f32 to vector<16x128xf32>
    %115 = arith.divf %114, %113 : vector<16x128xf32>
    %116 = arith.mulf %108, %115 : vector<16x128xf32>
    %117 = arith.addf %64, %116 : vector<16x128xf32>
    %c2_i32 = arith.constant 2 : i32
    %118 = arith.truncf %117 : vector<16x128xf32> to vector<16x128xbf16>
    %cst_66 = arith.constant dense<0.000000e+00> : vector<8x128xf32>
    %119 = tpu.matmul %0, %118, %cst_66 {dimension_numbers = #tpu.dot_dimension_numbers<[1], [0], [0], [1], [0, 0, 1, 1], [], []>} : vector<8x16xbf16>, vector<16x128xbf16>, vector<8x128xf32> -> vector<8x128xf32>
    %120 = arith.mulf %119, %5 : vector<8x128xf32>
    %121 = arith.truncf %120 : vector<8x128xf32> to vector<8x128xbf16>
    %cst_67 = arith.constant dense<0.000000e+00> : vector<32x128xf32>
    %122 = tpu.matmul %1, %121, %cst_67 {dimension_numbers = #tpu.dot_dimension_numbers<[1], [0], [0], [1], [0, 0, 1, 1], [], []>} : vector<32x8xbf16>, vector<8x128xbf16>, vector<32x128xf32> -> vector<32x128xf32>
    %cst_68 = arith.constant dense<0.000000e+00> : vector<32x128xf32>
    %123 = tpu.matmul %2, %121, %cst_68 {dimension_numbers = #tpu.dot_dimension_numbers<[1], [0], [0], [1], [0, 0, 1, 1], [], []>} : vector<32x8xbf16>, vector<8x128xbf16>, vector<32x128xf32> -> vector<32x128xf32>
    %124 = arith.truncf %122 : vector<32x128xf32> to vector<32x128xbf16>
    %c0_69 = arith.constant 0 : index
    %c0_70 = arith.constant 0 : index
    %125 = vector.load %arg21[%c0_69, %c0_70] : memref<32x512xbf16, #tpu.memory_space<vmem>>, vector<32x128xbf16>
    tpu.vector_store %arg21[%c0_69, %c0_70], %124 {strides = array<i32>} : memref<32x512xbf16, #tpu.memory_space<vmem>>, vector<32x128xbf16>,
    %126 = arith.truncf %123 : vector<32x128xf32> to vector<32x128xbf16>
    %c0_71 = arith.constant 0 : index
    %c128_72 = arith.constant 128 : index
    %127 = vector.load %arg21[%c0_71, %c128_72] : memref<32x512xbf16, #tpu.memory_space<vmem>>, vector<32x128xbf16>
    tpu.vector_store %arg21[%c0_71, %c128_72], %126 {strides = array<i32>} : memref<32x512xbf16, #tpu.memory_space<vmem>>, vector<32x128xbf16>,
    %c0_73 = arith.constant 0 : index
    %c0_74 = arith.constant 0 : index
    %128 = vector.load %arg21[%c0_73, %c0_74] : memref<32x512xbf16, #tpu.memory_space<vmem>>, vector<32x512xbf16>
    %129 = arith.index_cast %c2_i32 : i32 to index
    %c0_75 = arith.constant 0 : index
    %c0_76 = arith.constant 0 : index
    %130 = vector.load %arg9[%129, %c0_75, %c0_76] : memref<3x512x128xbf16, #tpu.memory_space<vmem>>, vector<1x512x128xbf16>
    %131 = vector.shape_cast %130 : vector<1x512x128xbf16> to vector<512x128xbf16>
    %cst_77 = arith.constant dense<0.000000e+00> : vector<32x128xf32>
    %132 = tpu.matmul %128, %131, %cst_77 {dimension_numbers = #tpu.dot_dimension_numbers<[1], [0], [0], [1], [0, 0, 1, 1], [], []>} : vector<32x512xbf16>, vector<512x128xbf16>, vector<32x128xf32> -> vector<32x128xf32>
    %133 = arith.index_cast %c2_i32 : i32 to index
    %c0_78 = arith.constant 0 : index
    %c0_79 = arith.constant 0 : index
    %134 = vector.load %arg10[%133, %c0_78, %c0_79] : memref<3x1x128xf32, #tpu.memory_space<vmem>>, vector<1x1x128xf32>
    %135 = vector.shape_cast %134 : vector<1x1x128xf32> to vector<1x128xf32>
    %136 = vector.broadcast %135 : vector<1x128xf32> to vector<32x128xf32>
    %137 = arith.addf %132, %136 : vector<32x128xf32>
    %cst_80 = arith.constant 0.000000e+00 : f32
    %138 = vector.broadcast %cst_80 : f32 to vector<32x128xf32>
    %139 = arith.subf %138, %137 : vector<32x128xf32>
    %140 = math.exp %139 : vector<32x128xf32>
    %cst_81 = arith.constant 1.000000e+00 : f32
    %141 = vector.broadcast %cst_81 : f32 to vector<32x128xf32>
    %142 = arith.addf %141, %140 : vector<32x128xf32>
    %cst_82 = arith.constant 1.000000e+00 : f32
    %143 = vector.broadcast %cst_82 : f32 to vector<32x128xf32>
    %144 = arith.divf %143, %142 : vector<32x128xf32>
    %145 = arith.mulf %137, %144 : vector<32x128xf32>
    %146 = arith.truncf %145 : vector<32x128xf32> to vector<32x128xbf16>
    %cst_83 = arith.constant dense<0.000000e+00> : vector<8x128xf32>
    %147 = tpu.matmul %2, %146, %cst_83 {dimension_numbers = #tpu.dot_dimension_numbers<[0], [0], [1], [1], [0, 1, 1, 1], [], []>} : vector<32x8xbf16>, vector<32x128xbf16>, vector<8x128xf32> -> vector<8x128xf32>
    %148 = arith.mulf %147, %8 : vector<8x128xf32>
    %149 = arith.truncf %148 : vector<8x128xf32> to vector<8x128xbf16>
    %cst_84 = arith.constant dense<0.000000e+00> : vector<16x128xf32>
    %150 = tpu.matmul %0, %149, %cst_84 {dimension_numbers = #tpu.dot_dimension_numbers<[0], [0], [1], [1], [0, 1, 1, 1], [], []>} : vector<8x16xbf16>, vector<8x128xbf16>, vector<16x128xf32> -> vector<16x128xf32>
    %151 = arith.addf %117, %150 : vector<16x128xf32>
    %152 = arith.truncf %151 : vector<16x128xf32> to vector<16x128xbf16>
    %153 = arith.index_cast %c2_i32 : i32 to index
    %c0_85 = arith.constant 0 : index
    %c0_86 = arith.constant 0 : index
    %154 = vector.load %arg11[%153, %c0_85, %c0_86] : memref<3x128x128xbf16, #tpu.memory_space<vmem>>, vector<1x128x128xbf16>
    %155 = vector.shape_cast %154 : vector<1x128x128xbf16> to vector<128x128xbf16>
    %cst_87 = arith.constant dense<0.000000e+00> : vector<16x128xf32>
    %156 = tpu.matmul %152, %155, %cst_87 {dimension_numbers = #tpu.dot_dimension_numbers<[1], [0], [0], [1], [0, 0, 1, 1], [], []>} : vector<16x128xbf16>, vector<128x128xbf16>, vector<16x128xf32> -> vector<16x128xf32>
    %157 = arith.index_cast %c2_i32 : i32 to index
    %c0_88 = arith.constant 0 : index
    %c0_89 = arith.constant 0 : index
    %158 = vector.load %arg12[%157, %c0_88, %c0_89] : memref<3x1x128xf32, #tpu.memory_space<vmem>>, vector<1x1x128xf32>
    %159 = vector.shape_cast %158 : vector<1x1x128xf32> to vector<1x128xf32>
    %160 = vector.broadcast %159 : vector<1x128xf32> to vector<16x128xf32>
    %161 = arith.addf %156, %160 : vector<16x128xf32>
    %cst_90 = arith.constant 0.000000e+00 : f32
    %162 = vector.broadcast %cst_90 : f32 to vector<16x128xf32>
    %163 = arith.subf %162, %161 : vector<16x128xf32>
    %164 = math.exp %163 : vector<16x128xf32>
    %cst_91 = arith.constant 1.000000e+00 : f32
    %165 = vector.broadcast %cst_91 : f32 to vector<16x128xf32>
    %166 = arith.addf %165, %164 : vector<16x128xf32>
    %cst_92 = arith.constant 1.000000e+00 : f32
    %167 = vector.broadcast %cst_92 : f32 to vector<16x128xf32>
    %168 = arith.divf %167, %166 : vector<16x128xf32>
    %169 = arith.mulf %161, %168 : vector<16x128xf32>
    %170 = arith.addf %117, %169 : vector<16x128xf32>
    %c3_i32 = arith.constant 3 : i32
    %171 = arith.truncf %170 : vector<16x128xf32> to vector<16x128xbf16>
    %c0_93 = arith.constant 0 : index
    %c0_94 = arith.constant 0 : index
    %172 = vector.load %arg13[%c0_93, %c0_94] : memref<128x128xbf16, #tpu.memory_space<vmem>>, vector<128x128xbf16>
    %cst_95 = arith.constant dense<0.000000e+00> : vector<16x128xf32>
    %173 = tpu.matmul %171, %172, %cst_95 {dimension_numbers = #tpu.dot_dimension_numbers<[1], [0], [0], [1], [0, 0, 1, 1], [], []>} : vector<16x128xbf16>, vector<128x128xbf16>, vector<16x128xf32> -> vector<16x128xf32>
    %c0_96 = arith.constant 0 : index
    %c0_97 = arith.constant 0 : index
    %174 = vector.load %arg14[%c0_96, %c0_97] : memref<1x128xf32, #tpu.memory_space<vmem>>, vector<1x128xf32>
    %175 = vector.broadcast %174 : vector<1x128xf32> to vector<16x128xf32>
    %176 = arith.addf %173, %175 : vector<16x128xf32>
    %177 = arith.truncf %176 : vector<16x128xf32> to vector<16x128xbf16>
    %cst_98 = arith.constant dense<0.000000e+00> : vector<8x128xf32>
    %178 = tpu.matmul %0, %177, %cst_98 {dimension_numbers = #tpu.dot_dimension_numbers<[1], [0], [0], [1], [0, 0, 1, 1], [], []>} : vector<8x16xbf16>, vector<16x128xbf16>, vector<8x128xf32> -> vector<8x128xf32>
    %179 = arith.mulf %178, %5 : vector<8x128xf32>
    %c0_99 = arith.constant 0 : index
    %c0_100 = arith.constant 0 : index
    %180 = vector.load %arg19[%c0_99, %c0_100] : memref<8x128xf32, #tpu.memory_space<vmem>>, vector<8x128xf32>
    tpu.vector_store %arg19[%c0_99, %c0_100], %179 {strides = array<i32>} : memref<8x128xf32, #tpu.memory_space<vmem>>, vector<8x128xf32>,
    %cst_101 = arith.constant 0.000000e+00 : f32
    %181 = vector.broadcast %cst_101 : f32 to vector<8x128xf32>
    %182 = arith.subf %181, %179 : vector<8x128xf32>
    %183 = math.exp %182 : vector<8x128xf32>
    %cst_102 = arith.constant 1.000000e+00 : f32
    %184 = vector.broadcast %cst_102 : f32 to vector<8x128xf32>
    %185 = arith.addf %184, %183 : vector<8x128xf32>
    %cst_103 = arith.constant 1.000000e+00 : f32
    %186 = vector.broadcast %cst_103 : f32 to vector<8x128xf32>
    %187 = arith.divf %186, %185 : vector<8x128xf32>
    %188 = arith.mulf %179, %187 : vector<8x128xf32>
    %189 = arith.truncf %188 : vector<8x128xf32> to vector<8x128xbf16>
    %c0_104 = arith.constant 0 : index
    %c0_105 = arith.constant 0 : index
    %190 = vector.load %arg15[%c0_104, %c0_105] : memref<128x128xbf16, #tpu.memory_space<vmem>>, vector<128x128xbf16>
    %cst_106 = arith.constant dense<0.000000e+00> : vector<8x128xf32>
    %191 = tpu.matmul %189, %190, %cst_106 {dimension_numbers = #tpu.dot_dimension_numbers<[1], [0], [0], [1], [0, 0, 1, 1], [], []>} : vector<8x128xbf16>, vector<128x128xbf16>, vector<8x128xf32> -> vector<8x128xf32>
    %c0_107 = arith.constant 0 : index
    %c0_108 = arith.constant 0 : index
    %192 = vector.load %arg16[%c0_107, %c0_108] : memref<1x128xf32, #tpu.memory_space<vmem>>, vector<1x128xf32>
    %193 = vector.broadcast %192 : vector<1x128xf32> to vector<8x128xf32>
    %194 = arith.addf %191, %193 : vector<8x128xf32>
    %cst_109 = arith.constant 0.000000e+00 : f32
    %195 = vector.broadcast %cst_109 : f32 to vector<8x128xf32>
    %196 = arith.subf %195, %194 : vector<8x128xf32>
    %197 = math.exp %196 : vector<8x128xf32>
    %cst_110 = arith.constant 1.000000e+00 : f32
    %198 = vector.broadcast %cst_110 : f32 to vector<8x128xf32>
    %199 = arith.addf %198, %197 : vector<8x128xf32>
    %cst_111 = arith.constant 1.000000e+00 : f32
    %200 = vector.broadcast %cst_111 : f32 to vector<8x128xf32>
    %201 = arith.divf %200, %199 : vector<8x128xf32>
    %202 = arith.mulf %194, %201 : vector<8x128xf32>
    %203 = arith.truncf %202 : vector<8x128xf32> to vector<8x128xbf16>
    %c0_112 = arith.constant 0 : index
    %c0_113 = arith.constant 0 : index
    %204 = vector.load %arg17[%c0_112, %c0_113] : memref<128x128xbf16, #tpu.memory_space<vmem>>, vector<128x128xbf16>
    %cst_114 = arith.constant dense<0.000000e+00> : vector<8x128xf32>
    %205 = tpu.matmul %203, %204, %cst_114 {dimension_numbers = #tpu.dot_dimension_numbers<[1], [0], [0], [1], [0, 0, 1, 1], [], []>} : vector<8x128xbf16>, vector<128x128xbf16>, vector<8x128xf32> -> vector<8x128xf32>
    %c0_115 = arith.constant 0 : index
    %c0_116 = arith.constant 0 : index
    %206 = vector.load %arg18[%c0_115, %c0_116] : memref<1x128xf32, #tpu.memory_space<vmem>>, vector<1x128xf32>
    %207 = vector.broadcast %206 : vector<1x128xf32> to vector<8x128xf32>
    %208 = arith.addf %205, %207 : vector<8x128xf32>
    %c0_117 = arith.constant 0 : index
    %c0_118 = arith.constant 0 : index
    %209 = vector.load %arg7[%c0_117, %c0_118] : memref<2x8xbf16, #tpu.memory_space<vmem>>, vector<2x8xbf16>
    %210 = arith.truncf %208 : vector<8x128xf32> to vector<8x128xbf16>
    %cst_119 = arith.constant dense<0.000000e+00> : vector<2x128xf32>
    %211 = tpu.matmul %209, %210, %cst_119 {dimension_numbers = #tpu.dot_dimension_numbers<[1], [0], [0], [1], [0, 0, 1, 1], [], []>} : vector<2x8xbf16>, vector<8x128xbf16>, vector<2x128xf32> -> vector<2x128xf32>
    %c0_120 = arith.constant 0 : index
    %c0_121 = arith.constant 0 : index
    %212 = vector.load %arg8[%c0_120, %c0_121] : memref<2x1xf32, #tpu.memory_space<vmem>>, vector<2x1xf32>
    %213 = vector.shape_cast %212 : vector<2x1xf32> to vector<2x1xf32>
    %214 = vector.broadcast %213 : vector<2x1xf32> to vector<2x128xf32>
    %215 = arith.mulf %211, %214 : vector<2x128xf32>
    %c0_122 = arith.constant 0 : index
    %c0_123 = arith.constant 0 : index
    %216 = vector.load %arg20[%c0_122, %c0_123] : memref<2x128xf32, #tpu.memory_space<vmem>>, vector<2x128xf32>
    tpu.vector_store %arg20[%c0_122, %c0_123], %215 {strides = array<i32>} : memref<2x128xf32, #tpu.memory_space<vmem>>, vector<2x128xf32>,
    return
  }
}

</mosaic_0001>

<llo_original>
// kernel: get_encoder_forward.1
$region0: #{get_encoder_forward.1}
  #allocation0 [shape = 'u32[]', space=smem, size = 0x4, offset = 0x4, fixed_abs, tag = 'smem constant byte address 0x4 - core index']
  #allocation1 [shape = 'u32[144,128]{1,0:T(1,128)}', space=vmem, size = 0x12000, scoped, tag = 'internal scratch']
  #allocation2 [shape = 'bf16[32,512]{1,0:T(16,128)(2,1)}', space=vmem, size = 0x8000, scoped, tag = 'scratch operand']
  %s0 = inlined_call_operand.vmem [shape: f32[16,128], index: 0, kind: input, shape index: {}]
  %s1 = inlined_call_operand.vmem [shape: bf16[8,16], index: 1, kind: input, shape index: {}]
  %s2 = inlined_call_operand.vmem [shape: bf16[32,8], index: 2, kind: input, shape index: {}]
  %s3 = inlined_call_operand.vmem [shape: bf16[32,8], index: 3, kind: input, shape index: {}]
  %s4 = inlined_call_operand.vmem [shape: bf16[32,256], index: 4, kind: input, shape index: {}]
  %s5 = inlined_call_operand.vmem [shape: f32[8,1], index: 5, kind: input, shape index: {}]
  %s6 = inlined_call_operand.vmem [shape: f32[8,1], index: 6, kind: input, shape index: {}]
  %s7 = inlined_call_operand.vmem [shape: bf16[2,8], index: 7, kind: input, shape index: {}]
  %s8 = inlined_call_operand.vmem [shape: f32[2,1], index: 8, kind: input, shape index: {}]
  %s9 = inlined_call_operand.vmem [shape: bf16[3,512,128], index: 9, kind: input, shape index: {}]
  %s10 = inlined_call_operand.vmem [shape: f32[3,1,128], index: 10, kind: input, shape index: {}]
  %s11 = inlined_call_operand.vmem [shape: bf16[3,128,128], index: 11, kind: input, shape index: {}]
  %s12 = inlined_call_operand.vmem [shape: f32[3,1,128], index: 12, kind: input, shape index: {}]
  %s13 = inlined_call_operand.vmem [shape: bf16[128,128], index: 13, kind: input, shape index: {}]
  %s14 = inlined_call_operand.vmem [shape: f32[1,128], index: 14, kind: input, shape index: {}]
  %s15 = inlined_call_operand.vmem [shape: bf16[128,128], index: 15, kind: input, shape index: {}]
  %s16 = inlined_call_operand.vmem [shape: f32[1,128], index: 16, kind: input, shape index: {}]
  %s17 = inlined_call_operand.vmem [shape: bf16[128,128], index: 17, kind: input, shape index: {}]
  %s18 = inlined_call_operand.vmem [shape: f32[1,128], index: 18, kind: input, shape index: {}]
  %s19 = inlined_call_operand.hbm [shape: f32[8,128], index: 19, kind: output, shape index: {0}]
  %s20 = inlined_call_operand.vmem [shape: f32[2,128], index: 20, kind: output, shape index: {1}]
  %21 = xla_tuple %s19, %s20
  %s22 = sld [smem:[#allocation0]]
  $region94: #{get_encoder_forward.1} parent=0
    _
  %s24 = ssub.s32 1, %s22
  %s25 = scalar_select 0, %s24, %s22
  $region1: #{get_encoder_forward.1} parent=0
    #allocation3 [shape = 'u8[4096]{0}', space=vmem, size = 0x1000, scoped, tag = 'output window, operand 0, single buffered']
    #allocation4 [shape = 's32[1]{0}', space=sflag, size = 0x4, scoped, tag = 'scoped memory for get_encoder_forward.1']
    %26 = vsyncpa [#allocation4], 0
    // Predicated region
    $region2: #{get_encoder_forward.1} parent=1 // pred_check
      _
    $region3: #{get_encoder_forward.1} parent=1 // pred_check_branch
      %28 = sbr.rel (0) target = $region5
    $region4: #{get_encoder_forward.1} parent=1 // pred_region
      _
    $region5: #{get_encoder_forward.1} parent=1 // pred_fallthru
      _
    // Predicated region
    $region6: #{get_encoder_forward.1} parent=1 // pred_check
      _
    $region7: #{get_encoder_forward.1} parent=1 // pred_check_branch
      %30 = sbr.rel (0) target = $region9
    $region8: #{get_encoder_forward.1} parent=1 // pred_region
      _
    $region9: #{get_encoder_forward.1} parent=1 // pred_fallthru
      _
    // Predicated region
    $region10: #{get_encoder_forward.1} parent=1 // pred_check
      _
    $region11: #{get_encoder_forward.1} parent=1 // pred_check_branch
      %32 = sbr.rel (0) target = $region13
    $region12: #{get_encoder_forward.1} parent=1 // pred_region
      _
    $region13: #{get_encoder_forward.1} parent=1 // pred_fallthru
      _
    // Predicated region
    $region14: #{get_encoder_forward.1} parent=1 // pred_check
      _
    $region15: #{get_encoder_forward.1} parent=1 // pred_check_branch
      %34 = sbr.rel (0) target = $region17
    $region16: #{get_encoder_forward.1} parent=1 // pred_region
      _
    $region17: #{get_encoder_forward.1} parent=1 // pred_fallthru
      _
    // Predicated region
    $region18: #{get_encoder_forward.1} parent=1 // pred_check
      _
    $region19: #{get_encoder_forward.1} parent=1 // pred_check_branch
      %36 = sbr.rel (0) target = $region21
    $region20: #{get_encoder_forward.1} parent=1 // pred_region
      _
    $region21: #{get_encoder_forward.1} parent=1 // pred_fallthru
      _
    // Predicated region
    $region22: #{get_encoder_forward.1} parent=1 // pred_check
      _
    $region23: #{get_encoder_forward.1} parent=1 // pred_check_branch
      %38 = sbr.rel (0) target = $region25
    $region24: #{get_encoder_forward.1} parent=1 // pred_region
      _
    $region25: #{get_encoder_forward.1} parent=1 // pred_fallthru
      _
    // Predicated region
    $region26: #{get_encoder_forward.1} parent=1 // pred_check
      _
    $region27: #{get_encoder_forward.1} parent=1 // pred_check_branch
      %40 = sbr.rel (0) target = $region29
    $region28: #{get_encoder_forward.1} parent=1 // pred_region
      _
    $region29: #{get_encoder_forward.1} parent=1 // pred_fallthru
      _
    // Predicated region
    $region30: #{get_encoder_forward.1} parent=1 // pred_check
      _
    $region31: #{get_encoder_forward.1} parent=1 // pred_check_branch
      %42 = sbr.rel (0) target = $region33
    $region32: #{get_encoder_forward.1} parent=1 // pred_region
      _
    $region33: #{get_encoder_forward.1} parent=1 // pred_fallthru
      _
    // Predicated region
    $region34: #{get_encoder_forward.1} parent=1 // pred_check
      _
    $region35: #{get_encoder_forward.1} parent=1 // pred_check_branch
      %44 = sbr.rel (0) target = $region37
    $region36: #{get_encoder_forward.1} parent=1 // pred_region
      _
    $region37: #{get_encoder_forward.1} parent=1 // pred_fallthru
      _
    // Predicated region
    $region38: #{get_encoder_forward.1} parent=1 // pred_check
      _
    $region39: #{get_encoder_forward.1} parent=1 // pred_check_branch
      %46 = sbr.rel (0) target = $region41
    $region40: #{get_encoder_forward.1} parent=1 // pred_region
      _
    $region41: #{get_encoder_forward.1} parent=1 // pred_fallthru
      _
    // Predicated region
    $region42: #{get_encoder_forward.1} parent=1 // pred_check
      _
    $region43: #{get_encoder_forward.1} parent=1 // pred_check_branch
      %48 = sbr.rel (0) target = $region45
    $region44: #{get_encoder_forward.1} parent=1 // pred_region
      _
    $region45: #{get_encoder_forward.1} parent=1 // pred_fallthru
      _
    // Predicated region
    $region46: #{get_encoder_forward.1} parent=1 // pred_check
      _
    $region47: #{get_encoder_forward.1} parent=1 // pred_check_branch
      %50 = sbr.rel (0) target = $region49
    $region48: #{get_encoder_forward.1} parent=1 // pred_region
      _
    $region49: #{get_encoder_forward.1} parent=1 // pred_fallthru
      _
    // Predicated region
    $region50: #{get_encoder_forward.1} parent=1 // pred_check
      _
    $region51: #{get_encoder_forward.1} parent=1 // pred_check_branch
      %52 = sbr.rel (0) target = $region53
    $region52: #{get_encoder_forward.1} parent=1 // pred_region
      _
    $region53: #{get_encoder_forward.1} parent=1 // pred_fallthru
      _
    // Predicated region
    $region54: #{get_encoder_forward.1} parent=1 // pred_check
      _
    $region55: #{get_encoder_forward.1} parent=1 // pred_check_branch
      %54 = sbr.rel (0) target = $region57
    $region56: #{get_encoder_forward.1} parent=1 // pred_region
      _
    $region57: #{get_encoder_forward.1} parent=1 // pred_fallthru
      _
    // Predicated region
    $region58: #{get_encoder_forward.1} parent=1 // pred_check
      _
    $region59: #{get_encoder_forward.1} parent=1 // pred_check_branch
      %56 = sbr.rel (0) target = $region61
    $region60: #{get_encoder_forward.1} parent=1 // pred_region
      _
    $region61: #{get_encoder_forward.1} parent=1 // pred_fallthru
      _
    // Predicated region
    $region62: #{get_encoder_forward.1} parent=1 // pred_check
      _
    $region63: #{get_encoder_forward.1} parent=1 // pred_check_branch
      %58 = sbr.rel (0) target = $region65
    $region64: #{get_encoder_forward.1} parent=1 // pred_region
      _
    $region65: #{get_encoder_forward.1} parent=1 // pred_fallthru
      _
    // Predicated region
    $region66: #{get_encoder_forward.1} parent=1 // pred_check
      _
    $region67: #{get_encoder_forward.1} parent=1 // pred_check_branch
      %60 = sbr.rel (0) target = $region69
    $region68: #{get_encoder_forward.1} parent=1 // pred_region
      _
    $region69: #{get_encoder_forward.1} parent=1 // pred_fallthru
      _
    // Predicated region
    $region70: #{get_encoder_forward.1} parent=1 // pred_check
      _
    $region71: #{get_encoder_forward.1} parent=1 // pred_check_branch
      %62 = sbr.rel (0) target = $region73
    $region72: #{get_encoder_forward.1} parent=1 // pred_region
      _
    $region73: #{get_encoder_forward.1} parent=1 // pred_fallthru
      _
    // Predicated region
    $region74: #{get_encoder_forward.1} parent=1 // pred_check
      _
    $region75: #{get_encoder_forward.1} parent=1 // pred_check_branch
      %64 = sbr.rel (0) target = $region77
    $region76: #{get_encoder_forward.1} parent=1 // pred_region
      _
    $region77: #{get_encoder_forward.1} parent=1 // pred_fallthru
      _
    %v66 = vld [vmem:[%s1] sm:$0xf]
    %v67 = vld [vmem:[%s2] sm:$0xf]
    %v68 = vld [vmem:[%s2 + $0x4] sm:$0xf]
    %v69 = vld [vmem:[%s2 + $0x8] sm:$0xf]
    %v70 = vld [vmem:[%s2 + $0xc] sm:$0xf]
    %v71 = vld [vmem:[%s3] sm:$0xf]
    %v72 = vld [vmem:[%s3 + $0x4] sm:$0xf]
    %v73 = vld [vmem:[%s3 + $0x8] sm:$0xf]
    %v74 = vld [vmem:[%s3 + $0xc] sm:$0xf]
    %v75 = vld [vmem:[%s5] sm:$0xff]
    %77 = vset.pattern.permute.xlu0 0
    %78 = vperm.xlu0 %77, %v75
    %v79 = vpop.permute.xlu0 %78
    %v81 = vld [vmem:[%s6] sm:$0xff]
    %83 = vset.pattern.permute.xlu0 0
    %84 = vperm.xlu0 %83, %v81
    %v85 = vpop.permute.xlu0 %84
    %v87 = vld [vmem:[%s4] sm:$0xff]
    %v88 = vld [vmem:[%s4 + $0x8] sm:$0xff]
    %v89 = vld [vmem:[%s4 + $0x10] sm:$0xff]
    %v90 = vld [vmem:[%s4 + $0x18] sm:$0xff]
    %v95 = vunpack.c.l.b16 %v87
    %v96 = vunpack.c.h.b16 %v87
    %v97 = vunpack.c.l.b16 %v88
    %v98 = vunpack.c.h.b16 %v88
    %v99 = vunpack.c.l.b16 %v89
    %v100 = vunpack.c.h.b16 %v89
    %v101 = vunpack.c.l.b16 %v90
    %v102 = vunpack.c.h.b16 %v90
    %v103 = vpack.c.b16 %v97, %v95
    %v104 = vpack.c.b16 %v98, %v96
    %v105 = vpack.c.b16 %v101, %v99
    %v106 = vpack.c.b16 %v102, %v100
    %111 = vst [vmem:[#allocation2 + $0x10] sm:$0xff] %v103
    %112 = vst [vmem:[#allocation2 + $0x18] sm:$0xff] %v104
    %113 = vst [vmem:[#allocation2 + $0x30] sm:$0xff] %v105
    %114 = vst [vmem:[#allocation2 + $0x38] sm:$0xff] %v106
    %v115 = vld [vmem:[%s0] sm:$0xff]
    %v116 = vld [vmem:[%s0 + $0x8] sm:$0xff]
    %v117 = vpack.c.bf16 %v116, %v115
    %vm118 = vcmask 130048
    %v120 = vsel %vm118, %v66, 0
    %122 = vmatprep.subr.bf16.mxu0 0
    %123 = vmatpush1.bf16.msra.mxu0 %v117
    %124 = vmatprep.subr.bf16.mxu0 0
    %125 = vmatpush1.bf16.msra.mxu0 0
    %126 = vmatprep.subr.bf16.mxu0 0
    %127 = vmatpush1.bf16.msra.mxu0 0
    %128 = vmatprep.subr.bf16.mxu0 0
    %129 = vmatpush1.bf16.msra.mxu0 0
    %130 = vmatprep.subr.bf16.mxu0 0
    %131 = vmatpush1.bf16.msra.mxu0 0
    %132 = vmatprep.subr.bf16.mxu0 0
    %133 = vmatpush1.bf16.msra.mxu0 0
    %134 = vmatprep.subr.bf16.mxu0 0
    %135 = vmatpush1.bf16.msra.mxu0 0
    %136 = vmatprep.subr.bf16.mxu0 0
    %137 = vmatpush1.bf16.msra.mxu0 0
    %138 = vmatprep.subr.bf16.mxu0 0
    %139 = vmatpush1.bf16.msra.mxu0 0
    %140 = vmatprep.subr.bf16.mxu0 0
    %141 = vmatpush1.bf16.msra.mxu0 0
    %142 = vmatprep.subr.bf16.mxu0 0
    %143 = vmatpush1.bf16.msra.mxu0 0
    %144 = vmatprep.subr.bf16.mxu0 0
    %145 = vmatpush1.bf16.msra.mxu0 0
    %146 = vmatprep.subr.bf16.mxu0 0
    %147 = vmatpush1.bf16.msra.mxu0 0
    %148 = vmatprep.subr.bf16.mxu0 0
    %149 = vmatpush1.bf16.msra.mxu0 0
    %150 = vmatprep.subr.bf16.mxu0 0
    %151 = vmatpush1.bf16.msra.mxu0 0
    %152 = vmatprep.subr.bf16.mxu0 0
    %153 = vmatpush1.bf16.msra.mxu0 0
    %154 = vmatprep.mubr.bf16.mxu0 0
    %155 = vmatmul.mubr.bf16.gmra.mrb[0].mxu0 %v120
    %v156 = vpop.f32.mrb[0].mxu0
    %v157 = vadd.f32 0.0, %v156
    %v158 = vpop.f32.mrb[0].mxu0
    %v159 = vpop.f32.mrb[0].mxu0
    %v160 = vpop.f32.mrb[0].mxu0
    %161 = vdwg.mxu0
    %v162 = vmul.f32 %v157, %v79
    %v163 = vpack.c.bf16 %v162, %v162
    %v168 = vunpack.c.l.b16 %v67
    %v169 = vunpack.c.l.b16 %v68
    %v170 = vunpack.c.l.b16 %v69
    %v171 = vunpack.c.l.b16 %v70
    %v172 = vpack.c.b16 %v169, %v168
    %v173 = vpack.c.b16 %v171, %v170
    %vm174 = vcmask 64512
    %v176 = vsel %vm174, %v172, 0
    %v179 = vsel %vm174, %v173, 0
    %vm181 = vcmask 1043456
    %v183 = vsel %vm181, %v163, 0
    %185 = vmatprep.subr.bf16.mxu0 0
    %186 = vmatpush1.bf16.msra.mxu0 %v183
    %187 = vmatprep.subr.bf16.mxu0 0
    %188 = vmatpush1.bf16.msra.mxu0 0
    %189 = vmatprep.subr.bf16.mxu0 0
    %190 = vmatpush1.bf16.msra.mxu0 0
    %191 = vmatprep.subr.bf16.mxu0 0
    %192 = vmatpush1.bf16.msra.mxu0 0
    %193 = vmatprep.subr.bf16.mxu0 0
    %194 = vmatpush1.bf16.msra.mxu0 0
    %195 = vmatprep.subr.bf16.mxu0 0
    %196 = vmatpush1.bf16.msra.mxu0 0
    %197 = vmatprep.subr.bf16.mxu0 0
    %198 = vmatpush1.bf16.msra.mxu0 0
    %199 = vmatprep.subr.bf16.mxu0 0
    %200 = vmatpush1.bf16.msra.mxu0 0
    %201 = vmatprep.subr.bf16.mxu0 0
    %202 = vmatpush1.bf16.msra.mxu0 0
    %203 = vmatprep.subr.bf16.mxu0 0
    %204 = vmatpush1.bf16.msra.mxu0 0
    %205 = vmatprep.subr.bf16.mxu0 0
    %206 = vmatpush1.bf16.msra.mxu0 0
    %207 = vmatprep.subr.bf16.mxu0 0
    %208 = vmatpush1.bf16.msra.mxu0 0
    %209 = vmatprep.subr.bf16.mxu0 0
    %210 = vmatpush1.bf16.msra.mxu0 0
    %211 = vmatprep.subr.bf16.mxu0 0
    %212 = vmatpush1.bf16.msra.mxu0 0
    %213 = vmatprep.subr.bf16.mxu0 0
    %214 = vmatpush1.bf16.msra.mxu0 0
    %215 = vmatprep.subr.bf16.mxu0 0
    %216 = vmatpush1.bf16.msra.mxu0 0
    %217 = vmatprep.mubr.bf16.mxu0 0
    %218 = vmatmul.mubr.bf16.gmra.mrb[0].mxu0 %v176
    %v219 = vpop.f32.mrb[0].mxu0
    %v220 = vadd.f32 0.0, %v219
    %v221 = vpop.f32.mrb[0].mxu0
    %v222 = vpop.f32.mrb[0].mxu0
    %v223 = vadd.f32 0.0, %v222
    %v224 = vpop.f32.mrb[0].mxu0
    %225 = vmatprep.mubr.bf16.mxu0 0
    %226 = vmatmul.mubr.bf16.gmra.mrb[0].mxu0 %v179
    %v227 = vpop.f32.mrb[0].mxu0
    %v228 = vadd.f32 0.0, %v227
    %v229 = vpop.f32.mrb[0].mxu0
    %v230 = vpop.f32.mrb[0].mxu0
    %v231 = vadd.f32 0.0, %v230
    %v232 = vpop.f32.mrb[0].mxu0
    %233 = vdwg.mxu0
    %v238 = vunpack.c.l.b16 %v71
    %v239 = vunpack.c.l.b16 %v72
    %v240 = vunpack.c.l.b16 %v73
    %v241 = vunpack.c.l.b16 %v74
    %v242 = vpack.c.b16 %v239, %v238
    %v243 = vpack.c.b16 %v241, %v240
    %v245 = vsel %vm174, %v242, 0
    %v248 = vsel %vm174, %v243, 0
    %250 = vmatprep.subr.bf16.mxu0 0
    %251 = vmatpush1.bf16.msra.mxu0 %v183
    %252 = vmatprep.subr.bf16.mxu0 0
    %253 = vmatpush1.bf16.msra.mxu0 0
    %254 = vmatprep.subr.bf16.mxu0 0
    %255 = vmatpush1.bf16.msra.mxu0 0
    %256 = vmatprep.subr.bf16.mxu0 0
    %257 = vmatpush1.bf16.msra.mxu0 0
    %258 = vmatprep.subr.bf16.mxu0 0
    %259 = vmatpush1.bf16.msra.mxu0 0
    %260 = vmatprep.subr.bf16.mxu0 0
    %261 = vmatpush1.bf16.msra.mxu0 0
    %262 = vmatprep.subr.bf16.mxu0 0
    %263 = vmatpush1.bf16.msra.mxu0 0
    %264 = vmatprep.subr.bf16.mxu0 0
    %265 = vmatpush1.bf16.msra.mxu0 0
    %266 = vmatprep.subr.bf16.mxu0 0
    %267 = vmatpush1.bf16.msra.mxu0 0
    %268 = vmatprep.subr.bf16.mxu0 0
    %269 = vmatpush1.bf16.msra.mxu0 0
    %270 = vmatprep.subr.bf16.mxu0 0
    %271 = vmatpush1.bf16.msra.mxu0 0
    %272 = vmatprep.subr.bf16.mxu0 0
    %273 = vmatpush1.bf16.msra.mxu0 0
    %274 = vmatprep.subr.bf16.mxu0 0
    %275 = vmatpush1.bf16.msra.mxu0 0
    %276 = vmatprep.subr.bf16.mxu0 0
    %277 = vmatpush1.bf16.msra.mxu0 0
    %278 = vmatprep.subr.bf16.mxu0 0
    %279 = vmatpush1.bf16.msra.mxu0 0
    %280 = vmatprep.subr.bf16.mxu0 0
    %281 = vmatpush1.bf16.msra.mxu0 0
    %282 = vmatprep.mubr.bf16.mxu0 0
    %283 = vmatmul.mubr.bf16.gmra.mrb[0].mxu0 %v245
    %v284 = vpop.f32.mrb[0].mxu0
    %v285 = vadd.f32 0.0, %v284
    %v286 = vpop.f32.mrb[0].mxu0
    %v287 = vpop.f32.mrb[0].mxu0
    %v288 = vadd.f32 0.0, %v287
    %v289 = vpop.f32.mrb[0].mxu0
    %290 = vmatprep.mubr.bf16.mxu0 0
    %291 = vmatmul.mubr.bf16.gmra.mrb[0].mxu0 %v248
    %v292 = vpop.f32.mrb[0].mxu0
    %v293 = vadd.f32 0.0, %v292
    %v294 = vpop.f32.mrb[0].mxu0
    %v295 = vpop.f32.mrb[0].mxu0
    %v296 = vadd.f32 0.0, %v295
    %v297 = vpop.f32.mrb[0].mxu0
    %298 = vdwg.mxu0
    %v299 = vpack.c.bf16 %v223, %v220
    %v300 = vpack.c.bf16 %v231, %v228
    %301 = vst [vmem:[#allocation2] sm:$0xff] %v299
    %302 = vst [vmem:[#allocation2 + $0x20] sm:$0xff] %v300
    %v303 = vpack.c.bf16 %v288, %v285
    %v304 = vpack.c.bf16 %v296, %v293
    %305 = vst [vmem:[#allocation2 + $0x8] sm:$0xff] %v303
    %306 = vst [vmem:[#allocation2 + $0x28] sm:$0xff] %v304
    %v307 = vld [vmem:[#allocation2] sm:$0xff]
    %v308 = vld [vmem:[#allocation2 + $0x8] sm:$0xff]
    %v309 = vld [vmem:[#allocation2 + $0x10] sm:$0xff]
    %v310 = vld [vmem:[#allocation2 + $0x18] sm:$0xff]
    %v311 = vld [vmem:[#allocation2 + $0x20] sm:$0xff]
    %v312 = vld [vmem:[#allocation2 + $0x28] sm:$0xff]
    %v313 = vld [vmem:[#allocation2 + $0x30] sm:$0xff]
    %v314 = vld [vmem:[#allocation2 + $0x38] sm:$0xff]
    %v315 = vld [vmem:[%s9] sm:$0xf]
    %v316 = vld [vmem:[%s9 + $0x4] sm:$0xf]
    %v317 = vld [vmem:[%s9 + $0x8] sm:$0xf]
    %v318 = vld [vmem:[%s9 + $0xc] sm:$0xf]
    %v319 = vld [vmem:[%s9 + $0x10] sm:$0xf]
    %v320 = vld [vmem:[%s9 + $0x14] sm:$0xf]
    %v321 = vld [vmem:[%s9 + $0x18] sm:$0xf]
    %v322 = vld [vmem:[%s9 + $0x1c] sm:$0xf]
    %v323 = vld [vmem:[%s9 + $0x20] sm:$0xf]
    %v324 = vld [vmem:[%s9 + $0x24] sm:$0xf]
    %v325 = vld [vmem:[%s9 + $0x28] sm:$0xf]
    %v326 = vld [vmem:[%s9 + $0x2c] sm:$0xf]
    %v327 = vld [vmem:[%s9 + $0x30] sm:$0xf]
    %v328 = vld [vmem:[%s9 + $0x34] sm:$0xf]
    %v329 = vld [vmem:[%s9 + $0x38] sm:$0xf]
    %v330 = vld [vmem:[%s9 + $0x3c] sm:$0xf]
    %v331 = vld [vmem:[%s9 + $0x40] sm:$0xf]
    %v332 = vld [vmem:[%s9 + $0x44] sm:$0xf]
    %v333 = vld [vmem:[%s9 + $0x48] sm:$0xf]
    %v334 = vld [vmem:[%s9 + $0x4c] sm:$0xf]
    %v335 = vld [vmem:[%s9 + $0x50] sm:$0xf]
    %v336 = vld [vmem:[%s9 + $0x54] sm:$0xf]
    %v337 = vld [vmem:[%s9 + $0x58] sm:$0xf]
    %v338 = vld [vmem:[%s9 + $0x5c] sm:$0xf]
    %v339 = vld [vmem:[%s9 + $0x60] sm:$0xf]
    %v340 = vld [vmem:[%s9 + $0x64] sm:$0xf]
    %v341 = vld [vmem:[%s9 + $0x68] sm:$0xf]
    %v342 = vld [vmem:[%s9 + $0x6c] sm:$0xf]
    %v343 = vld [vmem:[%s9 + $0x70] sm:$0xf]
    %v344 = vld [vmem:[%s9 + $0x74] sm:$0xf]
    %v345 = vld [vmem:[%s9 + $0x78] sm:$0xf]
    %v346 = vld [vmem:[%s9 + $0x7c] sm:$0xf]
    %v347 = vld [vmem:[%s9 + $0x80] sm:$0xf]
    %v348 = vld [vmem:[%s9 + $0x84] sm:$0xf]
    %v349 = vld [vmem:[%s9 + $0x88] sm:$0xf]
    %v350 = vld [vmem:[%s9 + $0x8c] sm:$0xf]
    %v351 = vld [vmem:[%s9 + $0x90] sm:$0xf]
    %v352 = vld [vmem:[%s9 + $0x94] sm:$0xf]
    %v353 = vld [vmem:[%s9 + $0x98] sm:$0xf]
    %v354 = vld [vmem:[%s9 + $0x9c] sm:$0xf]
    %v355 = vld [vmem:[%s9 + $0xa0] sm:$0xf]
    %v356 = vld [vmem:[%s9 + $0xa4] sm:$0xf]
    %v357 = vld [vmem:[%s9 + $0xa8] sm:$0xf]
    %v358 = vld [vmem:[%s9 + $0xac] sm:$0xf]
    %v359 = vld [vmem:[%s9 + $0xb0] sm:$0xf]
    %v360 = vld [vmem:[%s9 + $0xb4] sm:$0xf]
    %v361 = vld [vmem:[%s9 + $0xb8] sm:$0xf]
    %v362 = vld [vmem:[%s9 + $0xbc] sm:$0xf]
    %v363 = vld [vmem:[%s9 + $0xc0] sm:$0xf]
    %v364 = vld [vmem:[%s9 + $0xc4] sm:$0xf]
    %v365 = vld [vmem:[%s9 + $0xc8] sm:$0xf]
    %v366 = vld [vmem:[%s9 + $0xcc] sm:$0xf]
    %v367 = vld [vmem:[%s9 + $0xd0] sm:$0xf]
    %v368 = vld [vmem:[%s9 + $0xd4] sm:$0xf]
    %v369 = vld [vmem:[%s9 + $0xd8] sm:$0xf]
    %v370 = vld [vmem:[%s9 + $0xdc] sm:$0xf]
    %v371 = vld [vmem:[%s9 + $0xe0] sm:$0xf]
    %v372 = vld [vmem:[%s9 + $0xe4] sm:$0xf]
    %v373 = vld [vmem:[%s9 + $0xe8] sm:$0xf]
    %v374 = vld [vmem:[%s9 + $0xec] sm:$0xf]
    %v375 = vld [vmem:[%s9 + $0xf0] sm:$0xf]
    %v376 = vld [vmem:[%s9 + $0xf4] sm:$0xf]
    %v377 = vld [vmem:[%s9 + $0xf8] sm:$0xf]
    %v378 = vld [vmem:[%s9 + $0xfc] sm:$0xf]
    %v379 = vld [vmem:[%s10] sm:$0x1]
    %v381 = vlaneseq
    %v382 = vshrl.u32 %v381, 7
    %v383 = vsub.s32 0, %v382
    %v384 = vrot.slane %v379, %v383
    %v450 = vunpack.c.l.b16 %v315
    %v451 = vunpack.c.l.b16 %v316
    %v452 = vunpack.c.l.b16 %v317
    %v453 = vunpack.c.l.b16 %v318
    %v454 = vunpack.c.l.b16 %v319
    %v455 = vunpack.c.l.b16 %v320
    %v456 = vunpack.c.l.b16 %v321
    %v457 = vunpack.c.l.b16 %v322
    %v458 = vunpack.c.l.b16 %v323
    %v459 = vunpack.c.l.b16 %v324
    %v460 = vunpack.c.l.b16 %v325
    %v461 = vunpack.c.l.b16 %v326
    %v462 = vunpack.c.l.b16 %v327
    %v463 = vunpack.c.l.b16 %v328
    %v464 = vunpack.c.l.b16 %v329
    %v465 = vunpack.c.l.b16 %v330
    %v466 = vunpack.c.l.b16 %v331
    %v467 = vunpack.c.l.b16 %v332
    %v468 = vunpack.c.l.b16 %v333
    %v469 = vunpack.c.l.b16 %v334
    %v470 = vunpack.c.l.b16 %v335
    %v471 = vunpack.c.l.b16 %v336
    %v472 = vunpack.c.l.b16 %v337
    %v473 = vunpack.c.l.b16 %v338
    %v474 = vunpack.c.l.b16 %v339
    %v475 = vunpack.c.l.b16 %v340
    %v476 = vunpack.c.l.b16 %v341
    %v477 = vunpack.c.l.b16 %v342
    %v478 = vunpack.c.l.b16 %v343
    %v479 = vunpack.c.l.b16 %v344
    %v480 = vunpack.c.l.b16 %v345
    %v481 = vunpack.c.l.b16 %v346
    %v482 = vunpack.c.l.b16 %v347
    %v483 = vunpack.c.l.b16 %v348
    %v484 = vunpack.c.l.b16 %v349
    %v485 = vunpack.c.l.b16 %v350
    %v486 = vunpack.c.l.b16 %v351
    %v487 = vunpack.c.l.b16 %v352
    %v488 = vunpack.c.l.b16 %v353
    %v489 = vunpack.c.l.b16 %v354
    %v490 = vunpack.c.l.b16 %v355
    %v491 = vunpack.c.l.b16 %v356
    %v492 = vunpack.c.l.b16 %v357
    %v493 = vunpack.c.l.b16 %v358
    %v494 = vunpack.c.l.b16 %v359
    %v495 = vunpack.c.l.b16 %v360
    %v496 = vunpack.c.l.b16 %v361
    %v497 = vunpack.c.l.b16 %v362
    %v498 = vunpack.c.l.b16 %v363
    %v499 = vunpack.c.l.b16 %v364
    %v500 = vunpack.c.l.b16 %v365
    %v501 = vunpack.c.l.b16 %v366
    %v502 = vunpack.c.l.b16 %v367
    %v503 = vunpack.c.l.b16 %v368
    %v504 = vunpack.c.l.b16 %v369
    %v505 = vunpack.c.l.b16 %v370
    %v506 = vunpack.c.l.b16 %v371
    %v507 = vunpack.c.l.b16 %v372
    %v508 = vunpack.c.l.b16 %v373
    %v509 = vunpack.c.l.b16 %v374
    %v510 = vunpack.c.l.b16 %v375
    %v511 = vunpack.c.l.b16 %v376
    %v512 = vunpack.c.l.b16 %v377
    %v513 = vunpack.c.l.b16 %v378
    %v514 = vpack.c.b16 %v451, %v450
    %v515 = vpack.c.b16 %v453, %v452
    %v516 = vpack.c.b16 %v455, %v454
    %v517 = vpack.c.b16 %v457, %v456
    %v518 = vpack.c.b16 %v459, %v458
    %v519 = vpack.c.b16 %v461, %v460
    %v520 = vpack.c.b16 %v463, %v462
    %v521 = vpack.c.b16 %v465, %v464
    %v522 = vpack.c.b16 %v467, %v466
    %v523 = vpack.c.b16 %v469, %v468
    %v524 = vpack.c.b16 %v471, %v470
    %v525 = vpack.c.b16 %v473, %v472
    %v526 = vpack.c.b16 %v475, %v474
    %v527 = vpack.c.b16 %v477, %v476
    %v528 = vpack.c.b16 %v479, %v478
    %v529 = vpack.c.b16 %v481, %v480
    %v530 = vpack.c.b16 %v483, %v482
    %v531 = vpack.c.b16 %v485, %v484
    %v532 = vpack.c.b16 %v487, %v486
    %v533 = vpack.c.b16 %v489, %v488
    %v534 = vpack.c.b16 %v491, %v490
    %v535 = vpack.c.b16 %v493, %v492
    %v536 = vpack.c.b16 %v495, %v494
    %v537 = vpack.c.b16 %v497, %v496
    %v538 = vpack.c.b16 %v499, %v498
    %v539 = vpack.c.b16 %v501, %v500
    %v540 = vpack.c.b16 %v503, %v502
    %v541 = vpack.c.b16 %v505, %v504
    %v542 = vpack.c.b16 %v507, %v506
    %v543 = vpack.c.b16 %v509, %v508
    %v544 = vpack.c.b16 %v511, %v510
    %v545 = vpack.c.b16 %v513, %v512
    %578 = vmatprep.subr.bf16.mxu0 0
    %579 = vmatpush1.bf16.msra.mxu0 %v514
    %580 = vmatprep.subr.bf16.mxu0 0
    %581 = vmatpush1.bf16.msra.mxu0 %v515
    %582 = vmatprep.subr.bf16.mxu0 0
    %583 = vmatpush1.bf16.msra.mxu0 %v516
    %584 = vmatprep.subr.bf16.mxu0 0
    %585 = vmatpush1.bf16.msra.mxu0 %v517
    %586 = vmatprep.subr.bf16.mxu0 0
    %587 = vmatpush1.bf16.msra.mxu0 %v518
    %588 = vmatprep.subr.bf16.mxu0 0
    %589 = vmatpush1.bf16.msra.mxu0 %v519
    %590 = vmatprep.subr.bf16.mxu0 0
    %591 = vmatpush1.bf16.msra.mxu0 %v520
    %592 = vmatprep.subr.bf16.mxu0 0
    %593 = vmatpush1.bf16.msra.mxu0 %v521
    %594 = vmatprep.subr.bf16.mxu0 0
    %595 = vmatpush1.bf16.msra.mxu0 %v522
    %596 = vmatprep.subr.bf16.mxu0 0
    %597 = vmatpush1.bf16.msra.mxu0 %v523
    %598 = vmatprep.subr.bf16.mxu0 0
    %599 = vmatpush1.bf16.msra.mxu0 %v524
    %600 = vmatprep.subr.bf16.mxu0 0
    %601 = vmatpush1.bf16.msra.mxu0 %v525
    %602 = vmatprep.subr.bf16.mxu0 0
    %603 = vmatpush1.bf16.msra.mxu0 %v526
    %604 = vmatprep.subr.bf16.mxu0 0
    %605 = vmatpush1.bf16.msra.mxu0 %v527
    %606 = vmatprep.subr.bf16.mxu0 0
    %607 = vmatpush1.bf16.msra.mxu0 %v528
    %608 = vmatprep.subr.bf16.mxu0 0
    %609 = vmatpush1.bf16.msra.mxu0 %v529
    %610 = vmatprep.mubr.bf16.mxu0 %v308
    %611 = vmatmul.mubr.bf16.gmra.mrb[0].mxu0 %v307
    %v612 = vpop.f32.mrb[0].mxu0
    %v613 = vadd.f32 %v384, %v612
    %v614 = vpop.f32.mrb[0].mxu0
    %v615 = vpop.f32.mrb[0].mxu0
    %v616 = vadd.f32 %v384, %v615
    %v617 = vpop.f32.mrb[0].mxu0
    %618 = vmatprep.mubr.bf16.mxu0 %v312
    %619 = vmatmul.mubr.bf16.gmra.mrb[0].mxu0 %v311
    %v620 = vpop.f32.mrb[0].mxu0
    %v621 = vadd.f32 %v384, %v620
    %v622 = vpop.f32.mrb[0].mxu0
    %v623 = vpop.f32.mrb[0].mxu0
    %v624 = vadd.f32 %v384, %v623
    %v625 = vpop.f32.mrb[0].mxu0
    %626 = vdwg.mxu0
    %627 = vmatprep.subr.bf16.mxu0 0
    %628 = vmatpush1.bf16.msra.mxu0 %v530
    %629 = vmatprep.subr.bf16.mxu0 0
    %630 = vmatpush1.bf16.msra.mxu0 %v531
    %631 = vmatprep.subr.bf16.mxu0 0
    %632 = vmatpush1.bf16.msra.mxu0 %v532
    %633 = vmatprep.subr.bf16.mxu0 0
    %634 = vmatpush1.bf16.msra.mxu0 %v533
    %635 = vmatprep.subr.bf16.mxu0 0
    %636 = vmatpush1.bf16.msra.mxu0 %v534
    %637 = vmatprep.subr.bf16.mxu0 0
    %638 = vmatpush1.bf16.msra.mxu0 %v535
    %639 = vmatprep.subr.bf16.mxu0 0
    %640 = vmatpush1.bf16.msra.mxu0 %v536
    %641 = vmatprep.subr.bf16.mxu0 0
    %642 = vmatpush1.bf16.msra.mxu0 %v537
    %643 = vmatprep.subr.bf16.mxu0 0
    %644 = vmatpush1.bf16.msra.mxu0 %v538
    %645 = vmatprep.subr.bf16.mxu0 0
    %646 = vmatpush1.bf16.msra.mxu0 %v539
    %647 = vmatprep.subr.bf16.mxu0 0
    %648 = vmatpush1.bf16.msra.mxu0 %v540
    %649 = vmatprep.subr.bf16.mxu0 0
    %650 = vmatpush1.bf16.msra.mxu0 %v541
    %651 = vmatprep.subr.bf16.mxu0 0
    %652 = vmatpush1.bf16.msra.mxu0 %v542
    %653 = vmatprep.subr.bf16.mxu0 0
    %654 = vmatpush1.bf16.msra.mxu0 %v543
    %655 = vmatprep.subr.bf16.mxu0 0
    %656 = vmatpush1.bf16.msra.mxu0 %v544
    %657 = vmatprep.subr.bf16.mxu0 0
    %658 = vmatpush1.bf16.msra.mxu0 %v545
    %659 = vmatprep.mubr.bf16.mxu0 %v310
    %660 = vmatmul.mubr.bf16.gmra.mrb[0].mxu0 %v309
    %v661 = vpop.f32.mrb[0].mxu0
    %v662 = vadd.f32 %v613, %v661
    %v663 = vpop.f32.mrb[0].mxu0
    %v664 = vpop.f32.mrb[0].mxu0
    %v665 = vadd.f32 %v616, %v664
    %v666 = vpop.f32.mrb[0].mxu0
    %667 = vmatprep.mubr.bf16.mxu0 %v314
    %668 = vmatmul.mubr.bf16.gmra.mrb[0].mxu0 %v313
    %v669 = vpop.f32.mrb[0].mxu0
    %v670 = vadd.f32 %v621, %v669
    %v671 = vpop.f32.mrb[0].mxu0
    %v672 = vpop.f32.mrb[0].mxu0
    %v673 = vadd.f32 %v624, %v672
    %v674 = vpop.f32.mrb[0].mxu0
    %675 = vdwg.mxu0
    %v676 = vsub.f32 0.0, %v662
    %v677 = vsub.f32 0.0, %v665
    %v678 = vsub.f32 0.0, %v670
    %v679 = vsub.f32 0.0, %v673
    %v680 = vmul.f32 %v676, 1.442695
    %v681 = vpow.pop %v680
    %v682 = vmul.f32 %v677, 1.442695
    %v683 = vpow.pop %v682
    %v684 = vmul.f32 %v678, 1.442695
    %v685 = vpow.pop %v684
    %v686 = vmul.f32 %v679, 1.442695
    %v687 = vpow.pop %v686
    %v688 = vadd.f32 %v681, 1.0
    %v689 = vadd.f32 %v683, 1.0
    %v690 = vadd.f32 %v685, 1.0
    %v691 = vadd.f32 %v687, 1.0
    %v692 = vrcp.pop %v688
    %v693 = vmul.f32 1.0, %v692
    %v694 = vrcp.pop %v689
    %v695 = vmul.f32 1.0, %v694
    %v696 = vrcp.pop %v690
    %v697 = vmul.f32 1.0, %v696
    %v698 = vrcp.pop %v691
    %v699 = vmul.f32 1.0, %v698
    %v700 = vmul.f32 %v662, %v693
    %v701 = vmul.f32 %v665, %v695
    %v702 = vmul.f32 %v670, %v697
    %v703 = vmul.f32 %v673, %v699
    %v704 = vpack.c.bf16 %v701, %v700
    %v705 = vpack.c.bf16 %v703, %v702
    %708 = vxpose.xlu0.c.b16.start [1/8] %v242, 128
    %709 = vxpose.xlu0.c.b16.cont [2/8] %v243, 128
    %710 = vxpose.xlu0.c.b16.cont [3/8] 0, 128
    %711 = vxpose.xlu0.c.b16.cont [4/8] 0, 128
    %712 = vxpose.xlu0.c.b16.cont [5/8] 0, 128
    %713 = vxpose.xlu0.c.b16.cont [6/8] 0, 128
    %714 = vxpose.xlu0.c.b16.cont [7/8] 0, 128
    %715 = vxpose.xlu0.c.b16.end [8/8] 0, 128
    %v716 = vpop.trf.xlu0
    %v717 = vpop.trf.xlu0
    %v718 = vpop.trf.xlu0
    %v719 = vpop.trf.xlu0
    %v720 = vpop.trf.xlu0
    %v721 = vpop.trf.xlu0
    %v722 = vpop.trf.xlu0
    %v723 = vpop.trf.xlu0
    %vm724 = vcmask 261120
    %v726 = vsel %vm724, %v716, 0
    %728 = vmatprep.subr.bf16.mxu0 0
    %729 = vmatpush1.bf16.msra.mxu0 %v704
    %730 = vmatprep.subr.bf16.mxu0 0
    %731 = vmatpush1.bf16.msra.mxu0 %v705
    %732 = vmatprep.subr.bf16.mxu0 0
    %733 = vmatpush1.bf16.msra.mxu0 0
    %734 = vmatprep.subr.bf16.mxu0 0
    %735 = vmatpush1.bf16.msra.mxu0 0
    %736 = vmatprep.subr.bf16.mxu0 0
    %737 = vmatpush1.bf16.msra.mxu0 0
    %738 = vmatprep.subr.bf16.mxu0 0
    %739 = vmatpush1.bf16.msra.mxu0 0
    %740 = vmatprep.subr.bf16.mxu0 0
    %741 = vmatpush1.bf16.msra.mxu0 0
    %742 = vmatprep.subr.bf16.mxu0 0
    %743 = vmatpush1.bf16.msra.mxu0 0
    %744 = vmatprep.subr.bf16.mxu0 0
    %745 = vmatpush1.bf16.msra.mxu0 0
    %746 = vmatprep.subr.bf16.mxu0 0
    %747 = vmatpush1.bf16.msra.mxu0 0
    %748 = vmatprep.subr.bf16.mxu0 0
    %749 = vmatpush1.bf16.msra.mxu0 0
    %750 = vmatprep.subr.bf16.mxu0 0
    %751 = vmatpush1.bf16.msra.mxu0 0
    %752 = vmatprep.subr.bf16.mxu0 0
    %753 = vmatpush1.bf16.msra.mxu0 0
    %754 = vmatprep.subr.bf16.mxu0 0
    %755 = vmatpush1.bf16.msra.mxu0 0
    %756 = vmatprep.subr.bf16.mxu0 0
    %757 = vmatpush1.bf16.msra.mxu0 0
    %758 = vmatprep.subr.bf16.mxu0 0
    %759 = vmatpush1.bf16.msra.mxu0 0
    %760 = vmatprep.mubr.bf16.mxu0 0
    %761 = vmatmul.mubr.bf16.gmra.mrb[0].mxu0 %v726
    %v762 = vpop.f32.mrb[0].mxu0
    %v763 = vadd.f32 0.0, %v762
    %v764 = vpop.f32.mrb[0].mxu0
    %v765 = vpop.f32.mrb[0].mxu0
    %v766 = vpop.f32.mrb[0].mxu0
    %767 = vdwg.mxu0
    %v768 = vmul.f32 %v763, %v85
    %v769 = vpack.c.bf16 %v768, %v768
    %770 = vxpose.xlu0.c.b16.start [1/8] %v66, 128
    %771 = vxpose.xlu0.c.b16.cont [2/8] 0, 128
    %772 = vxpose.xlu0.c.b16.cont [3/8] 0, 128
    %773 = vxpose.xlu0.c.b16.cont [4/8] 0, 128
    %774 = vxpose.xlu0.c.b16.cont [5/8] 0, 128
    %775 = vxpose.xlu0.c.b16.cont [6/8] 0, 128
    %776 = vxpose.xlu0.c.b16.cont [7/8] 0, 128
    %777 = vxpose.xlu0.c.b16.end [8/8] 0, 128
    %v778 = vpop.trf.xlu0
    %v779 = vpop.trf.xlu0
    %v780 = vpop.trf.xlu0
    %v781 = vpop.trf.xlu0
    %v782 = vpop.trf.xlu0
    %v783 = vpop.trf.xlu0
    %v784 = vpop.trf.xlu0
    %v785 = vpop.trf.xlu0
    %v787 = vsel %vm174, %v778, 0
    %v790 = vsel %vm181, %v769, 0
    %792 = vmatprep.subr.bf16.mxu0 0
    %793 = vmatpush1.bf16.msra.mxu0 %v790
    %794 = vmatprep.subr.bf16.mxu0 0
    %795 = vmatpush1.bf16.msra.mxu0 0
    %796 = vmatprep.subr.bf16.mxu0 0
    %797 = vmatpush1.bf16.msra.mxu0 0
    %798 = vmatprep.subr.bf16.mxu0 0
    %799 = vmatpush1.bf16.msra.mxu0 0
    %800 = vmatprep.subr.bf16.mxu0 0
    %801 = vmatpush1.bf16.msra.mxu0 0
    %802 = vmatprep.subr.bf16.mxu0 0
    %803 = vmatpush1.bf16.msra.mxu0 0
    %804 = vmatprep.subr.bf16.mxu0 0
    %805 = vmatpush1.bf16.msra.mxu0 0
    %806 = vmatprep.subr.bf16.mxu0 0
    %807 = vmatpush1.bf16.msra.mxu0 0
    %808 = vmatprep.subr.bf16.mxu0 0
    %809 = vmatpush1.bf16.msra.mxu0 0
    %810 = vmatprep.subr.bf16.mxu0 0
    %811 = vmatpush1.bf16.msra.mxu0 0
    %812 = vmatprep.subr.bf16.mxu0 0
    %813 = vmatpush1.bf16.msra.mxu0 0
    %814 = vmatprep.subr.bf16.mxu0 0
    %815 = vmatpush1.bf16.msra.mxu0 0
    %816 = vmatprep.subr.bf16.mxu0 0
    %817 = vmatpush1.bf16.msra.mxu0 0
    %818 = vmatprep.subr.bf16.mxu0 0
    %819 = vmatpush1.bf16.msra.mxu0 0
    %820 = vmatprep.subr.bf16.mxu0 0
    %821 = vmatpush1.bf16.msra.mxu0 0
    %822 = vmatprep.subr.bf16.mxu0 0
    %823 = vmatpush1.bf16.msra.mxu0 0
    %824 = vmatprep.mubr.bf16.mxu0 0
    %825 = vmatmul.mubr.bf16.gmra.mrb[0].mxu0 %v787
    %v826 = vpop.f32.mrb[0].mxu0
    %v827 = vadd.f32 0.0, %v826
    %v828 = vpop.f32.mrb[0].mxu0
    %v829 = vpop.f32.mrb[0].mxu0
    %v830 = vadd.f32 0.0, %v829
    %v831 = vpop.f32.mrb[0].mxu0
    %832 = vdwg.mxu0
    %v833 = vadd.f32 %v115, %v827
    %v834 = vadd.f32 %v116, %v830
    %v835 = vpack.c.bf16 %v834, %v833
    %v836 = vld [vmem:[%s11] sm:$0xf]
    %v837 = vld [vmem:[%s11 + $0x4] sm:$0xf]
    %v838 = vld [vmem:[%s11 + $0x8] sm:$0xf]
    %v839 = vld [vmem:[%s11 + $0xc] sm:$0xf]
    %v840 = vld [vmem:[%s11 + $0x10] sm:$0xf]
    %v841 = vld [vmem:[%s11 + $0x14] sm:$0xf]
    %v842 = vld [vmem:[%s11 + $0x18] sm:$0xf]
    %v843 = vld [vmem:[%s11 + $0x1c] sm:$0xf]
    %v844 = vld [vmem:[%s11 + $0x20] sm:$0xf]
    %v845 = vld [vmem:[%s11 + $0x24] sm:$0xf]
    %v846 = vld [vmem:[%s11 + $0x28] sm:$0xf]
    %v847 = vld [vmem:[%s11 + $0x2c] sm:$0xf]
    %v848 = vld [vmem:[%s11 + $0x30] sm:$0xf]
    %v849 = vld [vmem:[%s11 + $0x34] sm:$0xf]
    %v850 = vld [vmem:[%s11 + $0x38] sm:$0xf]
    %v851 = vld [vmem:[%s11 + $0x3c] sm:$0xf]
    %v852 = vld [vmem:[%s12] sm:$0x1]
    %v854 = vlaneseq
    %v855 = vshrl.u32 %v854, 7
    %v856 = vsub.s32 0, %v855
    %v857 = vrot.slane %v852, %v856
    %v875 = vunpack.c.l.b16 %v836
    %v876 = vunpack.c.l.b16 %v837
    %v877 = vunpack.c.l.b16 %v838
    %v878 = vunpack.c.l.b16 %v839
    %v879 = vunpack.c.l.b16 %v840
    %v880 = vunpack.c.l.b16 %v841
    %v881 = vunpack.c.l.b16 %v842
    %v882 = vunpack.c.l.b16 %v843
    %v883 = vunpack.c.l.b16 %v844
    %v884 = vunpack.c.l.b16 %v845
    %v885 = vunpack.c.l.b16 %v846
    %v886 = vunpack.c.l.b16 %v847
    %v887 = vunpack.c.l.b16 %v848
    %v888 = vunpack.c.l.b16 %v849
    %v889 = vunpack.c.l.b16 %v850
    %v890 = vunpack.c.l.b16 %v851
    %v891 = vpack.c.b16 %v876, %v875
    %v892 = vpack.c.b16 %v878, %v877
    %v893 = vpack.c.b16 %v880, %v879
    %v894 = vpack.c.b16 %v882, %v881
    %v895 = vpack.c.b16 %v884, %v883
    %v896 = vpack.c.b16 %v886, %v885
    %v897 = vpack.c.b16 %v888, %v887
    %v898 = vpack.c.b16 %v890, %v889
    %907 = vmatprep.subr.bf16.mxu0 0
    %908 = vmatpush1.bf16.msra.mxu0 %v891
    %909 = vmatprep.subr.bf16.mxu0 0
    %910 = vmatpush1.bf16.msra.mxu0 %v892
    %911 = vmatprep.subr.bf16.mxu0 0
    %912 = vmatpush1.bf16.msra.mxu0 %v893
    %913 = vmatprep.subr.bf16.mxu0 0
    %914 = vmatpush1.bf16.msra.mxu0 %v894
    %915 = vmatprep.subr.bf16.mxu0 0
    %916 = vmatpush1.bf16.msra.mxu0 %v895
    %917 = vmatprep.subr.bf16.mxu0 0
    %918 = vmatpush1.bf16.msra.mxu0 %v896
    %919 = vmatprep.subr.bf16.mxu0 0
    %920 = vmatpush1.bf16.msra.mxu0 %v897
    %921 = vmatprep.subr.bf16.mxu0 0
    %922 = vmatpush1.bf16.msra.mxu0 %v898
    %923 = vmatprep.subr.bf16.mxu0 0
    %924 = vmatpush1.bf16.msra.mxu0 0
    %925 = vmatprep.subr.bf16.mxu0 0
    %926 = vmatpush1.bf16.msra.mxu0 0
    %927 = vmatprep.subr.bf16.mxu0 0
    %928 = vmatpush1.bf16.msra.mxu0 0
    %929 = vmatprep.subr.bf16.mxu0 0
    %930 = vmatpush1.bf16.msra.mxu0 0
    %931 = vmatprep.subr.bf16.mxu0 0
    %932 = vmatpush1.bf16.msra.mxu0 0
    %933 = vmatprep.subr.bf16.mxu0 0
    %934 = vmatpush1.bf16.msra.mxu0 0
    %935 = vmatprep.subr.bf16.mxu0 0
    %936 = vmatpush1.bf16.msra.mxu0 0
    %937 = vmatprep.subr.bf16.mxu0 0
    %938 = vmatpush1.bf16.msra.mxu0 0
    %939 = vmatprep.mubr.bf16.mxu0 0
    %940 = vmatmul.mubr.bf16.gmra.mrb[0].mxu0 %v835
    %v941 = vpop.f32.mrb[0].mxu0
    %v942 = vadd.f32 %v857, %v941
    %v943 = vpop.f32.mrb[0].mxu0
    %v944 = vpop.f32.mrb[0].mxu0
    %v945 = vadd.f32 %v857, %v944
    %v946 = vpop.f32.mrb[0].mxu0
    %947 = vdwg.mxu0
    %v948 = vsub.f32 0.0, %v942
    %v949 = vsub.f32 0.0, %v945
    %v950 = vmul.f32 %v948, 1.442695
    %v951 = vpow.pop %v950
    %v952 = vmul.f32 %v949, 1.442695
    %v953 = vpow.pop %v952
    %v954 = vadd.f32 %v951, 1.0
    %v955 = vadd.f32 %v953, 1.0
    %v956 = vrcp.pop %v954
    %v957 = vmul.f32 1.0, %v956
    %v958 = vrcp.pop %v955
    %v959 = vmul.f32 1.0, %v958
    %v960 = vmul.f32 %v942, %v957
    %v961 = vmul.f32 %v945, %v959
    %v962 = vadd.f32 %v115, %v960
    %v963 = vadd.f32 %v116, %v961
    %v964 = vpack.c.bf16 %v963, %v962
    %965 = vmatprep.subr.bf16.mxu0 0
    %966 = vmatpush1.bf16.msra.mxu0 %v964
    %967 = vmatprep.subr.bf16.mxu0 0
    %968 = vmatpush1.bf16.msra.mxu0 0
    %969 = vmatprep.subr.bf16.mxu0 0
    %970 = vmatpush1.bf16.msra.mxu0 0
    %971 = vmatprep.subr.bf16.mxu0 0
    %972 = vmatpush1.bf16.msra.mxu0 0
    %973 = vmatprep.subr.bf16.mxu0 0
    %974 = vmatpush1.bf16.msra.mxu0 0
    %975 = vmatprep.subr.bf16.mxu0 0
    %976 = vmatpush1.bf16.msra.mxu0 0
    %977 = vmatprep.subr.bf16.mxu0 0
    %978 = vmatpush1.bf16.msra.mxu0 0
    %979 = vmatprep.subr.bf16.mxu0 0
    %980 = vmatpush1.bf16.msra.mxu0 0
    %981 = vmatprep.subr.bf16.mxu0 0
    %982 = vmatpush1.bf16.msra.mxu0 0
    %983 = vmatprep.subr.bf16.mxu0 0
    %984 = vmatpush1.bf16.msra.mxu0 0
    %985 = vmatprep.subr.bf16.mxu0 0
    %986 = vmatpush1.bf16.msra.mxu0 0
    %987 = vmatprep.subr.bf16.mxu0 0
    %988 = vmatpush1.bf16.msra.mxu0 0
    %989 = vmatprep.subr.bf16.mxu0 0
    %990 = vmatpush1.bf16.msra.mxu0 0
    %991 = vmatprep.subr.bf16.mxu0 0
    %992 = vmatpush1.bf16.msra.mxu0 0
    %993 = vmatprep.subr.bf16.mxu0 0
    %994 = vmatpush1.bf16.msra.mxu0 0
    %995 = vmatprep.subr.bf16.mxu0 0
    %996 = vmatpush1.bf16.msra.mxu0 0
    %997 = vmatprep.mubr.bf16.mxu0 0
    %998 = vmatmul.mubr.bf16.gmra.mrb[0].mxu0 %v120
    %v999 = vpop.f32.mrb[0].mxu0
    %v1000 = vadd.f32 0.0, %v999
    %v1001 = vpop.f32.mrb[0].mxu0
    %v1002 = vpop.f32.mrb[0].mxu0
    %v1003 = vpop.f32.mrb[0].mxu0
    %1004 = vdwg.mxu0
    %v1005 = vmul.f32 %v1000, %v79
    %v1006 = vpack.c.bf16 %v1005, %v1005
    %v1008 = vsel %vm181, %v1006, 0
    %1010 = vmatprep.subr.bf16.mxu0 0
    %1011 = vmatpush1.bf16.msra.mxu0 %v1008
    %1012 = vmatprep.subr.bf16.mxu0 0
    %1013 = vmatpush1.bf16.msra.mxu0 0
    %1014 = vmatprep.subr.bf16.mxu0 0
    %1015 = vmatpush1.bf16.msra.mxu0 0
    %1016 = vmatprep.subr.bf16.mxu0 0
    %1017 = vmatpush1.bf16.msra.mxu0 0
    %1018 = vmatprep.subr.bf16.mxu0 0
    %1019 = vmatpush1.bf16.msra.mxu0 0
    %1020 = vmatprep.subr.bf16.mxu0 0
    %1021 = vmatpush1.bf16.msra.mxu0 0
    %1022 = vmatprep.subr.bf16.mxu0 0
    %1023 = vmatpush1.bf16.msra.mxu0 0
    %1024 = vmatprep.subr.bf16.mxu0 0
    %1025 = vmatpush1.bf16.msra.mxu0 0
    %1026 = vmatprep.subr.bf16.mxu0 0
    %1027 = vmatpush1.bf16.msra.mxu0 0
    %1028 = vmatprep.subr.bf16.mxu0 0
    %1029 = vmatpush1.bf16.msra.mxu0 0
    %1030 = vmatprep.subr.bf16.mxu0 0
    %1031 = vmatpush1.bf16.msra.mxu0 0
    %1032 = vmatprep.subr.bf16.mxu0 0
    %1033 = vmatpush1.bf16.msra.mxu0 0
    %1034 = vmatprep.subr.bf16.mxu0 0
    %1035 = vmatpush1.bf16.msra.mxu0 0
    %1036 = vmatprep.subr.bf16.mxu0 0
    %1037 = vmatpush1.bf16.msra.mxu0 0
    %1038 = vmatprep.subr.bf16.mxu0 0
    %1039 = vmatpush1.bf16.msra.mxu0 0
    %1040 = vmatprep.subr.bf16.mxu0 0
    %1041 = vmatpush1.bf16.msra.mxu0 0
    %1042 = vmatprep.mubr.bf16.mxu0 0
    %1043 = vmatmul.mubr.bf16.gmra.mrb[0].mxu0 %v176
    %v1044 = vpop.f32.mrb[0].mxu0
    %v1045 = vadd.f32 0.0, %v1044
    %v1046 = vpop.f32.mrb[0].mxu0
    %v1047 = vpop.f32.mrb[0].mxu0
    %v1048 = vadd.f32 0.0, %v1047
    %v1049 = vpop.f32.mrb[0].mxu0
    %1050 = vmatprep.mubr.bf16.mxu0 0
    %1051 = vmatmul.mubr.bf16.gmra.mrb[0].mxu0 %v179
    %v1052 = vpop.f32.mrb[0].mxu0
    %v1053 = vadd.f32 0.0, %v1052
    %v1054 = vpop.f32.mrb[0].mxu0
    %v1055 = vpop.f32.mrb[0].mxu0
    %v1056 = vadd.f32 0.0, %v1055
    %v1057 = vpop.f32.mrb[0].mxu0
    %1058 = vdwg.mxu0
    %1059 = vmatprep.subr.bf16.mxu0 0
    %1060 = vmatpush1.bf16.msra.mxu0 %v1008
    %1061 = vmatprep.subr.bf16.mxu0 0
    %1062 = vmatpush1.bf16.msra.mxu0 0
    %1063 = vmatprep.subr.bf16.mxu0 0
    %1064 = vmatpush1.bf16.msra.mxu0 0
    %1065 = vmatprep.subr.bf16.mxu0 0
    %1066 = vmatpush1.bf16.msra.mxu0 0
    %1067 = vmatprep.subr.bf16.mxu0 0
    %1068 = vmatpush1.bf16.msra.mxu0 0
    %1069 = vmatprep.subr.bf16.mxu0 0
    %1070 = vmatpush1.bf16.msra.mxu0 0
    %1071 = vmatprep.subr.bf16.mxu0 0
    %1072 = vmatpush1.bf16.msra.mxu0 0
    %1073 = vmatprep.subr.bf16.mxu0 0
    %1074 = vmatpush1.bf16.msra.mxu0 0
    %1075 = vmatprep.subr.bf16.mxu0 0
    %1076 = vmatpush1.bf16.msra.mxu0 0
    %1077 = vmatprep.subr.bf16.mxu0 0
    %1078 = vmatpush1.bf16.msra.mxu0 0
    %1079 = vmatprep.subr.bf16.mxu0 0
    %1080 = vmatpush1.bf16.msra.mxu0 0
    %1081 = vmatprep.subr.bf16.mxu0 0
    %1082 = vmatpush1.bf16.msra.mxu0 0
    %1083 = vmatprep.subr.bf16.mxu0 0
    %1084 = vmatpush1.bf16.msra.mxu0 0
    %1085 = vmatprep.subr.bf16.mxu0 0
    %1086 = vmatpush1.bf16.msra.mxu0 0
    %1087 = vmatprep.subr.bf16.mxu0 0
    %1088 = vmatpush1.bf16.msra.mxu0 0
    %1089 = vmatprep.subr.bf16.mxu0 0
    %1090 = vmatpush1.bf16.msra.mxu0 0
    %1091 = vmatprep.mubr.bf16.mxu0 0
    %1092 = vmatmul.mubr.bf16.gmra.mrb[0].mxu0 %v245
    %v1093 = vpop.f32.mrb[0].mxu0
    %v1094 = vadd.f32 0.0, %v1093
    %v1095 = vpop.f32.mrb[0].mxu0
    %v1096 = vpop.f32.mrb[0].mxu0
    %v1097 = vadd.f32 0.0, %v1096
    %v1098 = vpop.f32.mrb[0].mxu0
    %1099 = vmatprep.mubr.bf16.mxu0 0
    %1100 = vmatmul.mubr.bf16.gmra.mrb[0].mxu0 %v248
    %v1101 = vpop.f32.mrb[0].mxu0
    %v1102 = vadd.f32 0.0, %v1101
    %v1103 = vpop.f32.mrb[0].mxu0
    %v1104 = vpop.f32.mrb[0].mxu0
    %v1105 = vadd.f32 0.0, %v1104
    %v1106 = vpop.f32.mrb[0].mxu0
    %1107 = vdwg.mxu0
    %v1108 = vpack.c.bf16 %v1048, %v1045
    %v1109 = vpack.c.bf16 %v1056, %v1053
    %1110 = vst [vmem:[#allocation2] sm:$0xff] %v1108
    %1111 = vst [vmem:[#allocation2 + $0x20] sm:$0xff] %v1109
    %v1112 = vpack.c.bf16 %v1097, %v1094
    %v1113 = vpack.c.bf16 %v1105, %v1102
    %1114 = vst [vmem:[#allocation2 + $0x8] sm:$0xff] %v1112
    %1115 = vst [vmem:[#allocation2 + $0x28] sm:$0xff] %v1113
    %v1116 = vld [vmem:[#allocation2] sm:$0xff]
    %v1117 = vld [vmem:[#allocation2 + $0x8] sm:$0xff]
    %v1118 = vld [vmem:[#allocation2 + $0x10] sm:$0xff]
    %v1119 = vld [vmem:[#allocation2 + $0x18] sm:$0xff]
    %v1120 = vld [vmem:[#allocation2 + $0x20] sm:$0xff]
    %v1121 = vld [vmem:[#allocation2 + $0x28] sm:$0xff]
    %v1122 = vld [vmem:[#allocation2 + $0x30] sm:$0xff]
    %v1123 = vld [vmem:[#allocation2 + $0x38] sm:$0xff]
    %s1124 = scalar_lea.vmem %s9, 256
    %v1125 = vld [vmem:[%s1124] sm:$0xf]
    %v1126 = vld [vmem:[%s1124 + $0x4] sm:$0xf]
    %v1127 = vld [vmem:[%s1124 + $0x8] sm:$0xf]
    %v1128 = vld [vmem:[%s1124 + $0xc] sm:$0xf]
    %v1129 = vld [vmem:[%s1124 + $0x10] sm:$0xf]
    %v1130 = vld [vmem:[%s1124 + $0x14] sm:$0xf]
    %v1131 = vld [vmem:[%s1124 + $0x18] sm:$0xf]
    %v1132 = vld [vmem:[%s1124 + $0x1c] sm:$0xf]
    %v1133 = vld [vmem:[%s1124 + $0x20] sm:$0xf]
    %v1134 = vld [vmem:[%s1124 + $0x24] sm:$0xf]
    %v1135 = vld [vmem:[%s1124 + $0x28] sm:$0xf]
    %v1136 = vld [vmem:[%s1124 + $0x2c] sm:$0xf]
    %v1137 = vld [vmem:[%s1124 + $0x30] sm:$0xf]
    %v1138 = vld [vmem:[%s1124 + $0x34] sm:$0xf]
    %v1139 = vld [vmem:[%s1124 + $0x38] sm:$0xf]
    %v1140 = vld [vmem:[%s1124 + $0x3c] sm:$0xf]
    %v1141 = vld [vmem:[%s1124 + $0x40] sm:$0xf]
    %v1142 = vld [vmem:[%s1124 + $0x44] sm:$0xf]
    %v1143 = vld [vmem:[%s1124 + $0x48] sm:$0xf]
    %v1144 = vld [vmem:[%s1124 + $0x4c] sm:$0xf]
    %v1145 = vld [vmem:[%s1124 + $0x50] sm:$0xf]
    %v1146 = vld [vmem:[%s1124 + $0x54] sm:$0xf]
    %v1147 = vld [vmem:[%s1124 + $0x58] sm:$0xf]
    %v1148 = vld [vmem:[%s1124 + $0x5c] sm:$0xf]
    %v1149 = vld [vmem:[%s1124 + $0x60] sm:$0xf]
    %v1150 = vld [vmem:[%s1124 + $0x64] sm:$0xf]
    %v1151 = vld [vmem:[%s1124 + $0x68] sm:$0xf]
    %v1152 = vld [vmem:[%s1124 + $0x6c] sm:$0xf]
    %v1153 = vld [vmem:[%s1124 + $0x70] sm:$0xf]
    %v1154 = vld [vmem:[%s1124 + $0x74] sm:$0xf]
    %v1155 = vld [vmem:[%s1124 + $0x78] sm:$0xf]
    %v1156 = vld [vmem:[%s1124 + $0x7c] sm:$0xf]
    %v1157 = vld [vmem:[%s1124 + $0x80] sm:$0xf]
    %v1158 = vld [vmem:[%s1124 + $0x84] sm:$0xf]
    %v1159 = vld [vmem:[%s1124 + $0x88] sm:$0xf]
    %v1160 = vld [vmem:[%s1124 + $0x8c] sm:$0xf]
    %v1161 = vld [vmem:[%s1124 + $0x90] sm:$0xf]
    %v1162 = vld [vmem:[%s1124 + $0x94] sm:$0xf]
    %v1163 = vld [vmem:[%s1124 + $0x98] sm:$0xf]
    %v1164 = vld [vmem:[%s1124 + $0x9c] sm:$0xf]
    %v1165 = vld [vmem:[%s1124 + $0xa0] sm:$0xf]
    %v1166 = vld [vmem:[%s1124 + $0xa4] sm:$0xf]
    %v1167 = vld [vmem:[%s1124 + $0xa8] sm:$0xf]
    %v1168 = vld [vmem:[%s1124 + $0xac] sm:$0xf]
    %v1169 = vld [vmem:[%s1124 + $0xb0] sm:$0xf]
    %v1170 = vld [vmem:[%s1124 + $0xb4] sm:$0xf]
    %v1171 = vld [vmem:[%s1124 + $0xb8] sm:$0xf]
    %v1172 = vld [vmem:[%s1124 + $0xbc] sm:$0xf]
    %v1173 = vld [vmem:[%s1124 + $0xc0] sm:$0xf]
    %v1174 = vld [vmem:[%s1124 + $0xc4] sm:$0xf]
    %v1175 = vld [vmem:[%s1124 + $0xc8] sm:$0xf]
    %v1176 = vld [vmem:[%s1124 + $0xcc] sm:$0xf]
    %v1177 = vld [vmem:[%s1124 + $0xd0] sm:$0xf]
    %v1178 = vld [vmem:[%s1124 + $0xd4] sm:$0xf]
    %v1179 = vld [vmem:[%s1124 + $0xd8] sm:$0xf]
    %v1180 = vld [vmem:[%s1124 + $0xdc] sm:$0xf]
    %v1181 = vld [vmem:[%s1124 + $0xe0] sm:$0xf]
    %v1182 = vld [vmem:[%s1124 + $0xe4] sm:$0xf]
    %v1183 = vld [vmem:[%s1124 + $0xe8] sm:$0xf]
    %v1184 = vld [vmem:[%s1124 + $0xec] sm:$0xf]
    %v1185 = vld [vmem:[%s1124 + $0xf0] sm:$0xf]
    %v1186 = vld [vmem:[%s1124 + $0xf4] sm:$0xf]
    %v1187 = vld [vmem:[%s1124 + $0xf8] sm:$0xf]
    %v1188 = vld [vmem:[%s1124 + $0xfc] sm:$0xf]
    %s1189 = scalar_lea.vmem %s10, 1
    %v1190 = vld [vmem:[%s1189] sm:$0x1]
    %v1192 = vlaneseq
    %v1193 = vshrl.u32 %v1192, 7
    %v1194 = vsub.s32 0, %v1193
    %v1195 = vrot.slane %v1190, %v1194
    %v1261 = vunpack.c.l.b16 %v1125
    %v1262 = vunpack.c.l.b16 %v1126
    %v1263 = vunpack.c.l.b16 %v1127
    %v1264 = vunpack.c.l.b16 %v1128
    %v1265 = vunpack.c.l.b16 %v1129
    %v1266 = vunpack.c.l.b16 %v1130
    %v1267 = vunpack.c.l.b16 %v1131
    %v1268 = vunpack.c.l.b16 %v1132
    %v1269 = vunpack.c.l.b16 %v1133
    %v1270 = vunpack.c.l.b16 %v1134
    %v1271 = vunpack.c.l.b16 %v1135
    %v1272 = vunpack.c.l.b16 %v1136
    %v1273 = vunpack.c.l.b16 %v1137
    %v1274 = vunpack.c.l.b16 %v1138
    %v1275 = vunpack.c.l.b16 %v1139
    %v1276 = vunpack.c.l.b16 %v1140
    %v1277 = vunpack.c.l.b16 %v1141
    %v1278 = vunpack.c.l.b16 %v1142
    %v1279 = vunpack.c.l.b16 %v1143
    %v1280 = vunpack.c.l.b16 %v1144
    %v1281 = vunpack.c.l.b16 %v1145
    %v1282 = vunpack.c.l.b16 %v1146
    %v1283 = vunpack.c.l.b16 %v1147
    %v1284 = vunpack.c.l.b16 %v1148
    %v1285 = vunpack.c.l.b16 %v1149
    %v1286 = vunpack.c.l.b16 %v1150
    %v1287 = vunpack.c.l.b16 %v1151
    %v1288 = vunpack.c.l.b16 %v1152
    %v1289 = vunpack.c.l.b16 %v1153
    %v1290 = vunpack.c.l.b16 %v1154
    %v1291 = vunpack.c.l.b16 %v1155
    %v1292 = vunpack.c.l.b16 %v1156
    %v1293 = vunpack.c.l.b16 %v1157
    %v1294 = vunpack.c.l.b16 %v1158
    %v1295 = vunpack.c.l.b16 %v1159
    %v1296 = vunpack.c.l.b16 %v1160
    %v1297 = vunpack.c.l.b16 %v1161
    %v1298 = vunpack.c.l.b16 %v1162
    %v1299 = vunpack.c.l.b16 %v1163
    %v1300 = vunpack.c.l.b16 %v1164
    %v1301 = vunpack.c.l.b16 %v1165
    %v1302 = vunpack.c.l.b16 %v1166
    %v1303 = vunpack.c.l.b16 %v1167
    %v1304 = vunpack.c.l.b16 %v1168
    %v1305 = vunpack.c.l.b16 %v1169
    %v1306 = vunpack.c.l.b16 %v1170
    %v1307 = vunpack.c.l.b16 %v1171
    %v1308 = vunpack.c.l.b16 %v1172
    %v1309 = vunpack.c.l.b16 %v1173
    %v1310 = vunpack.c.l.b16 %v1174
    %v1311 = vunpack.c.l.b16 %v1175
    %v1312 = vunpack.c.l.b16 %v1176
    %v1313 = vunpack.c.l.b16 %v1177
    %v1314 = vunpack.c.l.b16 %v1178
    %v1315 = vunpack.c.l.b16 %v1179
    %v1316 = vunpack.c.l.b16 %v1180
    %v1317 = vunpack.c.l.b16 %v1181
    %v1318 = vunpack.c.l.b16 %v1182
    %v1319 = vunpack.c.l.b16 %v1183
    %v1320 = vunpack.c.l.b16 %v1184
    %v1321 = vunpack.c.l.b16 %v1185
    %v1322 = vunpack.c.l.b16 %v1186
    %v1323 = vunpack.c.l.b16 %v1187
    %v1324 = vunpack.c.l.b16 %v1188
    %v1325 = vpack.c.b16 %v1262, %v1261
    %v1326 = vpack.c.b16 %v1264, %v1263
    %v1327 = vpack.c.b16 %v1266, %v1265
    %v1328 = vpack.c.b16 %v1268, %v1267
    %v1329 = vpack.c.b16 %v1270, %v1269
    %v1330 = vpack.c.b16 %v1272, %v1271
    %v1331 = vpack.c.b16 %v1274, %v1273
    %v1332 = vpack.c.b16 %v1276, %v1275
    %v1333 = vpack.c.b16 %v1278, %v1277
    %v1334 = vpack.c.b16 %v1280, %v1279
    %v1335 = vpack.c.b16 %v1282, %v1281
    %v1336 = vpack.c.b16 %v1284, %v1283
    %v1337 = vpack.c.b16 %v1286, %v1285
    %v1338 = vpack.c.b16 %v1288, %v1287
    %v1339 = vpack.c.b16 %v1290, %v1289
    %v1340 = vpack.c.b16 %v1292, %v1291
    %v1341 = vpack.c.b16 %v1294, %v1293
    %v1342 = vpack.c.b16 %v1296, %v1295
    %v1343 = vpack.c.b16 %v1298, %v1297
    %v1344 = vpack.c.b16 %v1300, %v1299
    %v1345 = vpack.c.b16 %v1302, %v1301
    %v1346 = vpack.c.b16 %v1304, %v1303
    %v1347 = vpack.c.b16 %v1306, %v1305
    %v1348 = vpack.c.b16 %v1308, %v1307
    %v1349 = vpack.c.b16 %v1310, %v1309
    %v1350 = vpack.c.b16 %v1312, %v1311
    %v1351 = vpack.c.b16 %v1314, %v1313
    %v1352 = vpack.c.b16 %v1316, %v1315
    %v1353 = vpack.c.b16 %v1318, %v1317
    %v1354 = vpack.c.b16 %v1320, %v1319
    %v1355 = vpack.c.b16 %v1322, %v1321
    %v1356 = vpack.c.b16 %v1324, %v1323
    %1389 = vmatprep.subr.bf16.mxu0 0
    %1390 = vmatpush1.bf16.msra.mxu0 %v1325
    %1391 = vmatprep.subr.bf16.mxu0 0
    %1392 = vmatpush1.bf16.msra.mxu0 %v1326
    %1393 = vmatprep.subr.bf16.mxu0 0
    %1394 = vmatpush1.bf16.msra.mxu0 %v1327
    %1395 = vmatprep.subr.bf16.mxu0 0
    %1396 = vmatpush1.bf16.msra.mxu0 %v1328
    %1397 = vmatprep.subr.bf16.mxu0 0
    %1398 = vmatpush1.bf16.msra.mxu0 %v1329
    %1399 = vmatprep.subr.bf16.mxu0 0
    %1400 = vmatpush1.bf16.msra.mxu0 %v1330
    %1401 = vmatprep.subr.bf16.mxu0 0
    %1402 = vmatpush1.bf16.msra.mxu0 %v1331
    %1403 = vmatprep.subr.bf16.mxu0 0
    %1404 = vmatpush1.bf16.msra.mxu0 %v1332
    %1405 = vmatprep.subr.bf16.mxu0 0
    %1406 = vmatpush1.bf16.msra.mxu0 %v1333
    %1407 = vmatprep.subr.bf16.mxu0 0
    %1408 = vmatpush1.bf16.msra.mxu0 %v1334
    %1409 = vmatprep.subr.bf16.mxu0 0
    %1410 = vmatpush1.bf16.msra.mxu0 %v1335
    %1411 = vmatprep.subr.bf16.mxu0 0
    %1412 = vmatpush1.bf16.msra.mxu0 %v1336
    %1413 = vmatprep.subr.bf16.mxu0 0
    %1414 = vmatpush1.bf16.msra.mxu0 %v1337
    %1415 = vmatprep.subr.bf16.mxu0 0
    %1416 = vmatpush1.bf16.msra.mxu0 %v1338
    %1417 = vmatprep.subr.bf16.mxu0 0
    %1418 = vmatpush1.bf16.msra.mxu0 %v1339
    %1419 = vmatprep.subr.bf16.mxu0 0
    %1420 = vmatpush1.bf16.msra.mxu0 %v1340
    %1421 = vmatprep.mubr.bf16.mxu0 %v1117
    %1422 = vmatmul.mubr.bf16.gmra.mrb[0].mxu0 %v1116
    %v1423 = vpop.f32.mrb[0].mxu0
    %v1424 = vadd.f32 %v1195, %v1423
    %v1425 = vpop.f32.mrb[0].mxu0
    %v1426 = vpop.f32.mrb[0].mxu0
    %v1427 = vadd.f32 %v1195, %v1426
    %v1428 = vpop.f32.mrb[0].mxu0
    %1429 = vmatprep.mubr.bf16.mxu0 %v1121
    %1430 = vmatmul.mubr.bf16.gmra.mrb[0].mxu0 %v1120
    %v1431 = vpop.f32.mrb[0].mxu0
    %v1432 = vadd.f32 %v1195, %v1431
    %v1433 = vpop.f32.mrb[0].mxu0
    %v1434 = vpop.f32.mrb[0].mxu0
    %v1435 = vadd.f32 %v1195, %v1434
    %v1436 = vpop.f32.mrb[0].mxu0
    %1437 = vdwg.mxu0
    %1438 = vmatprep.subr.bf16.mxu0 0
    %1439 = vmatpush1.bf16.msra.mxu0 %v1341
    %1440 = vmatprep.subr.bf16.mxu0 0
    %1441 = vmatpush1.bf16.msra.mxu0 %v1342
    %1442 = vmatprep.subr.bf16.mxu0 0
    %1443 = vmatpush1.bf16.msra.mxu0 %v1343
    %1444 = vmatprep.subr.bf16.mxu0 0
    %1445 = vmatpush1.bf16.msra.mxu0 %v1344
    %1446 = vmatprep.subr.bf16.mxu0 0
    %1447 = vmatpush1.bf16.msra.mxu0 %v1345
    %1448 = vmatprep.subr.bf16.mxu0 0
    %1449 = vmatpush1.bf16.msra.mxu0 %v1346
    %1450 = vmatprep.subr.bf16.mxu0 0
    %1451 = vmatpush1.bf16.msra.mxu0 %v1347
    %1452 = vmatprep.subr.bf16.mxu0 0
    %1453 = vmatpush1.bf16.msra.mxu0 %v1348
    %1454 = vmatprep.subr.bf16.mxu0 0
    %1455 = vmatpush1.bf16.msra.mxu0 %v1349
    %1456 = vmatprep.subr.bf16.mxu0 0
    %1457 = vmatpush1.bf16.msra.mxu0 %v1350
    %1458 = vmatprep.subr.bf16.mxu0 0
    %1459 = vmatpush1.bf16.msra.mxu0 %v1351
    %1460 = vmatprep.subr.bf16.mxu0 0
    %1461 = vmatpush1.bf16.msra.mxu0 %v1352
    %1462 = vmatprep.subr.bf16.mxu0 0
    %1463 = vmatpush1.bf16.msra.mxu0 %v1353
    %1464 = vmatprep.subr.bf16.mxu0 0
    %1465 = vmatpush1.bf16.msra.mxu0 %v1354
    %1466 = vmatprep.subr.bf16.mxu0 0
    %1467 = vmatpush1.bf16.msra.mxu0 %v1355
    %1468 = vmatprep.subr.bf16.mxu0 0
    %1469 = vmatpush1.bf16.msra.mxu0 %v1356
    %1470 = vmatprep.mubr.bf16.mxu0 %v1119
    %1471 = vmatmul.mubr.bf16.gmra.mrb[0].mxu0 %v1118
    %v1472 = vpop.f32.mrb[0].mxu0
    %v1473 = vadd.f32 %v1424, %v1472
    %v1474 = vpop.f32.mrb[0].mxu0
    %v1475 = vpop.f32.mrb[0].mxu0
    %v1476 = vadd.f32 %v1427, %v1475
    %v1477 = vpop.f32.mrb[0].mxu0
    %1478 = vmatprep.mubr.bf16.mxu0 %v1123
    %1479 = vmatmul.mubr.bf16.gmra.mrb[0].mxu0 %v1122
    %v1480 = vpop.f32.mrb[0].mxu0
    %v1481 = vadd.f32 %v1432, %v1480
    %v1482 = vpop.f32.mrb[0].mxu0
    %v1483 = vpop.f32.mrb[0].mxu0
    %v1484 = vadd.f32 %v1435, %v1483
    %v1485 = vpop.f32.mrb[0].mxu0
    %1486 = vdwg.mxu0
    %v1487 = vsub.f32 0.0, %v1473
    %v1488 = vsub.f32 0.0, %v1476
    %v1489 = vsub.f32 0.0, %v1481
    %v1490 = vsub.f32 0.0, %v1484
    %v1491 = vmul.f32 %v1487, 1.442695
    %v1492 = vpow.pop %v1491
    %v1493 = vmul.f32 %v1488, 1.442695
    %v1494 = vpow.pop %v1493
    %v1495 = vmul.f32 %v1489, 1.442695
    %v1496 = vpow.pop %v1495
    %v1497 = vmul.f32 %v1490, 1.442695
    %v1498 = vpow.pop %v1497
    %v1499 = vadd.f32 %v1492, 1.0
    %v1500 = vadd.f32 %v1494, 1.0
    %v1501 = vadd.f32 %v1496, 1.0
    %v1502 = vadd.f32 %v1498, 1.0
    %v1503 = vrcp.pop %v1499
    %v1504 = vmul.f32 1.0, %v1503
    %v1505 = vrcp.pop %v1500
    %v1506 = vmul.f32 1.0, %v1505
    %v1507 = vrcp.pop %v1501
    %v1508 = vmul.f32 1.0, %v1507
    %v1509 = vrcp.pop %v1502
    %v1510 = vmul.f32 1.0, %v1509
    %v1511 = vmul.f32 %v1473, %v1504
    %v1512 = vmul.f32 %v1476, %v1506
    %v1513 = vmul.f32 %v1481, %v1508
    %v1514 = vmul.f32 %v1484, %v1510
    %v1515 = vpack.c.bf16 %v1512, %v1511
    %v1516 = vpack.c.bf16 %v1514, %v1513
    %1517 = vmatprep.subr.bf16.mxu0 0
    %1518 = vmatpush1.bf16.msra.mxu0 %v1515
    %1519 = vmatprep.subr.bf16.mxu0 0
    %1520 = vmatpush1.bf16.msra.mxu0 %v1516
    %1521 = vmatprep.subr.bf16.mxu0 0
    %1522 = vmatpush1.bf16.msra.mxu0 0
    %1523 = vmatprep.subr.bf16.mxu0 0
    %1524 = vmatpush1.bf16.msra.mxu0 0
    %1525 = vmatprep.subr.bf16.mxu0 0
    %1526 = vmatpush1.bf16.msra.mxu0 0
    %1527 = vmatprep.subr.bf16.mxu0 0
    %1528 = vmatpush1.bf16.msra.mxu0 0
    %1529 = vmatprep.subr.bf16.mxu0 0
    %1530 = vmatpush1.bf16.msra.mxu0 0
    %1531 = vmatprep.subr.bf16.mxu0 0
    %1532 = vmatpush1.bf16.msra.mxu0 0
    %1533 = vmatprep.subr.bf16.mxu0 0
    %1534 = vmatpush1.bf16.msra.mxu0 0
    %1535 = vmatprep.subr.bf16.mxu0 0
    %1536 = vmatpush1.bf16.msra.mxu0 0
    %1537 = vmatprep.subr.bf16.mxu0 0
    %1538 = vmatpush1.bf16.msra.mxu0 0
    %1539 = vmatprep.subr.bf16.mxu0 0
    %1540 = vmatpush1.bf16.msra.mxu0 0
    %1541 = vmatprep.subr.bf16.mxu0 0
    %1542 = vmatpush1.bf16.msra.mxu0 0
    %1543 = vmatprep.subr.bf16.mxu0 0
    %1544 = vmatpush1.bf16.msra.mxu0 0
    %1545 = vmatprep.subr.bf16.mxu0 0
    %1546 = vmatpush1.bf16.msra.mxu0 0
    %1547 = vmatprep.subr.bf16.mxu0 0
    %1548 = vmatpush1.bf16.msra.mxu0 0
    %1549 = vmatprep.mubr.bf16.mxu0 0
    %1550 = vmatmul.mubr.bf16.gmra.mrb[0].mxu0 %v726
    %v1551 = vpop.f32.mrb[0].mxu0
    %v1552 = vadd.f32 0.0, %v1551
    %v1553 = vpop.f32.mrb[0].mxu0
    %v1554 = vpop.f32.mrb[0].mxu0
    %v1555 = vpop.f32.mrb[0].mxu0
    %1556 = vdwg.mxu0
    %v1557 = vmul.f32 %v1552, %v85
    %v1558 = vpack.c.bf16 %v1557, %v1557
    %v1560 = vsel %vm181, %v1558, 0
    %1562 = vmatprep.subr.bf16.mxu0 0
    %1563 = vmatpush1.bf16.msra.mxu0 %v1560
    %1564 = vmatprep.subr.bf16.mxu0 0
    %1565 = vmatpush1.bf16.msra.mxu0 0
    %1566 = vmatprep.subr.bf16.mxu0 0
    %1567 = vmatpush1.bf16.msra.mxu0 0
    %1568 = vmatprep.subr.bf16.mxu0 0
    %1569 = vmatpush1.bf16.msra.mxu0 0
    %1570 = vmatprep.subr.bf16.mxu0 0
    %1571 = vmatpush1.bf16.msra.mxu0 0
    %1572 = vmatprep.subr.bf16.mxu0 0
    %1573 = vmatpush1.bf16.msra.mxu0 0
    %1574 = vmatprep.subr.bf16.mxu0 0
    %1575 = vmatpush1.bf16.msra.mxu0 0
    %1576 = vmatprep.subr.bf16.mxu0 0
    %1577 = vmatpush1.bf16.msra.mxu0 0
    %1578 = vmatprep.subr.bf16.mxu0 0
    %1579 = vmatpush1.bf16.msra.mxu0 0
    %1580 = vmatprep.subr.bf16.mxu0 0
    %1581 = vmatpush1.bf16.msra.mxu0 0
    %1582 = vmatprep.subr.bf16.mxu0 0
    %1583 = vmatpush1.bf16.msra.mxu0 0
    %1584 = vmatprep.subr.bf16.mxu0 0
    %1585 = vmatpush1.bf16.msra.mxu0 0
    %1586 = vmatprep.subr.bf16.mxu0 0
    %1587 = vmatpush1.bf16.msra.mxu0 0
    %1588 = vmatprep.subr.bf16.mxu0 0
    %1589 = vmatpush1.bf16.msra.mxu0 0
    %1590 = vmatprep.subr.bf16.mxu0 0
    %1591 = vmatpush1.bf16.msra.mxu0 0
    %1592 = vmatprep.subr.bf16.mxu0 0
    %1593 = vmatpush1.bf16.msra.mxu0 0
    %1594 = vmatprep.mubr.bf16.mxu0 0
    %1595 = vmatmul.mubr.bf16.gmra.mrb[0].mxu0 %v787
    %v1596 = vpop.f32.mrb[0].mxu0
    %v1597 = vadd.f32 0.0, %v1596
    %v1598 = vpop.f32.mrb[0].mxu0
    %v1599 = vpop.f32.mrb[0].mxu0
    %v1600 = vadd.f32 0.0, %v1599
    %v1601 = vpop.f32.mrb[0].mxu0
    %1602 = vdwg.mxu0
    %v1603 = vadd.f32 %v962, %v1597
    %v1604 = vadd.f32 %v963, %v1600
    %v1605 = vpack.c.bf16 %v1604, %v1603
    %s1606 = scalar_lea.vmem %s11, 64
    %v1607 = vld [vmem:[%s1606] sm:$0xf]
    %v1608 = vld [vmem:[%s1606 + $0x4] sm:$0xf]
    %v1609 = vld [vmem:[%s1606 + $0x8] sm:$0xf]
    %v1610 = vld [vmem:[%s1606 + $0xc] sm:$0xf]
    %v1611 = vld [vmem:[%s1606 + $0x10] sm:$0xf]
    %v1612 = vld [vmem:[%s1606 + $0x14] sm:$0xf]
    %v1613 = vld [vmem:[%s1606 + $0x18] sm:$0xf]
    %v1614 = vld [vmem:[%s1606 + $0x1c] sm:$0xf]
    %v1615 = vld [vmem:[%s1606 + $0x20] sm:$0xf]
    %v1616 = vld [vmem:[%s1606 + $0x24] sm:$0xf]
    %v1617 = vld [vmem:[%s1606 + $0x28] sm:$0xf]
    %v1618 = vld [vmem:[%s1606 + $0x2c] sm:$0xf]
    %v1619 = vld [vmem:[%s1606 + $0x30] sm:$0xf]
    %v1620 = vld [vmem:[%s1606 + $0x34] sm:$0xf]
    %v1621 = vld [vmem:[%s1606 + $0x38] sm:$0xf]
    %v1622 = vld [vmem:[%s1606 + $0x3c] sm:$0xf]
    %s1623 = scalar_lea.vmem %s12, 1
    %v1624 = vld [vmem:[%s1623] sm:$0x1]
    %v1626 = vlaneseq
    %v1627 = vshrl.u32 %v1626, 7
    %v1628 = vsub.s32 0, %v1627
    %v1629 = vrot.slane %v1624, %v1628
    %v1647 = vunpack.c.l.b16 %v1607
    %v1648 = vunpack.c.l.b16 %v1608
    %v1649 = vunpack.c.l.b16 %v1609
    %v1650 = vunpack.c.l.b16 %v1610
    %v1651 = vunpack.c.l.b16 %v1611
    %v1652 = vunpack.c.l.b16 %v1612
    %v1653 = vunpack.c.l.b16 %v1613
    %v1654 = vunpack.c.l.b16 %v1614
    %v1655 = vunpack.c.l.b16 %v1615
    %v1656 = vunpack.c.l.b16 %v1616
    %v1657 = vunpack.c.l.b16 %v1617
    %v1658 = vunpack.c.l.b16 %v1618
    %v1659 = vunpack.c.l.b16 %v1619
    %v1660 = vunpack.c.l.b16 %v1620
    %v1661 = vunpack.c.l.b16 %v1621
    %v1662 = vunpack.c.l.b16 %v1622
    %v1663 = vpack.c.b16 %v1648, %v1647
    %v1664 = vpack.c.b16 %v1650, %v1649
    %v1665 = vpack.c.b16 %v1652, %v1651
    %v1666 = vpack.c.b16 %v1654, %v1653
    %v1667 = vpack.c.b16 %v1656, %v1655
    %v1668 = vpack.c.b16 %v1658, %v1657
    %v1669 = vpack.c.b16 %v1660, %v1659
    %v1670 = vpack.c.b16 %v1662, %v1661
    %1679 = vmatprep.subr.bf16.mxu0 0
    %1680 = vmatpush1.bf16.msra.mxu0 %v1663
    %1681 = vmatprep.subr.bf16.mxu0 0
    %1682 = vmatpush1.bf16.msra.mxu0 %v1664
    %1683 = vmatprep.subr.bf16.mxu0 0
    %1684 = vmatpush1.bf16.msra.mxu0 %v1665
    %1685 = vmatprep.subr.bf16.mxu0 0
    %1686 = vmatpush1.bf16.msra.mxu0 %v1666
    %1687 = vmatprep.subr.bf16.mxu0 0
    %1688 = vmatpush1.bf16.msra.mxu0 %v1667
    %1689 = vmatprep.subr.bf16.mxu0 0
    %1690 = vmatpush1.bf16.msra.mxu0 %v1668
    %1691 = vmatprep.subr.bf16.mxu0 0
    %1692 = vmatpush1.bf16.msra.mxu0 %v1669
    %1693 = vmatprep.subr.bf16.mxu0 0
    %1694 = vmatpush1.bf16.msra.mxu0 %v1670
    %1695 = vmatprep.subr.bf16.mxu0 0
    %1696 = vmatpush1.bf16.msra.mxu0 0
    %1697 = vmatprep.subr.bf16.mxu0 0
    %1698 = vmatpush1.bf16.msra.mxu0 0
    %1699 = vmatprep.subr.bf16.mxu0 0
    %1700 = vmatpush1.bf16.msra.mxu0 0
    %1701 = vmatprep.subr.bf16.mxu0 0
    %1702 = vmatpush1.bf16.msra.mxu0 0
    %1703 = vmatprep.subr.bf16.mxu0 0
    %1704 = vmatpush1.bf16.msra.mxu0 0
    %1705 = vmatprep.subr.bf16.mxu0 0
    %1706 = vmatpush1.bf16.msra.mxu0 0
    %1707 = vmatprep.subr.bf16.mxu0 0
    %1708 = vmatpush1.bf16.msra.mxu0 0
    %1709 = vmatprep.subr.bf16.mxu0 0
    %1710 = vmatpush1.bf16.msra.mxu0 0
    %1711 = vmatprep.mubr.bf16.mxu0 0
    %1712 = vmatmul.mubr.bf16.gmra.mrb[0].mxu0 %v1605
    %v1713 = vpop.f32.mrb[0].mxu0
    %v1714 = vadd.f32 %v1629, %v1713
    %v1715 = vpop.f32.mrb[0].mxu0
    %v1716 = vpop.f32.mrb[0].mxu0
    %v1717 = vadd.f32 %v1629, %v1716
    %v1718 = vpop.f32.mrb[0].mxu0
    %1719 = vdwg.mxu0
    %v1720 = vsub.f32 0.0, %v1714
    %v1721 = vsub.f32 0.0, %v1717
    %v1722 = vmul.f32 %v1720, 1.442695
    %v1723 = vpow.pop %v1722
    %v1724 = vmul.f32 %v1721, 1.442695
    %v1725 = vpow.pop %v1724
    %v1726 = vadd.f32 %v1723, 1.0
    %v1727 = vadd.f32 %v1725, 1.0
    %v1728 = vrcp.pop %v1726
    %v1729 = vmul.f32 1.0, %v1728
    %v1730 = vrcp.pop %v1727
    %v1731 = vmul.f32 1.0, %v1730
    %v1732 = vmul.f32 %v1714, %v1729
    %v1733 = vmul.f32 %v1717, %v1731
    %v1734 = vadd.f32 %v962, %v1732
    %v1735 = vadd.f32 %v963, %v1733
    %v1736 = vpack.c.bf16 %v1735, %v1734
    %1737 = vmatprep.subr.bf16.mxu0 0
    %1738 = vmatpush1.bf16.msra.mxu0 %v1736
    %1739 = vmatprep.subr.bf16.mxu0 0
    %1740 = vmatpush1.bf16.msra.mxu0 0
    %1741 = vmatprep.subr.bf16.mxu0 0
    %1742 = vmatpush1.bf16.msra.mxu0 0
    %1743 = vmatprep.subr.bf16.mxu0 0
    %1744 = vmatpush1.bf16.msra.mxu0 0
    %1745 = vmatprep.subr.bf16.mxu0 0
    %1746 = vmatpush1.bf16.msra.mxu0 0
    %1747 = vmatprep.subr.bf16.mxu0 0
    %1748 = vmatpush1.bf16.msra.mxu0 0
    %1749 = vmatprep.subr.bf16.mxu0 0
    %1750 = vmatpush1.bf16.msra.mxu0 0
    %1751 = vmatprep.subr.bf16.mxu0 0
    %1752 = vmatpush1.bf16.msra.mxu0 0
    %1753 = vmatprep.subr.bf16.mxu0 0
    %1754 = vmatpush1.bf16.msra.mxu0 0
    %1755 = vmatprep.subr.bf16.mxu0 0
    %1756 = vmatpush1.bf16.msra.mxu0 0
    %1757 = vmatprep.subr.bf16.mxu0 0
    %1758 = vmatpush1.bf16.msra.mxu0 0
    %1759 = vmatprep.subr.bf16.mxu0 0
    %1760 = vmatpush1.bf16.msra.mxu0 0
    %1761 = vmatprep.subr.bf16.mxu0 0
    %1762 = vmatpush1.bf16.msra.mxu0 0
    %1763 = vmatprep.subr.bf16.mxu0 0
    %1764 = vmatpush1.bf16.msra.mxu0 0
    %1765 = vmatprep.subr.bf16.mxu0 0
    %1766 = vmatpush1.bf16.msra.mxu0 0
    %1767 = vmatprep.subr.bf16.mxu0 0
    %1768 = vmatpush1.bf16.msra.mxu0 0
    %1769 = vmatprep.mubr.bf16.mxu0 0
    %1770 = vmatmul.mubr.bf16.gmra.mrb[0].mxu0 %v120
    %v1771 = vpop.f32.mrb[0].mxu0
    %v1772 = vadd.f32 0.0, %v1771
    %v1773 = vpop.f32.mrb[0].mxu0
    %v1774 = vpop.f32.mrb[0].mxu0
    %v1775 = vpop.f32.mrb[0].mxu0
    %1776 = vdwg.mxu0
    %v1777 = vmul.f32 %v1772, %v79
    %v1778 = vpack.c.bf16 %v1777, %v1777
    %v1780 = vsel %vm181, %v1778, 0
    %1782 = vmatprep.subr.bf16.mxu0 0
    %1783 = vmatpush1.bf16.msra.mxu0 %v1780
    %1784 = vmatprep.subr.bf16.mxu0 0
    %1785 = vmatpush1.bf16.msra.mxu0 0
    %1786 = vmatprep.subr.bf16.mxu0 0
    %1787 = vmatpush1.bf16.msra.mxu0 0
    %1788 = vmatprep.subr.bf16.mxu0 0
    %1789 = vmatpush1.bf16.msra.mxu0 0
    %1790 = vmatprep.subr.bf16.mxu0 0
    %1791 = vmatpush1.bf16.msra.mxu0 0
    %1792 = vmatprep.subr.bf16.mxu0 0
    %1793 = vmatpush1.bf16.msra.mxu0 0
    %1794 = vmatprep.subr.bf16.mxu0 0
    %1795 = vmatpush1.bf16.msra.mxu0 0
    %1796 = vmatprep.subr.bf16.mxu0 0
    %1797 = vmatpush1.bf16.msra.mxu0 0
    %1798 = vmatprep.subr.bf16.mxu0 0
    %1799 = vmatpush1.bf16.msra.mxu0 0
    %1800 = vmatprep.subr.bf16.mxu0 0
    %1801 = vmatpush1.bf16.msra.mxu0 0
    %1802 = vmatprep.subr.bf16.mxu0 0
    %1803 = vmatpush1.bf16.msra.mxu0 0
    %1804 = vmatprep.subr.bf16.mxu0 0
    %1805 = vmatpush1.bf16.msra.mxu0 0
    %1806 = vmatprep.subr.bf16.mxu0 0
    %1807 = vmatpush1.bf16.msra.mxu0 0
    %1808 = vmatprep.subr.bf16.mxu0 0
    %1809 = vmatpush1.bf16.msra.mxu0 0
    %1810 = vmatprep.subr.bf16.mxu0 0
    %1811 = vmatpush1.bf16.msra.mxu0 0
    %1812 = vmatprep.subr.bf16.mxu0 0
    %1813 = vmatpush1.bf16.msra.mxu0 0
    %1814 = vmatprep.mubr.bf16.mxu0 0
    %1815 = vmatmul.mubr.bf16.gmra.mrb[0].mxu0 %v176
    %v1816 = vpop.f32.mrb[0].mxu0
    %v1817 = vadd.f32 0.0, %v1816
    %v1818 = vpop.f32.mrb[0].mxu0
    %v1819 = vpop.f32.mrb[0].mxu0
    %v1820 = vadd.f32 0.0, %v1819
    %v1821 = vpop.f32.mrb[0].mxu0
    %1822 = vmatprep.mubr.bf16.mxu0 0
    %1823 = vmatmul.mubr.bf16.gmra.mrb[0].mxu0 %v179
    %v1824 = vpop.f32.mrb[0].mxu0
    %v1825 = vadd.f32 0.0, %v1824
    %v1826 = vpop.f32.mrb[0].mxu0
    %v1827 = vpop.f32.mrb[0].mxu0
    %v1828 = vadd.f32 0.0, %v1827
    %v1829 = vpop.f32.mrb[0].mxu0
    %1830 = vdwg.mxu0
    %1831 = vmatprep.subr.bf16.mxu0 0
    %1832 = vmatpush1.bf16.msra.mxu0 %v1780
    %1833 = vmatprep.subr.bf16.mxu0 0
    %1834 = vmatpush1.bf16.msra.mxu0 0
    %1835 = vmatprep.subr.bf16.mxu0 0
    %1836 = vmatpush1.bf16.msra.mxu0 0
    %1837 = vmatprep.subr.bf16.mxu0 0
    %1838 = vmatpush1.bf16.msra.mxu0 0
    %1839 = vmatprep.subr.bf16.mxu0 0
    %1840 = vmatpush1.bf16.msra.mxu0 0
    %1841 = vmatprep.subr.bf16.mxu0 0
    %1842 = vmatpush1.bf16.msra.mxu0 0
    %1843 = vmatprep.subr.bf16.mxu0 0
    %1844 = vmatpush1.bf16.msra.mxu0 0
    %1845 = vmatprep.subr.bf16.mxu0 0
    %1846 = vmatpush1.bf16.msra.mxu0 0
    %1847 = vmatprep.subr.bf16.mxu0 0
    %1848 = vmatpush1.bf16.msra.mxu0 0
    %1849 = vmatprep.subr.bf16.mxu0 0
    %1850 = vmatpush1.bf16.msra.mxu0 0
    %1851 = vmatprep.subr.bf16.mxu0 0
    %1852 = vmatpush1.bf16.msra.mxu0 0
    %1853 = vmatprep.subr.bf16.mxu0 0
    %1854 = vmatpush1.bf16.msra.mxu0 0
    %1855 = vmatprep.subr.bf16.mxu0 0
    %1856 = vmatpush1.bf16.msra.mxu0 0
    %1857 = vmatprep.subr.bf16.mxu0 0
    %1858 = vmatpush1.bf16.msra.mxu0 0
    %1859 = vmatprep.subr.bf16.mxu0 0
    %1860 = vmatpush1.bf16.msra.mxu0 0
    %1861 = vmatprep.subr.bf16.mxu0 0
    %1862 = vmatpush1.bf16.msra.mxu0 0
    %1863 = vmatprep.mubr.bf16.mxu0 0
    %1864 = vmatmul.mubr.bf16.gmra.mrb[0].mxu0 %v245
    %v1865 = vpop.f32.mrb[0].mxu0
    %v1866 = vadd.f32 0.0, %v1865
    %v1867 = vpop.f32.mrb[0].mxu0
    %v1868 = vpop.f32.mrb[0].mxu0
    %v1869 = vadd.f32 0.0, %v1868
    %v1870 = vpop.f32.mrb[0].mxu0
    %1871 = vmatprep.mubr.bf16.mxu0 0
    %1872 = vmatmul.mubr.bf16.gmra.mrb[0].mxu0 %v248
    %v1873 = vpop.f32.mrb[0].mxu0
    %v1874 = vadd.f32 0.0, %v1873
    %v1875 = vpop.f32.mrb[0].mxu0
    %v1876 = vpop.f32.mrb[0].mxu0
    %v1877 = vadd.f32 0.0, %v1876
    %v1878 = vpop.f32.mrb[0].mxu0
    %1879 = vdwg.mxu0
    %v1880 = vpack.c.bf16 %v1820, %v1817
    %v1881 = vpack.c.bf16 %v1828, %v1825
    %1882 = vst [vmem:[#allocation2] sm:$0xff] %v1880
    %1883 = vst [vmem:[#allocation2 + $0x20] sm:$0xff] %v1881
    %v1884 = vpack.c.bf16 %v1869, %v1866
    %v1885 = vpack.c.bf16 %v1877, %v1874
    %1886 = vst [vmem:[#allocation2 + $0x8] sm:$0xff] %v1884
    %1887 = vst [vmem:[#allocation2 + $0x28] sm:$0xff] %v1885
    %v1888 = vld [vmem:[#allocation2] sm:$0xff]
    %v1889 = vld [vmem:[#allocation2 + $0x8] sm:$0xff]
    %v1890 = vld [vmem:[#allocation2 + $0x10] sm:$0xff]
    %v1891 = vld [vmem:[#allocation2 + $0x18] sm:$0xff]
    %v1892 = vld [vmem:[#allocation2 + $0x20] sm:$0xff]
    %v1893 = vld [vmem:[#allocation2 + $0x28] sm:$0xff]
    %v1894 = vld [vmem:[#allocation2 + $0x30] sm:$0xff]
    %v1895 = vld [vmem:[#allocation2 + $0x38] sm:$0xff]
    %s1896 = scalar_lea.vmem %s9, 512
    %v1897 = vld [vmem:[%s1896] sm:$0xf]
    %v1898 = vld [vmem:[%s1896 + $0x4] sm:$0xf]
    %v1899 = vld [vmem:[%s1896 + $0x8] sm:$0xf]
    %v1900 = vld [vmem:[%s1896 + $0xc] sm:$0xf]
    %v1901 = vld [vmem:[%s1896 + $0x10] sm:$0xf]
    %v1902 = vld [vmem:[%s1896 + $0x14] sm:$0xf]
    %v1903 = vld [vmem:[%s1896 + $0x18] sm:$0xf]
    %v1904 = vld [vmem:[%s1896 + $0x1c] sm:$0xf]
    %v1905 = vld [vmem:[%s1896 + $0x20] sm:$0xf]
    %v1906 = vld [vmem:[%s1896 + $0x24] sm:$0xf]
    %v1907 = vld [vmem:[%s1896 + $0x28] sm:$0xf]
    %v1908 = vld [vmem:[%s1896 + $0x2c] sm:$0xf]
    %v1909 = vld [vmem:[%s1896 + $0x30] sm:$0xf]
    %v1910 = vld [vmem:[%s1896 + $0x34] sm:$0xf]
    %v1911 = vld [vmem:[%s1896 + $0x38] sm:$0xf]
    %v1912 = vld [vmem:[%s1896 + $0x3c] sm:$0xf]
    %v1913 = vld [vmem:[%s1896 + $0x40] sm:$0xf]
    %v1914 = vld [vmem:[%s1896 + $0x44] sm:$0xf]
    %v1915 = vld [vmem:[%s1896 + $0x48] sm:$0xf]
    %v1916 = vld [vmem:[%s1896 + $0x4c] sm:$0xf]
    %v1917 = vld [vmem:[%s1896 + $0x50] sm:$0xf]
    %v1918 = vld [vmem:[%s1896 + $0x54] sm:$0xf]
    %v1919 = vld [vmem:[%s1896 + $0x58] sm:$0xf]
    %v1920 = vld [vmem:[%s1896 + $0x5c] sm:$0xf]
    %v1921 = vld [vmem:[%s1896 + $0x60] sm:$0xf]
    %v1922 = vld [vmem:[%s1896 + $0x64] sm:$0xf]
    %v1923 = vld [vmem:[%s1896 + $0x68] sm:$0xf]
    %v1924 = vld [vmem:[%s1896 + $0x6c] sm:$0xf]
    %v1925 = vld [vmem:[%s1896 + $0x70] sm:$0xf]
    %v1926 = vld [vmem:[%s1896 + $0x74] sm:$0xf]
    %v1927 = vld [vmem:[%s1896 + $0x78] sm:$0xf]
    %v1928 = vld [vmem:[%s1896 + $0x7c] sm:$0xf]
    %v1929 = vld [vmem:[%s1896 + $0x80] sm:$0xf]
    %v1930 = vld [vmem:[%s1896 + $0x84] sm:$0xf]
    %v1931 = vld [vmem:[%s1896 + $0x88] sm:$0xf]
    %v1932 = vld [vmem:[%s1896 + $0x8c] sm:$0xf]
    %v1933 = vld [vmem:[%s1896 + $0x90] sm:$0xf]
    %v1934 = vld [vmem:[%s1896 + $0x94] sm:$0xf]
    %v1935 = vld [vmem:[%s1896 + $0x98] sm:$0xf]
    %v1936 = vld [vmem:[%s1896 + $0x9c] sm:$0xf]
    %v1937 = vld [vmem:[%s1896 + $0xa0] sm:$0xf]
    %v1938 = vld [vmem:[%s1896 + $0xa4] sm:$0xf]
    %v1939 = vld [vmem:[%s1896 + $0xa8] sm:$0xf]
    %v1940 = vld [vmem:[%s1896 + $0xac] sm:$0xf]
    %v1941 = vld [vmem:[%s1896 + $0xb0] sm:$0xf]
    %v1942 = vld [vmem:[%s1896 + $0xb4] sm:$0xf]
    %v1943 = vld [vmem:[%s1896 + $0xb8] sm:$0xf]
    %v1944 = vld [vmem:[%s1896 + $0xbc] sm:$0xf]
    %v1945 = vld [vmem:[%s1896 + $0xc0] sm:$0xf]
    %v1946 = vld [vmem:[%s1896 + $0xc4] sm:$0xf]
    %v1947 = vld [vmem:[%s1896 + $0xc8] sm:$0xf]
    %v1948 = vld [vmem:[%s1896 + $0xcc] sm:$0xf]
    %v1949 = vld [vmem:[%s1896 + $0xd0] sm:$0xf]
    %v1950 = vld [vmem:[%s1896 + $0xd4] sm:$0xf]
    %v1951 = vld [vmem:[%s1896 + $0xd8] sm:$0xf]
    %v1952 = vld [vmem:[%s1896 + $0xdc] sm:$0xf]
    %v1953 = vld [vmem:[%s1896 + $0xe0] sm:$0xf]
    %v1954 = vld [vmem:[%s1896 + $0xe4] sm:$0xf]
    %v1955 = vld [vmem:[%s1896 + $0xe8] sm:$0xf]
    %v1956 = vld [vmem:[%s1896 + $0xec] sm:$0xf]
    %v1957 = vld [vmem:[%s1896 + $0xf0] sm:$0xf]
    %v1958 = vld [vmem:[%s1896 + $0xf4] sm:$0xf]
    %v1959 = vld [vmem:[%s1896 + $0xf8] sm:$0xf]
    %v1960 = vld [vmem:[%s1896 + $0xfc] sm:$0xf]
    %s1961 = scalar_lea.vmem %s10, 2
    %v1962 = vld [vmem:[%s1961] sm:$0x1]
    %v1964 = vlaneseq
    %v1965 = vshrl.u32 %v1964, 7
    %v1966 = vsub.s32 0, %v1965
    %v1967 = vrot.slane %v1962, %v1966
    %v2033 = vunpack.c.l.b16 %v1897
    %v2034 = vunpack.c.l.b16 %v1898
    %v2035 = vunpack.c.l.b16 %v1899
    %v2036 = vunpack.c.l.b16 %v1900
    %v2037 = vunpack.c.l.b16 %v1901
    %v2038 = vunpack.c.l.b16 %v1902
    %v2039 = vunpack.c.l.b16 %v1903
    %v2040 = vunpack.c.l.b16 %v1904
    %v2041 = vunpack.c.l.b16 %v1905
    %v2042 = vunpack.c.l.b16 %v1906
    %v2043 = vunpack.c.l.b16 %v1907
    %v2044 = vunpack.c.l.b16 %v1908
    %v2045 = vunpack.c.l.b16 %v1909
    %v2046 = vunpack.c.l.b16 %v1910
    %v2047 = vunpack.c.l.b16 %v1911
    %v2048 = vunpack.c.l.b16 %v1912
    %v2049 = vunpack.c.l.b16 %v1913
    %v2050 = vunpack.c.l.b16 %v1914
    %v2051 = vunpack.c.l.b16 %v1915
    %v2052 = vunpack.c.l.b16 %v1916
    %v2053 = vunpack.c.l.b16 %v1917
    %v2054 = vunpack.c.l.b16 %v1918
    %v2055 = vunpack.c.l.b16 %v1919
    %v2056 = vunpack.c.l.b16 %v1920
    %v2057 = vunpack.c.l.b16 %v1921
    %v2058 = vunpack.c.l.b16 %v1922
    %v2059 = vunpack.c.l.b16 %v1923
    %v2060 = vunpack.c.l.b16 %v1924
    %v2061 = vunpack.c.l.b16 %v1925
    %v2062 = vunpack.c.l.b16 %v1926
    %v2063 = vunpack.c.l.b16 %v1927
    %v2064 = vunpack.c.l.b16 %v1928
    %v2065 = vunpack.c.l.b16 %v1929
    %v2066 = vunpack.c.l.b16 %v1930
    %v2067 = vunpack.c.l.b16 %v1931
    %v2068 = vunpack.c.l.b16 %v1932
    %v2069 = vunpack.c.l.b16 %v1933
    %v2070 = vunpack.c.l.b16 %v1934
    %v2071 = vunpack.c.l.b16 %v1935
    %v2072 = vunpack.c.l.b16 %v1936
    %v2073 = vunpack.c.l.b16 %v1937
    %v2074 = vunpack.c.l.b16 %v1938
    %v2075 = vunpack.c.l.b16 %v1939
    %v2076 = vunpack.c.l.b16 %v1940
    %v2077 = vunpack.c.l.b16 %v1941
    %v2078 = vunpack.c.l.b16 %v1942
    %v2079 = vunpack.c.l.b16 %v1943
    %v2080 = vunpack.c.l.b16 %v1944
    %v2081 = vunpack.c.l.b16 %v1945
    %v2082 = vunpack.c.l.b16 %v1946
    %v2083 = vunpack.c.l.b16 %v1947
    %v2084 = vunpack.c.l.b16 %v1948
    %v2085 = vunpack.c.l.b16 %v1949
    %v2086 = vunpack.c.l.b16 %v1950
    %v2087 = vunpack.c.l.b16 %v1951
    %v2088 = vunpack.c.l.b16 %v1952
    %v2089 = vunpack.c.l.b16 %v1953
    %v2090 = vunpack.c.l.b16 %v1954
    %v2091 = vunpack.c.l.b16 %v1955
    %v2092 = vunpack.c.l.b16 %v1956
    %v2093 = vunpack.c.l.b16 %v1957
    %v2094 = vunpack.c.l.b16 %v1958
    %v2095 = vunpack.c.l.b16 %v1959
    %v2096 = vunpack.c.l.b16 %v1960
    %v2097 = vpack.c.b16 %v2034, %v2033
    %v2098 = vpack.c.b16 %v2036, %v2035
    %v2099 = vpack.c.b16 %v2038, %v2037
    %v2100 = vpack.c.b16 %v2040, %v2039
    %v2101 = vpack.c.b16 %v2042, %v2041
    %v2102 = vpack.c.b16 %v2044, %v2043
    %v2103 = vpack.c.b16 %v2046, %v2045
    %v2104 = vpack.c.b16 %v2048, %v2047
    %v2105 = vpack.c.b16 %v2050, %v2049
    %v2106 = vpack.c.b16 %v2052, %v2051
    %v2107 = vpack.c.b16 %v2054, %v2053
    %v2108 = vpack.c.b16 %v2056, %v2055
    %v2109 = vpack.c.b16 %v2058, %v2057
    %v2110 = vpack.c.b16 %v2060, %v2059
    %v2111 = vpack.c.b16 %v2062, %v2061
    %v2112 = vpack.c.b16 %v2064, %v2063
    %v2113 = vpack.c.b16 %v2066, %v2065
    %v2114 = vpack.c.b16 %v2068, %v2067
    %v2115 = vpack.c.b16 %v2070, %v2069
    %v2116 = vpack.c.b16 %v2072, %v2071
    %v2117 = vpack.c.b16 %v2074, %v2073
    %v2118 = vpack.c.b16 %v2076, %v2075
    %v2119 = vpack.c.b16 %v2078, %v2077
    %v2120 = vpack.c.b16 %v2080, %v2079
    %v2121 = vpack.c.b16 %v2082, %v2081
    %v2122 = vpack.c.b16 %v2084, %v2083
    %v2123 = vpack.c.b16 %v2086, %v2085
    %v2124 = vpack.c.b16 %v2088, %v2087
    %v2125 = vpack.c.b16 %v2090, %v2089
    %v2126 = vpack.c.b16 %v2092, %v2091
    %v2127 = vpack.c.b16 %v2094, %v2093
    %v2128 = vpack.c.b16 %v2096, %v2095
    %2161 = vmatprep.subr.bf16.mxu0 0
    %2162 = vmatpush1.bf16.msra.mxu0 %v2097
    %2163 = vmatprep.subr.bf16.mxu0 0
    %2164 = vmatpush1.bf16.msra.mxu0 %v2098
    %2165 = vmatprep.subr.bf16.mxu0 0
    %2166 = vmatpush1.bf16.msra.mxu0 %v2099
    %2167 = vmatprep.subr.bf16.mxu0 0
    %2168 = vmatpush1.bf16.msra.mxu0 %v2100
    %2169 = vmatprep.subr.bf16.mxu0 0
    %2170 = vmatpush1.bf16.msra.mxu0 %v2101
    %2171 = vmatprep.subr.bf16.mxu0 0
    %2172 = vmatpush1.bf16.msra.mxu0 %v2102
    %2173 = vmatprep.subr.bf16.mxu0 0
    %2174 = vmatpush1.bf16.msra.mxu0 %v2103
    %2175 = vmatprep.subr.bf16.mxu0 0
    %2176 = vmatpush1.bf16.msra.mxu0 %v2104
    %2177 = vmatprep.subr.bf16.mxu0 0
    %2178 = vmatpush1.bf16.msra.mxu0 %v2105
    %2179 = vmatprep.subr.bf16.mxu0 0
    %2180 = vmatpush1.bf16.msra.mxu0 %v2106
    %2181 = vmatprep.subr.bf16.mxu0 0
    %2182 = vmatpush1.bf16.msra.mxu0 %v2107
    %2183 = vmatprep.subr.bf16.mxu0 0
    %2184 = vmatpush1.bf16.msra.mxu0 %v2108
    %2185 = vmatprep.subr.bf16.mxu0 0
    %2186 = vmatpush1.bf16.msra.mxu0 %v2109
    %2187 = vmatprep.subr.bf16.mxu0 0
    %2188 = vmatpush1.bf16.msra.mxu0 %v2110
    %2189 = vmatprep.subr.bf16.mxu0 0
    %2190 = vmatpush1.bf16.msra.mxu0 %v2111
    %2191 = vmatprep.subr.bf16.mxu0 0
    %2192 = vmatpush1.bf16.msra.mxu0 %v2112
    %2193 = vmatprep.mubr.bf16.mxu0 %v1889
    %2194 = vmatmul.mubr.bf16.gmra.mrb[0].mxu0 %v1888
    %v2195 = vpop.f32.mrb[0].mxu0
    %v2196 = vadd.f32 %v1967, %v2195
    %v2197 = vpop.f32.mrb[0].mxu0
    %v2198 = vpop.f32.mrb[0].mxu0
    %v2199 = vadd.f32 %v1967, %v2198
    %v2200 = vpop.f32.mrb[0].mxu0
    %2201 = vmatprep.mubr.bf16.mxu0 %v1893
    %2202 = vmatmul.mubr.bf16.gmra.mrb[0].mxu0 %v1892
    %v2203 = vpop.f32.mrb[0].mxu0
    %v2204 = vadd.f32 %v1967, %v2203
    %v2205 = vpop.f32.mrb[0].mxu0
    %v2206 = vpop.f32.mrb[0].mxu0
    %v2207 = vadd.f32 %v1967, %v2206
    %v2208 = vpop.f32.mrb[0].mxu0
    %2209 = vdwg.mxu0
    %2210 = vmatprep.subr.bf16.mxu0 0
    %2211 = vmatpush1.bf16.msra.mxu0 %v2113
    %2212 = vmatprep.subr.bf16.mxu0 0
    %2213 = vmatpush1.bf16.msra.mxu0 %v2114
    %2214 = vmatprep.subr.bf16.mxu0 0
    %2215 = vmatpush1.bf16.msra.mxu0 %v2115
    %2216 = vmatprep.subr.bf16.mxu0 0
    %2217 = vmatpush1.bf16.msra.mxu0 %v2116
    %2218 = vmatprep.subr.bf16.mxu0 0
    %2219 = vmatpush1.bf16.msra.mxu0 %v2117
    %2220 = vmatprep.subr.bf16.mxu0 0
    %2221 = vmatpush1.bf16.msra.mxu0 %v2118
    %2222 = vmatprep.subr.bf16.mxu0 0
    %2223 = vmatpush1.bf16.msra.mxu0 %v2119
    %2224 = vmatprep.subr.bf16.mxu0 0
    %2225 = vmatpush1.bf16.msra.mxu0 %v2120
    %2226 = vmatprep.subr.bf16.mxu0 0
    %2227 = vmatpush1.bf16.msra.mxu0 %v2121
    %2228 = vmatprep.subr.bf16.mxu0 0
    %2229 = vmatpush1.bf16.msra.mxu0 %v2122
    %2230 = vmatprep.subr.bf16.mxu0 0
    %2231 = vmatpush1.bf16.msra.mxu0 %v2123
    %2232 = vmatprep.subr.bf16.mxu0 0
    %2233 = vmatpush1.bf16.msra.mxu0 %v2124
    %2234 = vmatprep.subr.bf16.mxu0 0
    %2235 = vmatpush1.bf16.msra.mxu0 %v2125
    %2236 = vmatprep.subr.bf16.mxu0 0
    %2237 = vmatpush1.bf16.msra.mxu0 %v2126
    %2238 = vmatprep.subr.bf16.mxu0 0
    %2239 = vmatpush1.bf16.msra.mxu0 %v2127
    %2240 = vmatprep.subr.bf16.mxu0 0
    %2241 = vmatpush1.bf16.msra.mxu0 %v2128
    %2242 = vmatprep.mubr.bf16.mxu0 %v1891
    %2243 = vmatmul.mubr.bf16.gmra.mrb[0].mxu0 %v1890
    %v2244 = vpop.f32.mrb[0].mxu0
    %v2245 = vadd.f32 %v2196, %v2244
    %v2246 = vpop.f32.mrb[0].mxu0
    %v2247 = vpop.f32.mrb[0].mxu0
    %v2248 = vadd.f32 %v2199, %v2247
    %v2249 = vpop.f32.mrb[0].mxu0
    %2250 = vmatprep.mubr.bf16.mxu0 %v1895
    %2251 = vmatmul.mubr.bf16.gmra.mrb[0].mxu0 %v1894
    %v2252 = vpop.f32.mrb[0].mxu0
    %v2253 = vadd.f32 %v2204, %v2252
    %v2254 = vpop.f32.mrb[0].mxu0
    %v2255 = vpop.f32.mrb[0].mxu0
    %v2256 = vadd.f32 %v2207, %v2255
    %v2257 = vpop.f32.mrb[0].mxu0
    %2258 = vdwg.mxu0
    %v2259 = vsub.f32 0.0, %v2245
    %v2260 = vsub.f32 0.0, %v2248
    %v2261 = vsub.f32 0.0, %v2253
    %v2262 = vsub.f32 0.0, %v2256
    %v2263 = vmul.f32 %v2259, 1.442695
    %v2264 = vpow.pop %v2263
    %v2265 = vmul.f32 %v2260, 1.442695
    %v2266 = vpow.pop %v2265
    %v2267 = vmul.f32 %v2261, 1.442695
    %v2268 = vpow.pop %v2267
    %v2269 = vmul.f32 %v2262, 1.442695
    %v2270 = vpow.pop %v2269
    %v2271 = vadd.f32 %v2264, 1.0
    %v2272 = vadd.f32 %v2266, 1.0
    %v2273 = vadd.f32 %v2268, 1.0
    %v2274 = vadd.f32 %v2270, 1.0
    %v2275 = vrcp.pop %v2271
    %v2276 = vmul.f32 1.0, %v2275
    %v2277 = vrcp.pop %v2272
    %v2278 = vmul.f32 1.0, %v2277
    %v2279 = vrcp.pop %v2273
    %v2280 = vmul.f32 1.0, %v2279
    %v2281 = vrcp.pop %v2274
    %v2282 = vmul.f32 1.0, %v2281
    %v2283 = vmul.f32 %v2245, %v2276
    %v2284 = vmul.f32 %v2248, %v2278
    %v2285 = vmul.f32 %v2253, %v2280
    %v2286 = vmul.f32 %v2256, %v2282
    %v2287 = vpack.c.bf16 %v2284, %v2283
    %v2288 = vpack.c.bf16 %v2286, %v2285
    %2289 = vmatprep.subr.bf16.mxu0 0
    %2290 = vmatpush1.bf16.msra.mxu0 %v2287
    %2291 = vmatprep.subr.bf16.mxu0 0
    %2292 = vmatpush1.bf16.msra.mxu0 %v2288
    %2293 = vmatprep.subr.bf16.mxu0 0
    %2294 = vmatpush1.bf16.msra.mxu0 0
    %2295 = vmatprep.subr.bf16.mxu0 0
    %2296 = vmatpush1.bf16.msra.mxu0 0
    %2297 = vmatprep.subr.bf16.mxu0 0
    %2298 = vmatpush1.bf16.msra.mxu0 0
    %2299 = vmatprep.subr.bf16.mxu0 0
    %2300 = vmatpush1.bf16.msra.mxu0 0
    %2301 = vmatprep.subr.bf16.mxu0 0
    %2302 = vmatpush1.bf16.msra.mxu0 0
    %2303 = vmatprep.subr.bf16.mxu0 0
    %2304 = vmatpush1.bf16.msra.mxu0 0
    %2305 = vmatprep.subr.bf16.mxu0 0
    %2306 = vmatpush1.bf16.msra.mxu0 0
    %2307 = vmatprep.subr.bf16.mxu0 0
    %2308 = vmatpush1.bf16.msra.mxu0 0
    %2309 = vmatprep.subr.bf16.mxu0 0
    %2310 = vmatpush1.bf16.msra.mxu0 0
    %2311 = vmatprep.subr.bf16.mxu0 0
    %2312 = vmatpush1.bf16.msra.mxu0 0
    %2313 = vmatprep.subr.bf16.mxu0 0
    %2314 = vmatpush1.bf16.msra.mxu0 0
    %2315 = vmatprep.subr.bf16.mxu0 0
    %2316 = vmatpush1.bf16.msra.mxu0 0
    %2317 = vmatprep.subr.bf16.mxu0 0
    %2318 = vmatpush1.bf16.msra.mxu0 0
    %2319 = vmatprep.subr.bf16.mxu0 0
    %2320 = vmatpush1.bf16.msra.mxu0 0
    %2321 = vmatprep.mubr.bf16.mxu0 0
    %2322 = vmatmul.mubr.bf16.gmra.mrb[0].mxu0 %v726
    %v2323 = vpop.f32.mrb[0].mxu0
    %v2324 = vadd.f32 0.0, %v2323
    %v2325 = vpop.f32.mrb[0].mxu0
    %v2326 = vpop.f32.mrb[0].mxu0
    %v2327 = vpop.f32.mrb[0].mxu0
    %2328 = vdwg.mxu0
    %v2329 = vmul.f32 %v2324, %v85
    %v2330 = vpack.c.bf16 %v2329, %v2329
    %v2332 = vsel %vm181, %v2330, 0
    %2334 = vmatprep.subr.bf16.mxu0 0
    %2335 = vmatpush1.bf16.msra.mxu0 %v2332
    %2336 = vmatprep.subr.bf16.mxu0 0
    %2337 = vmatpush1.bf16.msra.mxu0 0
    %2338 = vmatprep.subr.bf16.mxu0 0
    %2339 = vmatpush1.bf16.msra.mxu0 0
    %2340 = vmatprep.subr.bf16.mxu0 0
    %2341 = vmatpush1.bf16.msra.mxu0 0
    %2342 = vmatprep.subr.bf16.mxu0 0
    %2343 = vmatpush1.bf16.msra.mxu0 0
    %2344 = vmatprep.subr.bf16.mxu0 0
    %2345 = vmatpush1.bf16.msra.mxu0 0
    %2346 = vmatprep.subr.bf16.mxu0 0
    %2347 = vmatpush1.bf16.msra.mxu0 0
    %2348 = vmatprep.subr.bf16.mxu0 0
    %2349 = vmatpush1.bf16.msra.mxu0 0
    %2350 = vmatprep.subr.bf16.mxu0 0
    %2351 = vmatpush1.bf16.msra.mxu0 0
    %2352 = vmatprep.subr.bf16.mxu0 0
    %2353 = vmatpush1.bf16.msra.mxu0 0
    %2354 = vmatprep.subr.bf16.mxu0 0
    %2355 = vmatpush1.bf16.msra.mxu0 0
    %2356 = vmatprep.subr.bf16.mxu0 0
    %2357 = vmatpush1.bf16.msra.mxu0 0
    %2358 = vmatprep.subr.bf16.mxu0 0
    %2359 = vmatpush1.bf16.msra.mxu0 0
    %2360 = vmatprep.subr.bf16.mxu0 0
    %2361 = vmatpush1.bf16.msra.mxu0 0
    %2362 = vmatprep.subr.bf16.mxu0 0
    %2363 = vmatpush1.bf16.msra.mxu0 0
    %2364 = vmatprep.subr.bf16.mxu0 0
    %2365 = vmatpush1.bf16.msra.mxu0 0
    %2366 = vmatprep.mubr.bf16.mxu0 0
    %2367 = vmatmul.mubr.bf16.gmra.mrb[0].mxu0 %v787
    %v2368 = vpop.f32.mrb[0].mxu0
    %v2369 = vadd.f32 0.0, %v2368
    %v2370 = vpop.f32.mrb[0].mxu0
    %v2371 = vpop.f32.mrb[0].mxu0
    %v2372 = vadd.f32 0.0, %v2371
    %v2373 = vpop.f32.mrb[0].mxu0
    %2374 = vdwg.mxu0
    %v2375 = vadd.f32 %v1734, %v2369
    %v2376 = vadd.f32 %v1735, %v2372
    %v2377 = vpack.c.bf16 %v2376, %v2375
    %s2378 = scalar_lea.vmem %s11, 128
    %v2379 = vld [vmem:[%s2378] sm:$0xf]
    %v2380 = vld [vmem:[%s2378 + $0x4] sm:$0xf]
    %v2381 = vld [vmem:[%s2378 + $0x8] sm:$0xf]
    %v2382 = vld [vmem:[%s2378 + $0xc] sm:$0xf]
    %v2383 = vld [vmem:[%s2378 + $0x10] sm:$0xf]
    %v2384 = vld [vmem:[%s2378 + $0x14] sm:$0xf]
    %v2385 = vld [vmem:[%s2378 + $0x18] sm:$0xf]
    %v2386 = vld [vmem:[%s2378 + $0x1c] sm:$0xf]
    %v2387 = vld [vmem:[%s2378 + $0x20] sm:$0xf]
    %v2388 = vld [vmem:[%s2378 + $0x24] sm:$0xf]
    %v2389 = vld [vmem:[%s2378 + $0x28] sm:$0xf]
    %v2390 = vld [vmem:[%s2378 + $0x2c] sm:$0xf]
    %v2391 = vld [vmem:[%s2378 + $0x30] sm:$0xf]
    %v2392 = vld [vmem:[%s2378 + $0x34] sm:$0xf]
    %v2393 = vld [vmem:[%s2378 + $0x38] sm:$0xf]
    %v2394 = vld [vmem:[%s2378 + $0x3c] sm:$0xf]
    %s2395 = scalar_lea.vmem %s12, 2
    %v2396 = vld [vmem:[%s2395] sm:$0x1]
    %v2398 = vlaneseq
    %v2399 = vshrl.u32 %v2398, 7
    %v2400 = vsub.s32 0, %v2399
    %v2401 = vrot.slane %v2396, %v2400
    %v2419 = vunpack.c.l.b16 %v2379
    %v2420 = vunpack.c.l.b16 %v2380
    %v2421 = vunpack.c.l.b16 %v2381
    %v2422 = vunpack.c.l.b16 %v2382
    %v2423 = vunpack.c.l.b16 %v2383
    %v2424 = vunpack.c.l.b16 %v2384
    %v2425 = vunpack.c.l.b16 %v2385
    %v2426 = vunpack.c.l.b16 %v2386
    %v2427 = vunpack.c.l.b16 %v2387
    %v2428 = vunpack.c.l.b16 %v2388
    %v2429 = vunpack.c.l.b16 %v2389
    %v2430 = vunpack.c.l.b16 %v2390
    %v2431 = vunpack.c.l.b16 %v2391
    %v2432 = vunpack.c.l.b16 %v2392
    %v2433 = vunpack.c.l.b16 %v2393
    %v2434 = vunpack.c.l.b16 %v2394
    %v2435 = vpack.c.b16 %v2420, %v2419
    %v2436 = vpack.c.b16 %v2422, %v2421
    %v2437 = vpack.c.b16 %v2424, %v2423
    %v2438 = vpack.c.b16 %v2426, %v2425
    %v2439 = vpack.c.b16 %v2428, %v2427
    %v2440 = vpack.c.b16 %v2430, %v2429
    %v2441 = vpack.c.b16 %v2432, %v2431
    %v2442 = vpack.c.b16 %v2434, %v2433
    %2451 = vmatprep.subr.bf16.mxu0 0
    %2452 = vmatpush1.bf16.msra.mxu0 %v2435
    %2453 = vmatprep.subr.bf16.mxu0 0
    %2454 = vmatpush1.bf16.msra.mxu0 %v2436
    %2455 = vmatprep.subr.bf16.mxu0 0
    %2456 = vmatpush1.bf16.msra.mxu0 %v2437
    %2457 = vmatprep.subr.bf16.mxu0 0
    %2458 = vmatpush1.bf16.msra.mxu0 %v2438
    %2459 = vmatprep.subr.bf16.mxu0 0
    %2460 = vmatpush1.bf16.msra.mxu0 %v2439
    %2461 = vmatprep.subr.bf16.mxu0 0
    %2462 = vmatpush1.bf16.msra.mxu0 %v2440
    %2463 = vmatprep.subr.bf16.mxu0 0
    %2464 = vmatpush1.bf16.msra.mxu0 %v2441
    %2465 = vmatprep.subr.bf16.mxu0 0
    %2466 = vmatpush1.bf16.msra.mxu0 %v2442
    %2467 = vmatprep.subr.bf16.mxu0 0
    %2468 = vmatpush1.bf16.msra.mxu0 0
    %2469 = vmatprep.subr.bf16.mxu0 0
    %2470 = vmatpush1.bf16.msra.mxu0 0
    %2471 = vmatprep.subr.bf16.mxu0 0
    %2472 = vmatpush1.bf16.msra.mxu0 0
    %2473 = vmatprep.subr.bf16.mxu0 0
    %2474 = vmatpush1.bf16.msra.mxu0 0
    %2475 = vmatprep.subr.bf16.mxu0 0
    %2476 = vmatpush1.bf16.msra.mxu0 0
    %2477 = vmatprep.subr.bf16.mxu0 0
    %2478 = vmatpush1.bf16.msra.mxu0 0
    %2479 = vmatprep.subr.bf16.mxu0 0
    %2480 = vmatpush1.bf16.msra.mxu0 0
    %2481 = vmatprep.subr.bf16.mxu0 0
    %2482 = vmatpush1.bf16.msra.mxu0 0
    %2483 = vmatprep.mubr.bf16.mxu0 0
    %2484 = vmatmul.mubr.bf16.gmra.mrb[0].mxu0 %v2377
    %v2485 = vpop.f32.mrb[0].mxu0
    %v2486 = vadd.f32 %v2401, %v2485
    %v2487 = vpop.f32.mrb[0].mxu0
    %v2488 = vpop.f32.mrb[0].mxu0
    %v2489 = vadd.f32 %v2401, %v2488
    %v2490 = vpop.f32.mrb[0].mxu0
    %2491 = vdwg.mxu0
    %v2492 = vsub.f32 0.0, %v2486
    %v2493 = vsub.f32 0.0, %v2489
    %v2494 = vmul.f32 %v2492, 1.442695
    %v2495 = vpow.pop %v2494
    %v2496 = vmul.f32 %v2493, 1.442695
    %v2497 = vpow.pop %v2496
    %v2498 = vadd.f32 %v2495, 1.0
    %v2499 = vadd.f32 %v2497, 1.0
    %v2500 = vrcp.pop %v2498
    %v2501 = vmul.f32 1.0, %v2500
    %v2502 = vrcp.pop %v2499
    %v2503 = vmul.f32 1.0, %v2502
    %v2504 = vmul.f32 %v2486, %v2501
    %v2505 = vmul.f32 %v2489, %v2503
    %v2506 = vadd.f32 %v1734, %v2504
    %v2507 = vadd.f32 %v1735, %v2505
    %v2508 = vpack.c.bf16 %v2507, %v2506
    %v2509 = vld [vmem:[%s13] sm:$0xf]
    %v2510 = vld [vmem:[%s13 + $0x4] sm:$0xf]
    %v2511 = vld [vmem:[%s13 + $0x8] sm:$0xf]
    %v2512 = vld [vmem:[%s13 + $0xc] sm:$0xf]
    %v2513 = vld [vmem:[%s13 + $0x10] sm:$0xf]
    %v2514 = vld [vmem:[%s13 + $0x14] sm:$0xf]
    %v2515 = vld [vmem:[%s13 + $0x18] sm:$0xf]
    %v2516 = vld [vmem:[%s13 + $0x1c] sm:$0xf]
    %v2517 = vld [vmem:[%s13 + $0x20] sm:$0xf]
    %v2518 = vld [vmem:[%s13 + $0x24] sm:$0xf]
    %v2519 = vld [vmem:[%s13 + $0x28] sm:$0xf]
    %v2520 = vld [vmem:[%s13 + $0x2c] sm:$0xf]
    %v2521 = vld [vmem:[%s13 + $0x30] sm:$0xf]
    %v2522 = vld [vmem:[%s13 + $0x34] sm:$0xf]
    %v2523 = vld [vmem:[%s13 + $0x38] sm:$0xf]
    %v2524 = vld [vmem:[%s13 + $0x3c] sm:$0xf]
    %v2525 = vld [vmem:[%s14] sm:$0x1]
    %v2527 = vlaneseq
    %v2528 = vshrl.u32 %v2527, 7
    %v2529 = vsub.s32 0, %v2528
    %v2530 = vrot.slane %v2525, %v2529
    %v2548 = vunpack.c.l.b16 %v2509
    %v2549 = vunpack.c.l.b16 %v2510
    %v2550 = vunpack.c.l.b16 %v2511
    %v2551 = vunpack.c.l.b16 %v2512
    %v2552 = vunpack.c.l.b16 %v2513
    %v2553 = vunpack.c.l.b16 %v2514
    %v2554 = vunpack.c.l.b16 %v2515
    %v2555 = vunpack.c.l.b16 %v2516
    %v2556 = vunpack.c.l.b16 %v2517
    %v2557 = vunpack.c.l.b16 %v2518
    %v2558 = vunpack.c.l.b16 %v2519
    %v2559 = vunpack.c.l.b16 %v2520
    %v2560 = vunpack.c.l.b16 %v2521
    %v2561 = vunpack.c.l.b16 %v2522
    %v2562 = vunpack.c.l.b16 %v2523
    %v2563 = vunpack.c.l.b16 %v2524
    %v2564 = vpack.c.b16 %v2549, %v2548
    %v2565 = vpack.c.b16 %v2551, %v2550
    %v2566 = vpack.c.b16 %v2553, %v2552
    %v2567 = vpack.c.b16 %v2555, %v2554
    %v2568 = vpack.c.b16 %v2557, %v2556
    %v2569 = vpack.c.b16 %v2559, %v2558
    %v2570 = vpack.c.b16 %v2561, %v2560
    %v2571 = vpack.c.b16 %v2563, %v2562
    %2580 = vmatprep.subr.bf16.mxu0 0
    %2581 = vmatpush1.bf16.msra.mxu0 %v2564
    %2582 = vmatprep.subr.bf16.mxu0 0
    %2583 = vmatpush1.bf16.msra.mxu0 %v2565
    %2584 = vmatprep.subr.bf16.mxu0 0
    %2585 = vmatpush1.bf16.msra.mxu0 %v2566
    %2586 = vmatprep.subr.bf16.mxu0 0
    %2587 = vmatpush1.bf16.msra.mxu0 %v2567
    %2588 = vmatprep.subr.bf16.mxu0 0
    %2589 = vmatpush1.bf16.msra.mxu0 %v2568
    %2590 = vmatprep.subr.bf16.mxu0 0
    %2591 = vmatpush1.bf16.msra.mxu0 %v2569
    %2592 = vmatprep.subr.bf16.mxu0 0
    %2593 = vmatpush1.bf16.msra.mxu0 %v2570
    %2594 = vmatprep.subr.bf16.mxu0 0
    %2595 = vmatpush1.bf16.msra.mxu0 %v2571
    %2596 = vmatprep.subr.bf16.mxu0 0
    %2597 = vmatpush1.bf16.msra.mxu0 0
    %2598 = vmatprep.subr.bf16.mxu0 0
    %2599 = vmatpush1.bf16.msra.mxu0 0
    %2600 = vmatprep.subr.bf16.mxu0 0
    %2601 = vmatpush1.bf16.msra.mxu0 0
    %2602 = vmatprep.subr.bf16.mxu0 0
    %2603 = vmatpush1.bf16.msra.mxu0 0
    %2604 = vmatprep.subr.bf16.mxu0 0
    %2605 = vmatpush1.bf16.msra.mxu0 0
    %2606 = vmatprep.subr.bf16.mxu0 0
    %2607 = vmatpush1.bf16.msra.mxu0 0
    %2608 = vmatprep.subr.bf16.mxu0 0
    %2609 = vmatpush1.bf16.msra.mxu0 0
    %2610 = vmatprep.subr.bf16.mxu0 0
    %2611 = vmatpush1.bf16.msra.mxu0 0
    %2612 = vmatprep.mubr.bf16.mxu0 0
    %2613 = vmatmul.mubr.bf16.gmra.mrb[0].mxu0 %v2508
    %v2614 = vpop.f32.mrb[0].mxu0
    %v2615 = vadd.f32 %v2530, %v2614
    %v2616 = vpop.f32.mrb[0].mxu0
    %v2617 = vpop.f32.mrb[0].mxu0
    %v2618 = vadd.f32 %v2530, %v2617
    %v2619 = vpop.f32.mrb[0].mxu0
    %2620 = vdwg.mxu0
    %v2621 = vpack.c.bf16 %v2618, %v2615
    %2622 = vmatprep.subr.bf16.mxu0 0
    %2623 = vmatpush1.bf16.msra.mxu0 %v2621
    %2624 = vmatprep.subr.bf16.mxu0 0
    %2625 = vmatpush1.bf16.msra.mxu0 0
    %2626 = vmatprep.subr.bf16.mxu0 0
    %2627 = vmatpush1.bf16.msra.mxu0 0
    %2628 = vmatprep.subr.bf16.mxu0 0
    %2629 = vmatpush1.bf16.msra.mxu0 0
    %2630 = vmatprep.subr.bf16.mxu0 0
    %2631 = vmatpush1.bf16.msra.mxu0 0
    %2632 = vmatprep.subr.bf16.mxu0 0
    %2633 = vmatpush1.bf16.msra.mxu0 0
    %2634 = vmatprep.subr.bf16.mxu0 0
    %2635 = vmatpush1.bf16.msra.mxu0 0
    %2636 = vmatprep.subr.bf16.mxu0 0
    %2637 = vmatpush1.bf16.msra.mxu0 0
    %2638 = vmatprep.subr.bf16.mxu0 0
    %2639 = vmatpush1.bf16.msra.mxu0 0
    %2640 = vmatprep.subr.bf16.mxu0 0
    %2641 = vmatpush1.bf16.msra.mxu0 0
    %2642 = vmatprep.subr.bf16.mxu0 0
    %2643 = vmatpush1.bf16.msra.mxu0 0
    %2644 = vmatprep.subr.bf16.mxu0 0
    %2645 = vmatpush1.bf16.msra.mxu0 0
    %2646 = vmatprep.subr.bf16.mxu0 0
    %2647 = vmatpush1.bf16.msra.mxu0 0
    %2648 = vmatprep.subr.bf16.mxu0 0
    %2649 = vmatpush1.bf16.msra.mxu0 0
    %2650 = vmatprep.subr.bf16.mxu0 0
    %2651 = vmatpush1.bf16.msra.mxu0 0
    %2652 = vmatprep.subr.bf16.mxu0 0
    %2653 = vmatpush1.bf16.msra.mxu0 0
    %2654 = vmatprep.mubr.bf16.mxu0 0
    %2655 = vmatmul.mubr.bf16.gmra.mrb[0].mxu0 %v120
    %v2656 = vpop.f32.mrb[0].mxu0
    %v2657 = vadd.f32 0.0, %v2656
    %v2658 = vpop.f32.mrb[0].mxu0
    %v2659 = vpop.f32.mrb[0].mxu0
    %v2660 = vpop.f32.mrb[0].mxu0
    %2661 = vdwg.mxu0
    %v2662 = vmul.f32 %v2657, %v79
    %2663 = vst [vmem:[#allocation3] sm:$0xff] %v2662
    %v2664 = vsub.f32 0.0, %v2662
    %v2665 = vmul.f32 %v2664, 1.442695
    %v2666 = vpow.pop %v2665
    %v2667 = vadd.f32 %v2666, 1.0
    %v2668 = vrcp.pop %v2667
    %v2669 = vmul.f32 1.0, %v2668
    %v2670 = vmul.f32 %v2662, %v2669
    %v2671 = vpack.c.bf16 %v2670, %v2670
    %v2672 = vld [vmem:[%s15] sm:$0xf]
    %v2673 = vld [vmem:[%s15 + $0x4] sm:$0xf]
    %v2674 = vld [vmem:[%s15 + $0x8] sm:$0xf]
    %v2675 = vld [vmem:[%s15 + $0xc] sm:$0xf]
    %v2676 = vld [vmem:[%s15 + $0x10] sm:$0xf]
    %v2677 = vld [vmem:[%s15 + $0x14] sm:$0xf]
    %v2678 = vld [vmem:[%s15 + $0x18] sm:$0xf]
    %v2679 = vld [vmem:[%s15 + $0x1c] sm:$0xf]
    %v2680 = vld [vmem:[%s15 + $0x20] sm:$0xf]
    %v2681 = vld [vmem:[%s15 + $0x24] sm:$0xf]
    %v2682 = vld [vmem:[%s15 + $0x28] sm:$0xf]
    %v2683 = vld [vmem:[%s15 + $0x2c] sm:$0xf]
    %v2684 = vld [vmem:[%s15 + $0x30] sm:$0xf]
    %v2685 = vld [vmem:[%s15 + $0x34] sm:$0xf]
    %v2686 = vld [vmem:[%s15 + $0x38] sm:$0xf]
    %v2687 = vld [vmem:[%s15 + $0x3c] sm:$0xf]
    %v2688 = vld [vmem:[%s16] sm:$0x1]
    %v2690 = vlaneseq
    %v2691 = vshrl.u32 %v2690, 7
    %v2692 = vsub.s32 0, %v2691
    %v2693 = vrot.slane %v2688, %v2692
    %v2711 = vunpack.c.l.b16 %v2672
    %v2712 = vunpack.c.l.b16 %v2673
    %v2713 = vunpack.c.l.b16 %v2674
    %v2714 = vunpack.c.l.b16 %v2675
    %v2715 = vunpack.c.l.b16 %v2676
    %v2716 = vunpack.c.l.b16 %v2677
    %v2717 = vunpack.c.l.b16 %v2678
    %v2718 = vunpack.c.l.b16 %v2679
    %v2719 = vunpack.c.l.b16 %v2680
    %v2720 = vunpack.c.l.b16 %v2681
    %v2721 = vunpack.c.l.b16 %v2682
    %v2722 = vunpack.c.l.b16 %v2683
    %v2723 = vunpack.c.l.b16 %v2684
    %v2724 = vunpack.c.l.b16 %v2685
    %v2725 = vunpack.c.l.b16 %v2686
    %v2726 = vunpack.c.l.b16 %v2687
    %v2727 = vpack.c.b16 %v2712, %v2711
    %v2728 = vpack.c.b16 %v2714, %v2713
    %v2729 = vpack.c.b16 %v2716, %v2715
    %v2730 = vpack.c.b16 %v2718, %v2717
    %v2731 = vpack.c.b16 %v2720, %v2719
    %v2732 = vpack.c.b16 %v2722, %v2721
    %v2733 = vpack.c.b16 %v2724, %v2723
    %v2734 = vpack.c.b16 %v2726, %v2725
    %2743 = vmatprep.subr.bf16.mxu0 0
    %2744 = vmatpush1.bf16.msra.mxu0 %v2727
    %2745 = vmatprep.subr.bf16.mxu0 0
    %2746 = vmatpush1.bf16.msra.mxu0 %v2728
    %2747 = vmatprep.subr.bf16.mxu0 0
    %2748 = vmatpush1.bf16.msra.mxu0 %v2729
    %2749 = vmatprep.subr.bf16.mxu0 0
    %2750 = vmatpush1.bf16.msra.mxu0 %v2730
    %2751 = vmatprep.subr.bf16.mxu0 0
    %2752 = vmatpush1.bf16.msra.mxu0 %v2731
    %2753 = vmatprep.subr.bf16.mxu0 0
    %2754 = vmatpush1.bf16.msra.mxu0 %v2732
    %2755 = vmatprep.subr.bf16.mxu0 0
    %2756 = vmatpush1.bf16.msra.mxu0 %v2733
    %2757 = vmatprep.subr.bf16.mxu0 0
    %2758 = vmatpush1.bf16.msra.mxu0 %v2734
    %2759 = vmatprep.subr.bf16.mxu0 0
    %2760 = vmatpush1.bf16.msra.mxu0 0
    %2761 = vmatprep.subr.bf16.mxu0 0
    %2762 = vmatpush1.bf16.msra.mxu0 0
    %2763 = vmatprep.subr.bf16.mxu0 0
    %2764 = vmatpush1.bf16.msra.mxu0 0
    %2765 = vmatprep.subr.bf16.mxu0 0
    %2766 = vmatpush1.bf16.msra.mxu0 0
    %2767 = vmatprep.subr.bf16.mxu0 0
    %2768 = vmatpush1.bf16.msra.mxu0 0
    %2769 = vmatprep.subr.bf16.mxu0 0
    %2770 = vmatpush1.bf16.msra.mxu0 0
    %2771 = vmatprep.subr.bf16.mxu0 0
    %2772 = vmatpush1.bf16.msra.mxu0 0
    %2773 = vmatprep.subr.bf16.mxu0 0
    %2774 = vmatpush1.bf16.msra.mxu0 0
    %2775 = vmatprep.mubr.bf16.mxu0 0
    %2776 = vmatmul.mubr.bf16.gmra.mrb[0].mxu0 %v2671
    %v2777 = vpop.f32.mrb[0].mxu0
    %v2778 = vadd.f32 %v2693, %v2777
    %v2779 = vpop.f32.mrb[0].mxu0
    %v2780 = vpop.f32.mrb[0].mxu0
    %v2781 = vpop.f32.mrb[0].mxu0
    %2782 = vdwg.mxu0
    %v2783 = vsub.f32 0.0, %v2778
    %v2784 = vmul.f32 %v2783, 1.442695
    %v2785 = vpow.pop %v2784
    %v2786 = vadd.f32 %v2785, 1.0
    %v2787 = vrcp.pop %v2786
    %v2788 = vmul.f32 1.0, %v2787
    %v2789 = vmul.f32 %v2778, %v2788
    %v2790 = vpack.c.bf16 %v2789, %v2789
    %v2791 = vld [vmem:[%s17] sm:$0xf]
    %v2792 = vld [vmem:[%s17 + $0x4] sm:$0xf]
    %v2793 = vld [vmem:[%s17 + $0x8] sm:$0xf]
    %v2794 = vld [vmem:[%s17 + $0xc] sm:$0xf]
    %v2795 = vld [vmem:[%s17 + $0x10] sm:$0xf]
    %v2796 = vld [vmem:[%s17 + $0x14] sm:$0xf]
    %v2797 = vld [vmem:[%s17 + $0x18] sm:$0xf]
    %v2798 = vld [vmem:[%s17 + $0x1c] sm:$0xf]
    %v2799 = vld [vmem:[%s17 + $0x20] sm:$0xf]
    %v2800 = vld [vmem:[%s17 + $0x24] sm:$0xf]
    %v2801 = vld [vmem:[%s17 + $0x28] sm:$0xf]
    %v2802 = vld [vmem:[%s17 + $0x2c] sm:$0xf]
    %v2803 = vld [vmem:[%s17 + $0x30] sm:$0xf]
    %v2804 = vld [vmem:[%s17 + $0x34] sm:$0xf]
    %v2805 = vld [vmem:[%s17 + $0x38] sm:$0xf]
    %v2806 = vld [vmem:[%s17 + $0x3c] sm:$0xf]
    %v2807 = vld [vmem:[%s18] sm:$0x1]
    %v2809 = vlaneseq
    %v2810 = vshrl.u32 %v2809, 7
    %v2811 = vsub.s32 0, %v2810
    %v2812 = vrot.slane %v2807, %v2811
    %v2830 = vunpack.c.l.b16 %v2791
    %v2831 = vunpack.c.l.b16 %v2792
    %v2832 = vunpack.c.l.b16 %v2793
    %v2833 = vunpack.c.l.b16 %v2794
    %v2834 = vunpack.c.l.b16 %v2795
    %v2835 = vunpack.c.l.b16 %v2796
    %v2836 = vunpack.c.l.b16 %v2797
    %v2837 = vunpack.c.l.b16 %v2798
    %v2838 = vunpack.c.l.b16 %v2799
    %v2839 = vunpack.c.l.b16 %v2800
    %v2840 = vunpack.c.l.b16 %v2801
    %v2841 = vunpack.c.l.b16 %v2802
    %v2842 = vunpack.c.l.b16 %v2803
    %v2843 = vunpack.c.l.b16 %v2804
    %v2844 = vunpack.c.l.b16 %v2805
    %v2845 = vunpack.c.l.b16 %v2806
    %v2846 = vpack.c.b16 %v2831, %v2830
    %v2847 = vpack.c.b16 %v2833, %v2832
    %v2848 = vpack.c.b16 %v2835, %v2834
    %v2849 = vpack.c.b16 %v2837, %v2836
    %v2850 = vpack.c.b16 %v2839, %v2838
    %v2851 = vpack.c.b16 %v2841, %v2840
    %v2852 = vpack.c.b16 %v2843, %v2842
    %v2853 = vpack.c.b16 %v2845, %v2844
    %2862 = vmatprep.subr.bf16.mxu0 0
    %2863 = vmatpush1.bf16.msra.mxu0 %v2846
    %2864 = vmatprep.subr.bf16.mxu0 0
    %2865 = vmatpush1.bf16.msra.mxu0 %v2847
    %2866 = vmatprep.subr.bf16.mxu0 0
    %2867 = vmatpush1.bf16.msra.mxu0 %v2848
    %2868 = vmatprep.subr.bf16.mxu0 0
    %2869 = vmatpush1.bf16.msra.mxu0 %v2849
    %2870 = vmatprep.subr.bf16.mxu0 0
    %2871 = vmatpush1.bf16.msra.mxu0 %v2850
    %2872 = vmatprep.subr.bf16.mxu0 0
    %2873 = vmatpush1.bf16.msra.mxu0 %v2851
    %2874 = vmatprep.subr.bf16.mxu0 0
    %2875 = vmatpush1.bf16.msra.mxu0 %v2852
    %2876 = vmatprep.subr.bf16.mxu0 0
    %2877 = vmatpush1.bf16.msra.mxu0 %v2853
    %2878 = vmatprep.subr.bf16.mxu0 0
    %2879 = vmatpush1.bf16.msra.mxu0 0
    %2880 = vmatprep.subr.bf16.mxu0 0
    %2881 = vmatpush1.bf16.msra.mxu0 0
    %2882 = vmatprep.subr.bf16.mxu0 0
    %2883 = vmatpush1.bf16.msra.mxu0 0
    %2884 = vmatprep.subr.bf16.mxu0 0
    %2885 = vmatpush1.bf16.msra.mxu0 0
    %2886 = vmatprep.subr.bf16.mxu0 0
    %2887 = vmatpush1.bf16.msra.mxu0 0
    %2888 = vmatprep.subr.bf16.mxu0 0
    %2889 = vmatpush1.bf16.msra.mxu0 0
    %2890 = vmatprep.subr.bf16.mxu0 0
    %2891 = vmatpush1.bf16.msra.mxu0 0
    %2892 = vmatprep.subr.bf16.mxu0 0
    %2893 = vmatpush1.bf16.msra.mxu0 0
    %2894 = vmatprep.mubr.bf16.mxu0 0
    %2895 = vmatmul.mubr.bf16.gmra.mrb[0].mxu0 %v2790
    %v2896 = vpop.f32.mrb[0].mxu0
    %v2897 = vadd.f32 %v2812, %v2896
    %v2898 = vpop.f32.mrb[0].mxu0
    %v2899 = vpop.f32.mrb[0].mxu0
    %v2900 = vpop.f32.mrb[0].mxu0
    %2901 = vdwg.mxu0
    %v2902 = vld [vmem:[%s7] sm:$0x1]
    %v2903 = vpack.c.bf16 %v2897, %v2897
    %v2905 = vsel %vm174, %v2902, 0
    %v2908 = vsel %vm181, %v2903, 0
    %2910 = vmatprep.subr.bf16.mxu0 0
    %2911 = vmatpush1.bf16.msra.mxu0 %v2908
    %2912 = vmatprep.subr.bf16.mxu0 0
    %2913 = vmatpush1.bf16.msra.mxu0 0
    %2914 = vmatprep.subr.bf16.mxu0 0
    %2915 = vmatpush1.bf16.msra.mxu0 0
    %2916 = vmatprep.subr.bf16.mxu0 0
    %2917 = vmatpush1.bf16.msra.mxu0 0
    %2918 = vmatprep.subr.bf16.mxu0 0
    %2919 = vmatpush1.bf16.msra.mxu0 0
    %2920 = vmatprep.subr.bf16.mxu0 0
    %2921 = vmatpush1.bf16.msra.mxu0 0
    %2922 = vmatprep.subr.bf16.mxu0 0
    %2923 = vmatpush1.bf16.msra.mxu0 0
    %2924 = vmatprep.subr.bf16.mxu0 0
    %2925 = vmatpush1.bf16.msra.mxu0 0
    %2926 = vmatprep.subr.bf16.mxu0 0
    %2927 = vmatpush1.bf16.msra.mxu0 0
    %2928 = vmatprep.subr.bf16.mxu0 0
    %2929 = vmatpush1.bf16.msra.mxu0 0
    %2930 = vmatprep.subr.bf16.mxu0 0
    %2931 = vmatpush1.bf16.msra.mxu0 0
    %2932 = vmatprep.subr.bf16.mxu0 0
    %2933 = vmatpush1.bf16.msra.mxu0 0
    %2934 = vmatprep.subr.bf16.mxu0 0
    %2935 = vmatpush1.bf16.msra.mxu0 0
    %2936 = vmatprep.subr.bf16.mxu0 0
    %2937 = vmatpush1.bf16.msra.mxu0 0
    %2938 = vmatprep.subr.bf16.mxu0 0
    %2939 = vmatpush1.bf16.msra.mxu0 0
    %2940 = vmatprep.subr.bf16.mxu0 0
    %2941 = vmatpush1.bf16.msra.mxu0 0
    %2942 = vmatprep.mubr.bf16.mxu0 0
    %2943 = vmatmul.mubr.bf16.gmra.mrb[0].mxu0 %v2905
    %v2944 = vpop.f32.mrb[0].mxu0
    %v2945 = vadd.f32 0.0, %v2944
    %v2946 = vpop.f32.mrb[0].mxu0
    %v2947 = vpop.f32.mrb[0].mxu0
    %v2948 = vpop.f32.mrb[0].mxu0
    %2949 = vdwg.mxu0
    %v2950 = vld [vmem:[%s8] sm:$0x3]
    %2952 = vset.pattern.permute.xlu0 0
    %2953 = vperm.xlu0 %2952, %v2950
    %v2954 = vpop.permute.xlu0 %2953
    %v2956 = vmul.f32 %v2945, %v2954
    %2957 = vst [vmem:[%s20] sm:$0x3] %v2956
    // Predicated region
    $region78: #{get_encoder_forward.1} parent=1 // pred_check
      _
    $region79: #{get_encoder_forward.1} parent=1 // pred_check_branch
      %2959 = sbr.rel (0) target = $region81
    $region80: #{get_encoder_forward.1} parent=1 // pred_region
      %s2961 = ssub.s32 128, 128
      %2962 = vsyncadd [#allocation4], %s2961
      %s2964 = sshll.u32 [#allocation3], 4
      %s2965 = int_to_ptr.vmem [resolvable:$true] %s2964
      %2967 = dma.vmem_to_hbm [thread:$0]  %s2965, 128, %s19, [#allocation4]
    $region81: #{get_encoder_forward.1} parent=1 // pred_fallthru
      _
    // Predicated region
    $region82: #{get_encoder_forward.1} parent=1 // pred_check
      _
    $region83: #{get_encoder_forward.1} parent=1 // pred_check_branch
      %2969 = sbr.rel (0) target = $region85
    $region84: #{get_encoder_forward.1} parent=1 // pred_region
      _
    $region85: #{get_encoder_forward.1} parent=1 // pred_fallthru
      _
    // Predicated region
    $region86: #{get_encoder_forward.1} parent=1 // pred_check
      _
    $region87: #{get_encoder_forward.1} parent=1 // pred_check_branch
      %2971 = sbr.rel (0) target = $region89
    $region88: #{get_encoder_forward.1} parent=1 // pred_region
      %2972 = dma.done [#allocation4], 128
    $region89: #{get_encoder_forward.1} parent=1 // pred_fallthru
      _
    // Predicated region
    $region90: #{get_encoder_forward.1} parent=1 // pred_check
      _
    $region91: #{get_encoder_forward.1} parent=1 // pred_check_branch
      %2974 = sbr.rel (0) target = $region93
    $region92: #{get_encoder_forward.1} parent=1 // pred_region
      _
    $region93: #{get_encoder_forward.1} parent=1 // pred_fallthru
      _
    %2975 = vsyncpa [#allocation4], 1

</llo_original>
